<compile_context>
chip_gen: v6e
topology: v6e:2x2x1
jax: 0.10.0
libtpu: 0.0.40
codegen_flags: <defaults>
</compile_context>

<pallas_src>
import functools

import numpy as np
import jax
import jax.numpy as jnp
from jax.experimental import pallas as pl
from jax.experimental.pallas import tpu as pltpu


# --------------------------- constant helpers (numpy) ---------------------------

def _shift_indicator(k, w_in, w_out):
    """T[dx, i, o] = 1  iff  i == o + dx  (valid-conv column gather)."""
    t = np.zeros((k, w_in, w_out), np.float32)
    for dx in range(k):
        for o in range(w_out):
            t[dx, o + dx, o] = 1.0
    return t


def _parity_order(w):
    """Order [0,2,4,...,1,3,...] so even/odd positions become contiguous blocks."""
    return np.array(list(range(0, w, 2)) + list(range(1, w, 2)), np.int32)


def _flatten_perm():
    """Natural lane order j = h*128 + w*32 + c -> PyTorch flatten index c*16 + h*4 + w."""
    idx = np.zeros(512, np.int32)
    for h in range(4):
        for w in range(4):
            for c in range(32):
                idx[h * 128 + w * 32 + c] = c * 16 + h * 4 + w
    return idx


def _full_spec(shape):
    nd = len(shape)
    return pl.BlockSpec(tuple(shape), lambda i, _nd=nd: (0,) * _nd)


def _round_up(v, m):
    return ((v + m - 1) // m) * m


# ------------------------------- fused kernel -----------------------------------

def _mil_fused_kernel(xs_ref, b1_ref, b1v_ref, b2m_ref, b2v_ref,
                      w1_ref, ab1_ref, sblk_ref, ab2_ref, lin_ref, mask_ref,
                      out_ref, *, n, idw):
    f32, bf16 = jnp.float32, jnp.bfloat16

    # --- conv1 (3x3, 1->20) + bias + ReLU: ONE banded MXU matmul (K = 3*28 = 84) ---
    y1 = jnp.dot(xs_ref[...], b1_ref[...], preferred_element_type=f32)
    y1 = jnp.maximum(y1 + b1v_ref[...], 0.0)            # (26n, 520), rows: (h parity | h//2 | inst)

    # --- maxpool 2x2/2: both directions are plain VPU maxes of contiguous blocks ---
    zw = jnp.maximum(y1[:, 0:260], y1[:, 260:520])      # W pairs via parity lane blocks
    y2 = jnp.maximum(zw[0:13 * n, :], zw[13 * n:26 * n, :])   # H pairs via parity row blocks -> (13n, 260)

    # --- conv2 (3x3, 20->32) + bias + ReLU: 3 row-shifted banded matmuls (bf16 x bf16 -> f32) ---
    y2b = y2.astype(bf16)
    acc = jnp.dot(y2b[0:11 * n, :], b2m_ref[0], preferred_element_type=f32)
    acc = acc + jnp.dot(y2b[n:12 * n, :], b2m_ref[1], preferred_element_type=f32)
    acc = acc + jnp.dot(y2b[2 * n:13 * n, :], b2m_ref[2], preferred_element_type=f32)
    y3 = jnp.maximum(acc + b2v_ref[...], 0.0)            # (11n, 352)

    # --- maxpool 2x2/2 (floor drops the 11th row/col): W via parity lanes, H via 5 aligned row-pair maxes ---
    zw2 = jnp.maximum(y3[:, 0:160], y3[:, 192:352])      # (11n, 160)
    y4 = jnp.concatenate(
        [jnp.maximum(zw2[(2 * t) * n:(2 * t + 1) * n, :],
                     zw2[(2 * t + 1) * n:(2 * t + 2) * n, :]) for t in range(5)],
        axis=0)                                          # (5n, 160)

    # --- AdaptiveAvgPool2d((4,4)) on 5x5 == stride-1 2x2 means ---
    aw = y4[:, 0:128] + y4[:, 32:160]                    # (5n, 128)
    y5 = 0.25 * (aw[0:4 * n, :] + aw[n:5 * n, :])        # (4n, 128)

    # --- flatten to per-instance features (n, 512) in natural (h, w, c) lane order ---
    fs = jnp.concatenate([y5[h * n:(h + 1) * n, :] for h in range(4)], axis=1)
    fsb = fs.astype(bf16)

    # --- batched ABMIL heads: Linear(512,128)+Tanh for all heads; att_w2 folded into sblk ---
    hid = jnp.tanh(jnp.dot(fsb, w1_ref[...], preferred_element_type=f32) + ab1_ref[...])  # (n, 128*ks)
    scores = jnp.dot(hid, sblk_ref[...], preferred_element_type=f32) + ab2_ref[...]       # (n, ks)
    scores = scores + mask_ref[...]                      # -1e30 on padded instances
    mx = jnp.max(scores, axis=0, keepdims=True)          # softmax over the n instances
    ez = jnp.exp(scores - mx)
    alpha = ez / jnp.sum(ez, axis=0, keepdims=True)      # (n, ks)

    # --- single transposed matmul yields pooled features, alpha^T and per-head logits:
    #     out = alpha^T @ [ fs | I_n (idw lanes) | fs @ linears ]  -> (ks, 512+idw+gcols) ---
    idn = (jax.lax.broadcasted_iota(jnp.int32, (n, idw), 0) ==
           jax.lax.broadcasted_iota(jnp.int32, (n, idw), 1)).astype(f32)
    g = jnp.dot(fs, lin_ref[...], preferred_element_type=f32)     # (n, gcols): per-instance classifier
    fs_aug = jnp.concatenate([fs, idn, g], axis=1)
    out_ref[...] = jax.lax.dot_general(
        alpha, fs_aug, (((0,), (0,)), ((), ())),
        preferred_element_type=f32)


# --------------------------------- JAX wrapper ----------------------------------

def mil_forward_abp(x_nchw, params):
    """MILModel.forward(x, pooling='abp').  x: (N, 1, 28, 28) NCHW."""
    f32, bf16 = jnp.float32, jnp.bfloat16
    n = x_nchw.shape[0]
    ks = params['linears'].shape[0]
    n_pad = max(8, _round_up(n, 8))        # sublane-aligned bag size (zero-pad + masked softmax)
    idw = max(128, _round_up(n_pad, 128))  # lane width of the identity block carrying alpha^T
    gcols = _round_up(2 * ks, 8)           # zero-padded classifier columns
    width = 512 + idw + gcols

    # ---- operand preparation (traced once under jit; all shapes static) ----
    x_img = x_nchw[:, 0, :, :].astype(f32)                         # (n, 28, 28)
    if n_pad != n:
        x_img = jnp.concatenate(
            [x_img, jnp.zeros((n_pad - n, 28, 28), f32)], axis=0)

    # conv1 input: rows ordered (h'-parity, h'//2, instance); the 3 conv rows of every
    # output row are stacked along lanes -> one K=84 matmul in the kernel.
    hpar1 = _parity_order(26)
    bands = [jnp.take(x_img, hpar1 + dy, axis=1) for dy in range(3)]     # (n_pad, 26, 28) each
    xs = jnp.concatenate(
        [jnp.transpose(b, (1, 0, 2)).reshape(26 * n_pad, 28) for b in bands],
        axis=1).astype(bf16)                                             # (26n, 84)

    # conv1 banded weight; output lanes ordered (W parity | w'//2 | cout)
    t1 = _shift_indicator(3, 28, 26)
    o1 = _parity_order(26)
    w1c = params['conv1_w'].astype(f32)[:, 0]                            # (20, 3, 3)
    b1 = jnp.take(jnp.einsum('dio,cyd->yioc', t1, w1c), o1, axis=2)
    b1 = b1.reshape(84, 520).astype(bf16)
    b1v = jnp.tile(params['conv1_b'].astype(f32), 26).reshape(1, 520)

    # conv2 banded weights (input lanes w'*20 + cin, output lanes parity-ordered)
    t2 = _shift_indicator(3, 13, 11)
    o2 = _parity_order(11)
    w2c = params['conv2_w'].astype(f32)                                  # (32, 20, 3, 3)
    b2m = jnp.take(jnp.einsum('dio,cqyd->yiqoc', t2, w2c), o2, axis=3)
    b2m = b2m.reshape(3, 260, 352).astype(bf16)
    b2v = jnp.tile(params['conv2_b'].astype(f32), 11).reshape(1, 352)

    # attention heads batched; rows permuted into the kernel's natural flatten order
    perm = _flatten_perm()
    inv = np.argsort(perm).astype(np.int32)
    w1a = jnp.transpose(params['att_w1'].astype(f32), (1, 0, 2)).reshape(512, ks * 128)
    w1a = jnp.take(w1a, perm, axis=0).astype(bf16)                       # (512, 128*ks)
    ab1 = params['att_b1'].astype(f32).reshape(1, ks * 128)
    # fold att_w2 into the per-head block-fold matrix: scores = hid @ sblk + ab2
    aw2 = params['att_w2'].astype(f32).reshape(ks, 128)
    sblk = jnp.einsum('kj,kl->kjl', aw2, jnp.eye(ks, dtype=f32)).reshape(ks * 128, ks)
    ab2 = params['att_b2'].astype(f32).reshape(1, ks)

    # frozen per-head classifiers, natural-lane rows, zero-padded to gcols columns
    lin = jnp.take(jnp.transpose(params['linears'].astype(f32), (1, 0, 2)).reshape(512, 2 * ks),
                   perm, axis=0)
    lin = jnp.concatenate([lin, jnp.zeros((512, gcols - 2 * ks), f32)], axis=1)

    # softmax mask for padded instances
    mask = jnp.where(jnp.arange(n_pad) < n, 0.0, -1e30).astype(f32).reshape(n_pad, 1)

    operands = (xs, b1, b1v, b2m, b2v, w1a, ab1, sblk, ab2, lin, mask)

    out = pl.pallas_call(
        functools.partial(_mil_fused_kernel, n=n_pad, idw=idw),
        out_shape=jax.ShapeDtypeStruct((ks, width), f32),
        grid=(1,),
        in_specs=[_full_spec(np.shape(op)) for op in operands],
        out_specs=_full_spec((ks, width)),
        compiler_params=pltpu.CompilerParams(
            dimension_semantics=("arbitrary",)),
    )(*operands)

    # ---- tiny epilogue (review-sanctioned): diag pick + LogSoftmax + un-permute ----
    f_nat = out[:, 0:512]                                # pooled features, natural lane order
    alpha = out[:, 512:512 + n]                          # (ks, n) attention weights (torch layout)
    raw = out[:, 512 + idw:512 + idw + 2 * ks]           # (ks, 2*ks) pooled per-head classifier
    cols = (2 * jnp.arange(ks))[:, None] + jnp.arange(2)[None, :]
    y_logits = jnp.take_along_axis(raw, cols, axis=1)    # head-k row, columns [2k, 2k+1]
    y_prob = jax.nn.log_softmax(y_logits, axis=1)
    y_hat = jnp.argmax(y_prob, axis=1)
    f_out = jnp.take(f_nat, jnp.asarray(inv), axis=1)    # back to torch feature order
    # note: the pre-branch alpha = stack(mm(fs, linears)) in the reference is dead code
    # for pooling='abp' and is intentionally not computed.
    return y_prob, y_hat, alpha, f_out


def init_params(key, ks=3):
    k = jax.random.split(key, 9)
    p = {}
    p['conv1_w'] = jax.random.normal(k[0], (20, 1, 3, 3), jnp.float32) * 0.1
    p['conv1_b'] = jax.random.normal(k[1], (20,), jnp.float32) * 0.01
    p['conv2_w'] = jax.random.normal(k[2], (32, 20, 3, 3), jnp.float32) * 0.05
    p['conv2_b'] = jax.random.normal(k[3], (32,), jnp.float32) * 0.01
    # frozen classifier heads self.linears[i]: (512, 2), kaiming_normal-like
    p['linears'] = jax.random.normal(k[4], (ks, 512, 2), jnp.float32) * (2.0 / 512) ** 0.5
    # attentions a{i}: Linear(512,128) -> Tanh -> Linear(128,1)
    p['att_w1'] = jax.random.normal(k[5], (ks, 512, 128), jnp.float32) * (1.0 / 512) ** 0.5
    p['att_b1'] = jax.random.normal(k[6], (ks, 1, 128), jnp.float32) * 0.01
    p['att_w2'] = jax.random.normal(k[7], (ks, 1, 128), jnp.float32) * (1.0 / 128) ** 0.5
    p['att_b2'] = jax.random.normal(k[8], (ks, 1, 1), jnp.float32) * 0.01
    return p


if __name__ == "__main__":
    key = jax.random.PRNGKey(0)
    pkey, xkey = jax.random.split(key)
    params = init_params(pkey)
    # one MIL "bag" of 8 MNIST-shaped instances (PyTorch NCHW convention)
    x = jax.random.normal(xkey, (8, 1, 28, 28), jnp.float32)
    y_prob, y_hat, alpha, F = jax.jit(mil_forward_abp)(x, params)
    jax.block_until_ready((y_prob, y_hat, alpha, F))
    assert y_prob.shape == (3, 2) and y_hat.shape == (3,)
    assert alpha.shape == (3, 8) and F.shape == (3, 512)
    print("KERNEL_OK")
</pallas_src>

<mosaic_0001>
module attributes {stable_mosaic.version = 11 : i64} {
  func.func @_mil_fused_kernel(%arg0: i32, %arg1: memref<208x84xbf16, #tpu.memory_space<vmem>>, %arg2: memref<84x520xbf16, #tpu.memory_space<vmem>>, %arg3: memref<1x520xf32, #tpu.memory_space<vmem>>, %arg4: memref<3x260x352xbf16, #tpu.memory_space<vmem>>, %arg5: memref<1x352xf32, #tpu.memory_space<vmem>>, %arg6: memref<512x384xbf16, #tpu.memory_space<vmem>>, %arg7: memref<1x384xf32, #tpu.memory_space<vmem>>, %arg8: memref<384x3xf32, #tpu.memory_space<vmem>>, %arg9: memref<1x3xf32, #tpu.memory_space<vmem>>, %arg10: memref<512x8xf32, #tpu.memory_space<vmem>>, %arg11: memref<8x1xf32, #tpu.memory_space<vmem>>, %arg12: memref<3x648xf32, #tpu.memory_space<vmem>>) attributes {dimension_semantics = [#tpu.dimension_semantics<arbitrary>], iteration_bounds = array<i64: 1>, scalar_prefetch = 0 : i64, scratch_operands = 0 : i64, tpu.core_type = #tpu.core_type<tc>, window_params = [{pipeline_mode = #tpu.pipeline_mode<synchronous>, transform_indices = @transform_0, window_bounds = array<i64: 208, 84>}, {pipeline_mode = #tpu.pipeline_mode<synchronous>, transform_indices = @transform_1, window_bounds = array<i64: 84, 520>}, {pipeline_mode = #tpu.pipeline_mode<synchronous>, transform_indices = @transform_2, window_bounds = array<i64: 1, 520>}, {pipeline_mode = #tpu.pipeline_mode<synchronous>, transform_indices = @transform_3, window_bounds = array<i64: 3, 260, 352>}, {pipeline_mode = #tpu.pipeline_mode<synchronous>, transform_indices = @transform_4, window_bounds = array<i64: 1, 352>}, {pipeline_mode = #tpu.pipeline_mode<synchronous>, transform_indices = @transform_5, window_bounds = array<i64: 512, 384>}, {pipeline_mode = #tpu.pipeline_mode<synchronous>, transform_indices = @transform_6, window_bounds = array<i64: 1, 384>}, {pipeline_mode = #tpu.pipeline_mode<synchronous>, transform_indices = @transform_7, window_bounds = array<i64: 384, 3>}, {pipeline_mode = #tpu.pipeline_mode<synchronous>, transform_indices = @transform_8, window_bounds = array<i64: 1, 3>}, {pipeline_mode = #tpu.pipeline_mode<synchronous>, transform_indices = @transform_9, window_bounds = array<i64: 512, 8>}, {pipeline_mode = #tpu.pipeline_mode<synchronous>, transform_indices = @transform_10, window_bounds = array<i64: 8, 1>}, {pipeline_mode = #tpu.pipeline_mode<synchronous>, transform_indices = @transform_11, window_bounds = array<i64: 3, 648>}]} {
    %c0 = arith.constant 0 : index
    %c0_0 = arith.constant 0 : index
    %0 = vector.load %arg1[%c0, %c0_0] : memref<208x84xbf16, #tpu.memory_space<vmem>>, vector<208x84xbf16>
    %c0_1 = arith.constant 0 : index
    %c0_2 = arith.constant 0 : index
    %1 = vector.load %arg2[%c0_1, %c0_2] : memref<84x520xbf16, #tpu.memory_space<vmem>>, vector<84x520xbf16>
    %cst = arith.constant dense<0.000000e+00> : vector<208x520xf32>
    %2 = tpu.matmul %0, %1, %cst {dimension_numbers = #tpu.dot_dimension_numbers<[1], [0], [0], [1], [0, 0, 1, 1], [], []>} : vector<208x84xbf16>, vector<84x520xbf16>, vector<208x520xf32> -> vector<208x520xf32>
    %c0_3 = arith.constant 0 : index
    %c0_4 = arith.constant 0 : index
    %3 = vector.load %arg3[%c0_3, %c0_4] : memref<1x520xf32, #tpu.memory_space<vmem>>, vector<1x520xf32>
    %4 = vector.broadcast %3 : vector<1x520xf32> to vector<208x520xf32>
    %5 = arith.addf %2, %4 : vector<208x520xf32>
    %cst_5 = arith.constant 0.000000e+00 : f32
    %6 = vector.broadcast %cst_5 : f32 to vector<208x520xf32>
    %7 = arith.maximumf %5, %6 : vector<208x520xf32>
    %8 = vector.extract_strided_slice %7 {offsets = [0, 0], sizes = [208, 260], strides = [1, 1]} : vector<208x520xf32> to vector<208x260xf32>
    %9 = vector.extract_strided_slice %7 {offsets = [0, 260], sizes = [208, 260], strides = [1, 1]} : vector<208x520xf32> to vector<208x260xf32>
    %10 = arith.maximumf %8, %9 : vector<208x260xf32>
    %11 = vector.extract_strided_slice %10 {offsets = [0, 0], sizes = [104, 260], strides = [1, 1]} : vector<208x260xf32> to vector<104x260xf32>
    %12 = vector.extract_strided_slice %10 {offsets = [104, 0], sizes = [104, 260], strides = [1, 1]} : vector<208x260xf32> to vector<104x260xf32>
    %13 = arith.maximumf %11, %12 : vector<104x260xf32>
    %14 = arith.truncf %13 : vector<104x260xf32> to vector<104x260xbf16>
    %15 = vector.extract_strided_slice %14 {offsets = [0, 0], sizes = [88, 260], strides = [1, 1]} : vector<104x260xbf16> to vector<88x260xbf16>
    %c0_6 = arith.constant 0 : index
    %c0_7 = arith.constant 0 : index
    %c0_8 = arith.constant 0 : index
    %16 = vector.load %arg4[%c0_6, %c0_7, %c0_8] : memref<3x260x352xbf16, #tpu.memory_space<vmem>>, vector<1x260x352xbf16>
    %17 = vector.shape_cast %16 : vector<1x260x352xbf16> to vector<260x352xbf16>
    %cst_9 = arith.constant dense<0.000000e+00> : vector<88x352xf32>
    %18 = tpu.matmul %15, %17, %cst_9 {dimension_numbers = #tpu.dot_dimension_numbers<[1], [0], [0], [1], [0, 0, 1, 1], [], []>} : vector<88x260xbf16>, vector<260x352xbf16>, vector<88x352xf32> -> vector<88x352xf32>
    %19 = vector.extract_strided_slice %14 {offsets = [8, 0], sizes = [88, 260], strides = [1, 1]} : vector<104x260xbf16> to vector<88x260xbf16>
    %c1 = arith.constant 1 : index
    %c0_10 = arith.constant 0 : index
    %c0_11 = arith.constant 0 : index
    %20 = vector.load %arg4[%c1, %c0_10, %c0_11] : memref<3x260x352xbf16, #tpu.memory_space<vmem>>, vector<1x260x352xbf16>
    %21 = vector.shape_cast %20 : vector<1x260x352xbf16> to vector<260x352xbf16>
    %cst_12 = arith.constant dense<0.000000e+00> : vector<88x352xf32>
    %22 = tpu.matmul %19, %21, %cst_12 {dimension_numbers = #tpu.dot_dimension_numbers<[1], [0], [0], [1], [0, 0, 1, 1], [], []>} : vector<88x260xbf16>, vector<260x352xbf16>, vector<88x352xf32> -> vector<88x352xf32>
    %23 = arith.addf %18, %22 : vector<88x352xf32>
    %24 = vector.extract_strided_slice %14 {offsets = [16, 0], sizes = [88, 260], strides = [1, 1]} : vector<104x260xbf16> to vector<88x260xbf16>
    %c2 = arith.constant 2 : index
    %c0_13 = arith.constant 0 : index
    %c0_14 = arith.constant 0 : index
    %25 = vector.load %arg4[%c2, %c0_13, %c0_14] : memref<3x260x352xbf16, #tpu.memory_space<vmem>>, vector<1x260x352xbf16>
    %26 = vector.shape_cast %25 : vector<1x260x352xbf16> to vector<260x352xbf16>
    %cst_15 = arith.constant dense<0.000000e+00> : vector<88x352xf32>
    %27 = tpu.matmul %24, %26, %cst_15 {dimension_numbers = #tpu.dot_dimension_numbers<[1], [0], [0], [1], [0, 0, 1, 1], [], []>} : vector<88x260xbf16>, vector<260x352xbf16>, vector<88x352xf32> -> vector<88x352xf32>
    %28 = arith.addf %23, %27 : vector<88x352xf32>
    %c0_16 = arith.constant 0 : index
    %c0_17 = arith.constant 0 : index
    %29 = vector.load %arg5[%c0_16, %c0_17] : memref<1x352xf32, #tpu.memory_space<vmem>>, vector<1x352xf32>
    %30 = vector.broadcast %29 : vector<1x352xf32> to vector<88x352xf32>
    %31 = arith.addf %28, %30 : vector<88x352xf32>
    %cst_18 = arith.constant 0.000000e+00 : f32
    %32 = vector.broadcast %cst_18 : f32 to vector<88x352xf32>
    %33 = arith.maximumf %31, %32 : vector<88x352xf32>
    %34 = vector.extract_strided_slice %33 {offsets = [0, 0], sizes = [88, 160], strides = [1, 1]} : vector<88x352xf32> to vector<88x160xf32>
    %35 = vector.extract_strided_slice %33 {offsets = [0, 192], sizes = [88, 160], strides = [1, 1]} : vector<88x352xf32> to vector<88x160xf32>
    %36 = arith.maximumf %34, %35 : vector<88x160xf32>
    %37 = vector.extract_strided_slice %36 {offsets = [0, 0], sizes = [8, 160], strides = [1, 1]} : vector<88x160xf32> to vector<8x160xf32>
    %38 = vector.extract_strided_slice %36 {offsets = [8, 0], sizes = [8, 160], strides = [1, 1]} : vector<88x160xf32> to vector<8x160xf32>
    %39 = arith.maximumf %37, %38 : vector<8x160xf32>
    %40 = vector.extract_strided_slice %36 {offsets = [16, 0], sizes = [8, 160], strides = [1, 1]} : vector<88x160xf32> to vector<8x160xf32>
    %41 = vector.extract_strided_slice %36 {offsets = [24, 0], sizes = [8, 160], strides = [1, 1]} : vector<88x160xf32> to vector<8x160xf32>
    %42 = arith.maximumf %40, %41 : vector<8x160xf32>
    %43 = vector.extract_strided_slice %36 {offsets = [32, 0], sizes = [8, 160], strides = [1, 1]} : vector<88x160xf32> to vector<8x160xf32>
    %44 = vector.extract_strided_slice %36 {offsets = [40, 0], sizes = [8, 160], strides = [1, 1]} : vector<88x160xf32> to vector<8x160xf32>
    %45 = arith.maximumf %43, %44 : vector<8x160xf32>
    %46 = vector.extract_strided_slice %36 {offsets = [48, 0], sizes = [8, 160], strides = [1, 1]} : vector<88x160xf32> to vector<8x160xf32>
    %47 = vector.extract_strided_slice %36 {offsets = [56, 0], sizes = [8, 160], strides = [1, 1]} : vector<88x160xf32> to vector<8x160xf32>
    %48 = arith.maximumf %46, %47 : vector<8x160xf32>
    %49 = vector.extract_strided_slice %36 {offsets = [64, 0], sizes = [8, 160], strides = [1, 1]} : vector<88x160xf32> to vector<8x160xf32>
    %50 = vector.extract_strided_slice %36 {offsets = [72, 0], sizes = [8, 160], strides = [1, 1]} : vector<88x160xf32> to vector<8x160xf32>
    %51 = arith.maximumf %49, %50 : vector<8x160xf32>
    %52 = tpu.concatenate %39, %42, %45, %48, %51 in 0 : vector<8x160xf32>, vector<8x160xf32>, vector<8x160xf32>, vector<8x160xf32>, vector<8x160xf32> -> vector<40x160xf32>
    %53 = vector.extract_strided_slice %52 {offsets = [0, 0], sizes = [40, 128], strides = [1, 1]} : vector<40x160xf32> to vector<40x128xf32>
    %54 = vector.extract_strided_slice %52 {offsets = [0, 32], sizes = [40, 128], strides = [1, 1]} : vector<40x160xf32> to vector<40x128xf32>
    %55 = arith.addf %53, %54 : vector<40x128xf32>
    %56 = vector.extract_strided_slice %55 {offsets = [0, 0], sizes = [32, 128], strides = [1, 1]} : vector<40x128xf32> to vector<32x128xf32>
    %57 = vector.extract_strided_slice %55 {offsets = [8, 0], sizes = [32, 128], strides = [1, 1]} : vector<40x128xf32> to vector<32x128xf32>
    %58 = arith.addf %56, %57 : vector<32x128xf32>
    %cst_19 = arith.constant 2.500000e-01 : f32
    %59 = vector.broadcast %cst_19 : f32 to vector<32x128xf32>
    %60 = arith.mulf %59, %58 : vector<32x128xf32>
    %61 = vector.extract_strided_slice %60 {offsets = [0, 0], sizes = [8, 128], strides = [1, 1]} : vector<32x128xf32> to vector<8x128xf32>
    %62 = vector.extract_strided_slice %60 {offsets = [8, 0], sizes = [8, 128], strides = [1, 1]} : vector<32x128xf32> to vector<8x128xf32>
    %63 = vector.extract_strided_slice %60 {offsets = [16, 0], sizes = [8, 128], strides = [1, 1]} : vector<32x128xf32> to vector<8x128xf32>
    %64 = vector.extract_strided_slice %60 {offsets = [24, 0], sizes = [8, 128], strides = [1, 1]} : vector<32x128xf32> to vector<8x128xf32>
    %65 = tpu.concatenate %61, %62, %63, %64 in 1 : vector<8x128xf32>, vector<8x128xf32>, vector<8x128xf32>, vector<8x128xf32> -> vector<8x512xf32>
    %66 = arith.truncf %65 : vector<8x512xf32> to vector<8x512xbf16>
    %c0_20 = arith.constant 0 : index
    %c0_21 = arith.constant 0 : index
    %67 = vector.load %arg6[%c0_20, %c0_21] : memref<512x384xbf16, #tpu.memory_space<vmem>>, vector<512x384xbf16>
    %cst_22 = arith.constant dense<0.000000e+00> : vector<8x384xf32>
    %68 = tpu.matmul %66, %67, %cst_22 {dimension_numbers = #tpu.dot_dimension_numbers<[1], [0], [0], [1], [0, 0, 1, 1], [], []>} : vector<8x512xbf16>, vector<512x384xbf16>, vector<8x384xf32> -> vector<8x384xf32>
    %c0_23 = arith.constant 0 : index
    %c0_24 = arith.constant 0 : index
    %69 = vector.load %arg7[%c0_23, %c0_24] : memref<1x384xf32, #tpu.memory_space<vmem>>, vector<1x384xf32>
    %70 = vector.broadcast %69 : vector<1x384xf32> to vector<8x384xf32>
    %71 = arith.addf %68, %70 : vector<8x384xf32>
    %72 = math.tanh %71 : vector<8x384xf32>
    %c0_25 = arith.constant 0 : index
    %c0_26 = arith.constant 0 : index
    %73 = vector.load %arg8[%c0_25, %c0_26] : memref<384x3xf32, #tpu.memory_space<vmem>>, vector<384x3xf32>
    %cst_27 = arith.constant dense<0.000000e+00> : vector<8x3xf32>
    %74 = tpu.matmul %72, %73, %cst_27 {dimension_numbers = #tpu.dot_dimension_numbers<[1], [0], [0], [1], [0, 0, 1, 1], [], []>} : vector<8x384xf32>, vector<384x3xf32>, vector<8x3xf32> -> vector<8x3xf32>
    %c0_28 = arith.constant 0 : index
    %c0_29 = arith.constant 0 : index
    %75 = vector.load %arg9[%c0_28, %c0_29] : memref<1x3xf32, #tpu.memory_space<vmem>>, vector<1x3xf32>
    %76 = vector.broadcast %75 : vector<1x3xf32> to vector<8x3xf32>
    %77 = arith.addf %74, %76 : vector<8x3xf32>
    %c0_30 = arith.constant 0 : index
    %c0_31 = arith.constant 0 : index
    %78 = vector.load %arg11[%c0_30, %c0_31] : memref<8x1xf32, #tpu.memory_space<vmem>>, vector<8x1xf32>
    %79 = vector.broadcast %78 : vector<8x1xf32> to vector<8x3xf32>
    %80 = arith.addf %77, %79 : vector<8x3xf32>
    %cst_32 = arith.constant dense<0xFF800000> : vector<3xf32>
    %81 = vector.multi_reduction <maximumf>, %80, %cst_32 [0] : vector<8x3xf32> to vector<3xf32>
    %82 = vector.shape_cast %81 : vector<3xf32> to vector<1x3xf32>
    %83 = vector.broadcast %82 : vector<1x3xf32> to vector<8x3xf32>
    %84 = arith.subf %80, %83 : vector<8x3xf32>
    %85 = math.exp %84 : vector<8x3xf32>
    %cst_33 = arith.constant dense<0.000000e+00> : vector<3xf32>
    %86 = vector.multi_reduction <add>, %85, %cst_33 [0] : vector<8x3xf32> to vector<3xf32>
    %87 = vector.shape_cast %86 : vector<3xf32> to vector<1x3xf32>
    %88 = vector.broadcast %87 : vector<1x3xf32> to vector<8x3xf32>
    %89 = arith.divf %85, %88 : vector<8x3xf32>
    %90 = tpu.iota {dimensions = array<i32: 0>} : vector<8x128xi32>
    %91 = tpu.iota {dimensions = array<i32: 1>} : vector<8x128xi32>
    %92 = arith.cmpi eq, %90, %91 : vector<8x128xi32>
    %93 = arith.extui %92 : vector<8x128xi1> to vector<8x128xi32>
    %94 = arith.sitofp %93 : vector<8x128xi32> to vector<8x128xf32>
    %c0_34 = arith.constant 0 : index
    %c0_35 = arith.constant 0 : index
    %95 = vector.load %arg10[%c0_34, %c0_35] : memref<512x8xf32, #tpu.memory_space<vmem>>, vector<512x8xf32>
    %cst_36 = arith.constant dense<0.000000e+00> : vector<8x8xf32>
    %96 = tpu.matmul %65, %95, %cst_36 {dimension_numbers = #tpu.dot_dimension_numbers<[1], [0], [0], [1], [0, 0, 1, 1], [], []>} : vector<8x512xf32>, vector<512x8xf32>, vector<8x8xf32> -> vector<8x8xf32>
    %97 = tpu.concatenate %65, %94, %96 in 1 : vector<8x512xf32>, vector<8x128xf32>, vector<8x8xf32> -> vector<8x648xf32>
    %cst_37 = arith.constant dense<0.000000e+00> : vector<3x648xf32>
    %98 = tpu.matmul %89, %97, %cst_37 {dimension_numbers = #tpu.dot_dimension_numbers<[0], [0], [1], [1], [0, 1, 1, 1], [], []>} : vector<8x3xf32>, vector<8x648xf32>, vector<3x648xf32> -> vector<3x648xf32>
    %c0_38 = arith.constant 0 : index
    %c0_39 = arith.constant 0 : index
    %99 = vector.load %arg12[%c0_38, %c0_39] : memref<3x648xf32, #tpu.memory_space<vmem>>, vector<3x648xf32>
    tpu.vector_store %arg12[%c0_38, %c0_39], %98 {strides = array<i32>} : memref<3x648xf32, #tpu.memory_space<vmem>>, vector<3x648xf32>,
    return
  }
  func.func @transform_0(%arg0: i32) -> (i32, i32) {
    %c0_i32 = arith.constant 0 : i32
    %c0_i32_0 = arith.constant 0 : i32
    %c0_i32_1 = arith.constant 0 : i32
    return %c0_i32, %c0_i32_0 : i32, i32
  }
  func.func @transform_1(%arg0: i32) -> (i32, i32) {
    %c0_i32 = arith.constant 0 : i32
    %c0_i32_0 = arith.constant 0 : i32
    %c0_i32_1 = arith.constant 0 : i32
    return %c0_i32, %c0_i32_0 : i32, i32
  }
  func.func @transform_2(%arg0: i32) -> (i32, i32) {
    %c0_i32 = arith.constant 0 : i32
    %c0_i32_0 = arith.constant 0 : i32
    %c0_i32_1 = arith.constant 0 : i32
    return %c0_i32, %c0_i32_0 : i32, i32
  }
  func.func @transform_3(%arg0: i32) -> (i32, i32, i32) {
    %c0_i32 = arith.constant 0 : i32
    %c0_i32_0 = arith.constant 0 : i32
    %c0_i32_1 = arith.constant 0 : i32
    %c0_i32_2 = arith.constant 0 : i32
    return %c0_i32, %c0_i32_0, %c0_i32_1 : i32, i32, i32
  }
  func.func @transform_4(%arg0: i32) -> (i32, i32) {
    %c0_i32 = arith.constant 0 : i32
    %c0_i32_0 = arith.constant 0 : i32
    %c0_i32_1 = arith.constant 0 : i32
    return %c0_i32, %c0_i32_0 : i32, i32
  }
  func.func @transform_5(%arg0: i32) -> (i32, i32) {
    %c0_i32 = arith.constant 0 : i32
    %c0_i32_0 = arith.constant 0 : i32
    %c0_i32_1 = arith.constant 0 : i32
    return %c0_i32, %c0_i32_0 : i32, i32
  }
  func.func @transform_6(%arg0: i32) -> (i32, i32) {
    %c0_i32 = arith.constant 0 : i32
    %c0_i32_0 = arith.constant 0 : i32
    %c0_i32_1 = arith.constant 0 : i32
    return %c0_i32, %c0_i32_0 : i32, i32
  }
  func.func @transform_7(%arg0: i32) -> (i32, i32) {
    %c0_i32 = arith.constant 0 : i32
    %c0_i32_0 = arith.constant 0 : i32
    %c0_i32_1 = arith.constant 0 : i32
    return %c0_i32, %c0_i32_0 : i32, i32
  }
  func.func @transform_8(%arg0: i32) -> (i32, i32) {
    %c0_i32 = arith.constant 0 : i32
    %c0_i32_0 = arith.constant 0 : i32
    %c0_i32_1 = arith.constant 0 : i32
    return %c0_i32, %c0_i32_0 : i32, i32
  }
  func.func @transform_9(%arg0: i32) -> (i32, i32) {
    %c0_i32 = arith.constant 0 : i32
    %c0_i32_0 = arith.constant 0 : i32
    %c0_i32_1 = arith.constant 0 : i32
    return %c0_i32, %c0_i32_0 : i32, i32
  }
  func.func @transform_10(%arg0: i32) -> (i32, i32) {
    %c0_i32 = arith.constant 0 : i32
    %c0_i32_0 = arith.constant 0 : i32
    %c0_i32_1 = arith.constant 0 : i32
    return %c0_i32, %c0_i32_0 : i32, i32
  }
  func.func @transform_11(%arg0: i32) -> (i32, i32) {
    %c0_i32 = arith.constant 0 : i32
    %c0_i32_0 = arith.constant 0 : i32
    %c0_i32_1 = arith.constant 0 : i32
    return %c0_i32, %c0_i32_0 : i32, i32
  }
}

</mosaic_0001>

<llo_original>
// kernel: tile.13
$region0: #{tile.13}
  #allocation0 [shape = 's32[1]{0}', space=sflag, size = 0x4, scoped, tag = 'scoped memory for tile.13']
  %s0 = inlined_call_operand.vmem [shape: f32[20], index: 0, kind: input, shape index: {}]
  %s1 = inlined_call_operand.vmem [shape: f32[26,20], index: 1, kind: output, shape index: {}]
  // Predicated region
  $region2: #{tile.13} parent=0 // pred_check
    _
  $region3: #{tile.13} parent=0 // pred_check_branch
    %3 = sbr.rel (0) target = $region5
  $region4: #{tile.13} parent=0 // pred_region
    _
  $region5: #{tile.13} parent=0 // pred_fallthru
    _
  %v4 = vld [vmem:[%s0] ss:$0 sm:$0xff]
  %5 = vst [vmem:[%s1] sm:$0xff] %v4
  %s6 = scalar_lea.vmem %s1, 8
  %7 = vst [vmem:[%s6] sm:$0xff] %v4
  %s8 = scalar_lea.vmem %s1, 16
  %9 = vst [vmem:[%s8] sm:$0xff] %v4
  %s10 = scalar_lea.vmem %s1, 24
  %11 = vst [vmem:[%s10] sm:$0xff] %v4

// kernel: tile.14
$region0: #{tile.14}
  %s0 = inlined_call_operand.vmem [shape: f32[26,20], index: 0, kind: input, shape index: {}]
  %s1 = inlined_call_operand.vmem [shape: f32[1,520], index: 1, kind: output, shape index: {}]
  $region1: #{tile.14} parent=0
    #allocation0 [shape = 'u8[20480]{0}', space=vmem, size = 0x5000, scoped, tag = 'scoped mem for output reshape']
    %v2 = vld [vmem:[%s0] sm:$0x1]
    %vm3 = vcmask 162816
    %4 = vst.msk [vmem:[#allocation0] sm:$0x1] %vm3, %v2
    %s5 = scalar_lea.vmem %s0, 19
    %v6 = vld [vmem:[%s5] sm:$0x1]
    %s7 = scalar_lea.vmem %s0, 19
    %v8 = vld [vmem:[%s7] sm:$0x1]
    %vm9 = vcmask 31744
    %v10 = vsel %vm9, %v8, %v6
    %11 = vrot.lane.b32.xlu0 %v10, 124
    %v12 = vpop.permute.xlu0 %11
    %vm13 = vcmask 130048
    %s14 = scalar_lea.vmem [#allocation0], 24
    %15 = vst.msk [vmem:[%s14] sm:$0x1] %vm13, %v12
    %vm16 = vcmask 1048544
    %s17 = scalar_lea.vmem [#allocation0], 16
    %18 = vst.msk [vmem:[%s17] sm:$0x1] %vm16, %v12
    %s19 = scalar_lea.vmem %s0, 6
    %v20 = vld [vmem:[%s19] sm:$0x1]
    %s21 = scalar_lea.vmem %s0, 6
    %v22 = vld [vmem:[%s21] sm:$0x1]
    %vm23 = vcmask 64512
    %v24 = vsel %vm23, %v22, %v20
    %25 = vrot.lane.b32.xlu0 %v24, 120
    %v26 = vpop.permute.xlu0 %25
    %vm27 = vcmask 97280
    %s28 = scalar_lea.vmem [#allocation0], 8
    %29 = vst.msk [vmem:[%s28] sm:$0x1] %vm27, %v26
    %vm30 = vcmask 1048512
    %31 = vst.msk [vmem:[#allocation0] sm:$0x1] %vm30, %v26
    %s32 = scalar_lea.vmem %s0, 25
    %v33 = vld [vmem:[%s32] sm:$0x1]
    %s34 = scalar_lea.vmem %s0, 25
    %v35 = vld [vmem:[%s34] sm:$0x1]
    %vm36 = vcmask 97280
    %v37 = vsel %vm36, %v35, %v33
    %38 = vrot.lane.b32.xlu0 %v37, 116
    %v39 = vpop.permute.xlu0 %38
    %vm40 = vcmask 64512
    %s41 = scalar_lea.vmem [#allocation0], 32
    %42 = vst.msk [vmem:[%s41] sm:$0x1] %vm40, %v39
    %vm43 = vcmask 1048480
    %s44 = scalar_lea.vmem [#allocation0], 24
    %45 = vst.msk [vmem:[%s44] sm:$0x1] %vm43, %v39
    %s46 = scalar_lea.vmem %s0, 12
    %v47 = vld [vmem:[%s46] sm:$0x1]
    %s48 = scalar_lea.vmem %s0, 12
    %v49 = vld [vmem:[%s48] sm:$0x1]
    %vm50 = vcmask 130048
    %v51 = vsel %vm50, %v49, %v47
    %52 = vrot.lane.b32.xlu0 %v51, 112
    %v53 = vpop.permute.xlu0 %52
    %vm54 = vcmask 31744
    %s55 = scalar_lea.vmem [#allocation0], 16
    %56 = vst.msk [vmem:[%s55] sm:$0x1] %vm54, %v53
    %vm57 = vcmask 1048448
    %s58 = scalar_lea.vmem [#allocation0], 8
    %59 = vst.msk [vmem:[%s58] sm:$0x1] %vm57, %v53
    %s60 = scalar_lea.vmem %s0, 18
    %v61 = vld [vmem:[%s60] sm:$0x1]
    %62 = vrot.lane.b32.xlu0 %v61, 104
    %v63 = vpop.permute.xlu0 %62
    %vm64 = vcmask 1015616
    %s65 = scalar_lea.vmem [#allocation0], 16
    %66 = vst.msk [vmem:[%s65] sm:$0x1] %vm64, %v63
    %s67 = scalar_lea.vmem %s0, 5
    %v68 = vld [vmem:[%s67] sm:$0x1]
    %69 = vrot.lane.b32.xlu0 %v68, 100
    %v70 = vpop.permute.xlu0 %69
    %vm71 = vcmask 982816
    %72 = vst.msk [vmem:[#allocation0] sm:$0x1] %vm71, %v70
    %s73 = scalar_lea.vmem %s0, 24
    %v74 = vld [vmem:[%s73] sm:$0x1]
    %75 = vrot.lane.b32.xlu0 %v74, 96
    %v76 = vpop.permute.xlu0 %75
    %vm77 = vcmask 950016
    %s78 = scalar_lea.vmem [#allocation0], 24
    %79 = vst.msk [vmem:[%s78] sm:$0x1] %vm77, %v76
    %s80 = scalar_lea.vmem %s0, 11
    %v81 = vld [vmem:[%s80] sm:$0x1]
    %82 = vrot.lane.b32.xlu0 %v81, 92
    %v83 = vpop.permute.xlu0 %82
    %vm84 = vcmask 917216
    %s85 = scalar_lea.vmem [#allocation0], 8
    %86 = vst.msk [vmem:[%s85] sm:$0x1] %vm84, %v83
    %s87 = scalar_lea.vmem %s0, 17
    %v88 = vld [vmem:[%s87] sm:$0x1]
    %89 = vrot.lane.b32.xlu0 %v88, 84
    %v90 = vpop.permute.xlu0 %89
    %vm91 = vcmask 851616
    %s92 = scalar_lea.vmem [#allocation0], 16
    %93 = vst.msk [vmem:[%s92] sm:$0x1] %vm91, %v90
    %s94 = scalar_lea.vmem %s0, 4
    %v95 = vld [vmem:[%s94] sm:$0x1]
    %96 = vrot.lane.b32.xlu0 %v95, 80
    %v97 = vpop.permute.xlu0 %96
    %vm98 = vcmask 818816
    %99 = vst.msk [vmem:[#allocation0] sm:$0x1] %vm98, %v97
    %s100 = scalar_lea.vmem %s0, 23
    %v101 = vld [vmem:[%s100] sm:$0x1]
    %102 = vrot.lane.b32.xlu0 %v101, 76
    %v103 = vpop.permute.xlu0 %102
    %vm104 = vcmask 786016
    %s105 = scalar_lea.vmem [#allocation0], 24
    %106 = vst.msk [vmem:[%s105] sm:$0x1] %vm104, %v103
    %s107 = scalar_lea.vmem %s0, 10
    %v108 = vld [vmem:[%s107] sm:$0x1]
    %109 = vrot.lane.b32.xlu0 %v108, 72
    %v110 = vpop.permute.xlu0 %109
    %vm111 = vcmask 753216
    %s112 = scalar_lea.vmem [#allocation0], 8
    %113 = vst.msk [vmem:[%s112] sm:$0x1] %vm111, %v110
    %s114 = scalar_lea.vmem %s0, 16
    %v115 = vld [vmem:[%s114] sm:$0x1]
    %116 = vrot.lane.b32.xlu0 %v115, 64
    %v117 = vpop.permute.xlu0 %116
    %vm118 = vcmask 687616
    %s119 = scalar_lea.vmem [#allocation0], 16
    %120 = vst.msk [vmem:[%s119] sm:$0x1] %vm118, %v117
    %s121 = scalar_lea.vmem %s0, 3
    %v122 = vld [vmem:[%s121] sm:$0x1]
    %123 = vrot.lane.b32.xlu0 %v122, 60
    %v124 = vpop.permute.xlu0 %123
    %vm125 = vcmask 654816
    %126 = vst.msk [vmem:[#allocation0] sm:$0x1] %vm125, %v124
    %s127 = scalar_lea.vmem %s0, 22
    %v128 = vld [vmem:[%s127] sm:$0x1]
    %129 = vrot.lane.b32.xlu0 %v128, 56
    %v130 = vpop.permute.xlu0 %129
    %vm131 = vcmask 622016
    %s132 = scalar_lea.vmem [#allocation0], 24
    %133 = vst.msk [vmem:[%s132] sm:$0x1] %vm131, %v130
    %s134 = scalar_lea.vmem %s0, 9
    %v135 = vld [vmem:[%s134] sm:$0x1]
    %136 = vrot.lane.b32.xlu0 %v135, 52
    %v137 = vpop.permute.xlu0 %136
    %vm138 = vcmask 589216
    %s139 = scalar_lea.vmem [#allocation0], 8
    %140 = vst.msk [vmem:[%s139] sm:$0x1] %vm138, %v137
    %s141 = scalar_lea.vmem %s0, 15
    %v142 = vld [vmem:[%s141] sm:$0x1]
    %143 = vrot.lane.b32.xlu0 %v142, 44
    %v144 = vpop.permute.xlu0 %143
    %vm145 = vcmask 523616
    %s146 = scalar_lea.vmem [#allocation0], 16
    %147 = vst.msk [vmem:[%s146] sm:$0x1] %vm145, %v144
    %s148 = scalar_lea.vmem %s0, 2
    %v149 = vld [vmem:[%s148] sm:$0x1]
    %150 = vrot.lane.b32.xlu0 %v149, 40
    %v151 = vpop.permute.xlu0 %150
    %vm152 = vcmask 490816
    %153 = vst.msk [vmem:[#allocation0] sm:$0x1] %vm152, %v151
    %s154 = scalar_lea.vmem %s0, 21
    %v155 = vld [vmem:[%s154] sm:$0x1]
    %156 = vrot.lane.b32.xlu0 %v155, 36
    %v157 = vpop.permute.xlu0 %156
    %vm158 = vcmask 458016
    %s159 = scalar_lea.vmem [#allocation0], 24
    %160 = vst.msk [vmem:[%s159] sm:$0x1] %vm158, %v157
    %s161 = scalar_lea.vmem %s0, 8
    %v162 = vld [vmem:[%s161] sm:$0x1]
    %163 = vrot.lane.b32.xlu0 %v162, 32
    %v164 = vpop.permute.xlu0 %163
    %vm165 = vcmask 425216
    %s166 = scalar_lea.vmem [#allocation0], 8
    %167 = vst.msk [vmem:[%s166] sm:$0x1] %vm165, %v164
    %s168 = scalar_lea.vmem %s0, 14
    %v169 = vld [vmem:[%s168] sm:$0x1]
    %170 = vrot.lane.b32.xlu0 %v169, 24
    %v171 = vpop.permute.xlu0 %170
    %vm172 = vcmask 359616
    %s173 = scalar_lea.vmem [#allocation0], 16
    %174 = vst.msk [vmem:[%s173] sm:$0x1] %vm172, %v171
    %s175 = scalar_lea.vmem %s0, 1
    %v176 = vld [vmem:[%s175] sm:$0x1]
    %177 = vrot.lane.b32.xlu0 %v176, 20
    %v178 = vpop.permute.xlu0 %177
    %vm179 = vcmask 326816
    %180 = vst.msk [vmem:[#allocation0] sm:$0x1] %vm179, %v178
    %s181 = scalar_lea.vmem %s0, 20
    %v182 = vld [vmem:[%s181] sm:$0x1]
    %183 = vrot.lane.b32.xlu0 %v182, 16
    %v184 = vpop.permute.xlu0 %183
    %vm185 = vcmask 294016
    %s186 = scalar_lea.vmem [#allocation0], 24
    %187 = vst.msk [vmem:[%s186] sm:$0x1] %vm185, %v184
    %s188 = scalar_lea.vmem %s0, 7
    %v189 = vld [vmem:[%s188] sm:$0x1]
    %190 = vrot.lane.b32.xlu0 %v189, 12
    %v191 = vpop.permute.xlu0 %190
    %vm192 = vcmask 261216
    %s193 = scalar_lea.vmem [#allocation0], 8
    %194 = vst.msk [vmem:[%s193] sm:$0x1] %vm192, %v191
    %s195 = scalar_lea.vmem %s0, 13
    %v196 = vld [vmem:[%s195] sm:$0x1]
    %197 = vrot.lane.b32.xlu0 %v196, 4
    %v198 = vpop.permute.xlu0 %197
    %vm199 = vcmask 195616
    %s200 = scalar_lea.vmem [#allocation0], 16
    %201 = vst.msk [vmem:[%s200] sm:$0x1] %vm199, %v198
    %s203 = sshll.u32 1, 1
    %s204 = ssub.s32 %s203, 1
    %v206 = vld [vmem:[#allocation0] sm:%s204]
    %s207 = sshll.u32 1, 1
    %s208 = ssub.s32 %s207, 1
    %209 = vst [vmem:[%s1] sm:%s208] %v206
    %s210 = scalar_lea.vmem [#allocation0], 8
    %v211 = vld [vmem:[%s210] sm:%s204]
    %s212 = sshll.u32 1, 1
    %s213 = ssub.s32 %s212, 1
    %s214 = scalar_lea.vmem %s1, 1
    %215 = vst [vmem:[%s214] sm:%s213] %v211
    %s216 = scalar_lea.vmem [#allocation0], 16
    %v217 = vld [vmem:[%s216] sm:%s204]
    %s218 = sshll.u32 1, 1
    %s219 = ssub.s32 %s218, 1
    %s220 = smul.addr 1, 2
    %s221 = scalar_lea.vmem %s1, %s220
    %222 = vst [vmem:[%s221] sm:%s219] %v217
    %s223 = scalar_lea.vmem [#allocation0], 24
    %v224 = vld [vmem:[%s223] sm:%s204]
    %s225 = sshll.u32 1, 1
    %s226 = ssub.s32 %s225, 1
    %s227 = smul.addr 1, 3
    %s228 = scalar_lea.vmem %s1, %s227
    %229 = vst [vmem:[%s228] sm:%s226] %v224
    %s230 = scalar_lea.vmem [#allocation0], 32
    %v231 = vld [vmem:[%s230] sm:%s204]
    %s232 = sshll.u32 1, 1
    %s233 = ssub.s32 %s232, 1
    %s234 = smul.addr 1, 4
    %s235 = scalar_lea.vmem %s1, %s234
    %236 = vst [vmem:[%s235] sm:%s233] %v231

// kernel: tile.18
$region0: #{tile.18}
  #allocation0 [shape = 's32[1]{0}', space=sflag, size = 0x4, scoped, tag = 'scoped memory for tile.18']
  %s0 = inlined_call_operand.vmem [shape: f32[32], index: 0, kind: input, shape index: {}]
  %s1 = inlined_call_operand.vmem [shape: f32[11,32], index: 1, kind: output, shape index: {}]
  // Predicated region
  $region2: #{tile.18} parent=0 // pred_check
    _
  $region3: #{tile.18} parent=0 // pred_check_branch
    %3 = sbr.rel (0) target = $region5
  $region4: #{tile.18} parent=0 // pred_region
    _
  $region5: #{tile.18} parent=0 // pred_fallthru
    _
  %v4 = vld [vmem:[%s0] ss:$0 sm:$0xff]
  %5 = vst [vmem:[%s1] sm:$0xff] %v4
  %s6 = scalar_lea.vmem %s1, 8
  %7 = vst [vmem:[%s6] sm:$0xff] %v4

// kernel: tile.19
$region0: #{tile.19}
  %s0 = inlined_call_operand.vmem [shape: f32[11,32], index: 0, kind: input, shape index: {}]
  %s1 = inlined_call_operand.vmem [shape: f32[1,352], index: 1, kind: output, shape index: {}]
  $region1: #{tile.19} parent=0
    #allocation0 [shape = 'u8[12288]{0}', space=vmem, size = 0x3000, scoped, tag = 'scoped mem for output reshape']
    %v2 = vld [vmem:[%s0] ss:$4 sm:$0x7]
    %vm3 = vcmask 261120
    %4 = vst.msk [vmem:[#allocation0] ss:$8 sm:$0x7] %vm3, %v2
    %s5 = scalar_lea.vmem %s0, 3
    %s6 = smov 3
    %v7 = vld [vmem:[%s5] ss:$4 sm:%s6]
    %8 = vrot.lane.b32.xlu0 %v7, 96
    %v9 = vpop.permute.xlu0 %8
    %vm10 = vcmask 1048320
    %11 = vst.msk [vmem:[#allocation0] ss:$8 sm:$0x3] %vm10, %v9
    %s12 = scalar_lea.vmem %s0, 2
    %v13 = vld [vmem:[%s12] ss:$4 sm:$0x7]
    %14 = vrot.lane.b32.xlu0 %v13, 64
    %v15 = vpop.permute.xlu0 %14
    %vm16 = vcmask 785920
    %17 = vst.msk [vmem:[#allocation0] ss:$8 sm:$0x7] %vm16, %v15
    %s18 = scalar_lea.vmem %s0, 1
    %v19 = vld [vmem:[%s18] ss:$4 sm:$0x7]
    %20 = vrot.lane.b32.xlu0 %v19, 32
    %v21 = vpop.permute.xlu0 %20
    %vm22 = vcmask 523520
    %23 = vst.msk [vmem:[#allocation0] ss:$8 sm:$0x7] %vm22, %v21
    %s25 = sshll.u32 1, 1
    %s26 = ssub.s32 %s25, 1
    %v28 = vld [vmem:[#allocation0] sm:%s26]
    %s29 = sshll.u32 1, 1
    %s30 = ssub.s32 %s29, 1
    %31 = vst [vmem:[%s1] sm:%s30] %v28
    %s32 = scalar_lea.vmem [#allocation0], 8
    %v33 = vld [vmem:[%s32] sm:%s26]
    %s34 = sshll.u32 1, 1
    %s35 = ssub.s32 %s34, 1
    %s36 = scalar_lea.vmem %s1, 1
    %37 = vst [vmem:[%s36] sm:%s35] %v33
    %s38 = scalar_lea.vmem [#allocation0], 16
    %v39 = vld [vmem:[%s38] sm:%s26]
    %s40 = sshll.u32 1, 1
    %s41 = ssub.s32 %s40, 1
    %s42 = smul.addr 1, 2
    %s43 = scalar_lea.vmem %s1, %s42
    %44 = vst [vmem:[%s43] sm:%s41] %v39

// kernel: mil_forward_abp.1
$region0: #{mil_forward_abp.1}
  #allocation0 [shape = 'u32[]', space=smem, size = 0x4, offset = 0x4, fixed_abs, tag = 'smem constant byte address 0x4 - core index']
  #allocation1 [shape = 'u32[144,128]{1,0:T(1,128)}', space=vmem, size = 0x12000, scoped, tag = 'internal scratch']
  %s0 = inlined_call_operand.vmem [shape: bf16[208,84], index: 0, kind: input, shape index: {}]
  %s1 = inlined_call_operand.vmem [shape: bf16[84,520], index: 1, kind: input, shape index: {}]
  %s2 = inlined_call_operand.vmem [shape: f32[1,520], index: 2, kind: input, shape index: {}]
  %s3 = inlined_call_operand.vmem [shape: bf16[3,260,352], index: 3, kind: input, shape index: {}]
  %s4 = inlined_call_operand.vmem [shape: f32[1,352], index: 4, kind: input, shape index: {}]
  %s5 = inlined_call_operand.vmem [shape: bf16[512,384], index: 5, kind: input, shape index: {}]
  %s6 = inlined_call_operand.vmem [shape: f32[1,384], index: 6, kind: input, shape index: {}]
  %s7 = inlined_call_operand.vmem [shape: f32[384,3], index: 7, kind: input, shape index: {}]
  %s8 = inlined_call_operand.vmem [shape: f32[1,3], index: 8, kind: input, shape index: {}]
  %s9 = inlined_call_operand.vmem [shape: f32[512,8], index: 9, kind: input, shape index: {}]
  %s10 = inlined_call_operand.vmem [shape: f32[8,1], index: 10, kind: input, shape index: {}]
  %s11 = inlined_call_operand.vmem [shape: f32[3,648], index: 11, kind: output, shape index: {}]
  %s12 = sld [smem:[#allocation0]]
  $region54: #{mil_forward_abp.1} parent=0
    _
  %s14 = ssub.s32 1, %s12
  %s15 = scalar_select 0, %s14, %s12
  // Predicated region
  $region2: #{mil_forward_abp.1} parent=0 // pred_check
    _
  $region3: #{mil_forward_abp.1} parent=0 // pred_check_branch
    %17 = sbr.rel (0) target = $region5
  $region4: #{mil_forward_abp.1} parent=0 // pred_region
    _
  $region5: #{mil_forward_abp.1} parent=0 // pred_fallthru
    _
  // Predicated region
  $region6: #{mil_forward_abp.1} parent=0 // pred_check
    _
  $region7: #{mil_forward_abp.1} parent=0 // pred_check_branch
    %19 = sbr.rel (0) target = $region9
  $region8: #{mil_forward_abp.1} parent=0 // pred_region
    _
  $region9: #{mil_forward_abp.1} parent=0 // pred_fallthru
    _
  // Predicated region
  $region10: #{mil_forward_abp.1} parent=0 // pred_check
    _
  $region11: #{mil_forward_abp.1} parent=0 // pred_check_branch
    %21 = sbr.rel (0) target = $region13
  $region12: #{mil_forward_abp.1} parent=0 // pred_region
    _
  $region13: #{mil_forward_abp.1} parent=0 // pred_fallthru
    _
  // Predicated region
  $region14: #{mil_forward_abp.1} parent=0 // pred_check
    _
  $region15: #{mil_forward_abp.1} parent=0 // pred_check_branch
    %23 = sbr.rel (0) target = $region17
  $region16: #{mil_forward_abp.1} parent=0 // pred_region
    _
  $region17: #{mil_forward_abp.1} parent=0 // pred_fallthru
    _
  // Predicated region
  $region18: #{mil_forward_abp.1} parent=0 // pred_check
    _
  $region19: #{mil_forward_abp.1} parent=0 // pred_check_branch
    %25 = sbr.rel (0) target = $region21
  $region20: #{mil_forward_abp.1} parent=0 // pred_region
    _
  $region21: #{mil_forward_abp.1} parent=0 // pred_fallthru
    _
  // Predicated region
  $region22: #{mil_forward_abp.1} parent=0 // pred_check
    _
  $region23: #{mil_forward_abp.1} parent=0 // pred_check_branch
    %27 = sbr.rel (0) target = $region25
  $region24: #{mil_forward_abp.1} parent=0 // pred_region
    _
  $region25: #{mil_forward_abp.1} parent=0 // pred_fallthru
    _
  // Predicated region
  $region26: #{mil_forward_abp.1} parent=0 // pred_check
    _
  $region27: #{mil_forward_abp.1} parent=0 // pred_check_branch
    %29 = sbr.rel (0) target = $region29
  $region28: #{mil_forward_abp.1} parent=0 // pred_region
    _
  $region29: #{mil_forward_abp.1} parent=0 // pred_fallthru
    _
  // Predicated region
  $region30: #{mil_forward_abp.1} parent=0 // pred_check
    _
  $region31: #{mil_forward_abp.1} parent=0 // pred_check_branch
    %31 = sbr.rel (0) target = $region33
  $region32: #{mil_forward_abp.1} parent=0 // pred_region
    _
  $region33: #{mil_forward_abp.1} parent=0 // pred_fallthru
    _
  // Predicated region
  $region34: #{mil_forward_abp.1} parent=0 // pred_check
    _
  $region35: #{mil_forward_abp.1} parent=0 // pred_check_branch
    %33 = sbr.rel (0) target = $region37
  $region36: #{mil_forward_abp.1} parent=0 // pred_region
    _
  $region37: #{mil_forward_abp.1} parent=0 // pred_fallthru
    _
  // Predicated region
  $region38: #{mil_forward_abp.1} parent=0 // pred_check
    _
  $region39: #{mil_forward_abp.1} parent=0 // pred_check_branch
    %35 = sbr.rel (0) target = $region41
  $region40: #{mil_forward_abp.1} parent=0 // pred_region
    _
  $region41: #{mil_forward_abp.1} parent=0 // pred_fallthru
    _
  // Predicated region
  $region42: #{mil_forward_abp.1} parent=0 // pred_check
    _
  $region43: #{mil_forward_abp.1} parent=0 // pred_check_branch
    %37 = sbr.rel (0) target = $region45
  $region44: #{mil_forward_abp.1} parent=0 // pred_region
    _
  $region45: #{mil_forward_abp.1} parent=0 // pred_fallthru
    _
  %v39 = vld [vmem:[%s0] sm:$0xf]
  %v40 = vld [vmem:[%s0 + $0x4] sm:$0xf]
  %v41 = vld [vmem:[%s0 + $0x8] sm:$0xf]
  %v42 = vld [vmem:[%s0 + $0xc] sm:$0xf]
  %v43 = vld [vmem:[%s0 + $0x10] sm:$0xf]
  %v44 = vld [vmem:[%s0 + $0x14] sm:$0xf]
  %v45 = vld [vmem:[%s0 + $0x18] sm:$0xf]
  %v46 = vld [vmem:[%s0 + $0x1c] sm:$0xf]
  %v47 = vld [vmem:[%s0 + $0x20] sm:$0xf]
  %v48 = vld [vmem:[%s0 + $0x24] sm:$0xf]
  %v49 = vld [vmem:[%s0 + $0x28] sm:$0xf]
  %v50 = vld [vmem:[%s0 + $0x2c] sm:$0xf]
  %v51 = vld [vmem:[%s0 + $0x30] sm:$0xf]
  %v52 = vld [vmem:[%s0 + $0x34] sm:$0xf]
  %v53 = vld [vmem:[%s0 + $0x38] sm:$0xf]
  %v54 = vld [vmem:[%s0 + $0x3c] sm:$0xf]
  %v55 = vld [vmem:[%s0 + $0x40] sm:$0xf]
  %v56 = vld [vmem:[%s0 + $0x44] sm:$0xf]
  %v57 = vld [vmem:[%s0 + $0x48] sm:$0xf]
  %v58 = vld [vmem:[%s0 + $0x4c] sm:$0xf]
  %v59 = vld [vmem:[%s0 + $0x50] sm:$0xf]
  %v60 = vld [vmem:[%s0 + $0x54] sm:$0xf]
  %v61 = vld [vmem:[%s0 + $0x58] sm:$0xf]
  %v62 = vld [vmem:[%s0 + $0x5c] sm:$0xf]
  %v63 = vld [vmem:[%s0 + $0x60] sm:$0xf]
  %v64 = vld [vmem:[%s0 + $0x64] sm:$0xf]
  %v65 = vld [vmem:[%s1] sm:$0xff]
  %v66 = vld [vmem:[%s1 + $0x8] sm:$0xff]
  %v67 = vld [vmem:[%s1 + $0x10] sm:$0xf]
  %v68 = vld [vmem:[%s1 + $0x14] sm:$0xff]
  %v69 = vld [vmem:[%s1 + $0x1c] sm:$0xff]
  %v70 = vld [vmem:[%s1 + $0x24] sm:$0xf]
  %v71 = vld [vmem:[%s1 + $0x28] sm:$0xff]
  %v72 = vld [vmem:[%s1 + $0x30] sm:$0xff]
  %v73 = vld [vmem:[%s1 + $0x38] sm:$0xf]
  %v74 = vld [vmem:[%s1 + $0x3c] sm:$0xff]
  %v75 = vld [vmem:[%s1 + $0x44] sm:$0xff]
  %v76 = vld [vmem:[%s1 + $0x4c] sm:$0xf]
  %v77 = vld [vmem:[%s1 + $0x50] sm:$0xff]
  %v78 = vld [vmem:[%s1 + $0x58] sm:$0xff]
  %v79 = vld [vmem:[%s1 + $0x60] sm:$0xf]
  %v80 = vld [vmem:[%s1 + $0x64] sm:$0xff]
  %v81 = vld [vmem:[%s1 + $0x6c] sm:$0xff]
  %v82 = vld [vmem:[%s1 + $0x74] sm:$0xf]
  %v83 = vld [vmem:[%s1 + $0x78] sm:$0xff]
  %v84 = vld [vmem:[%s1 + $0x80] sm:$0xff]
  %v85 = vld [vmem:[%s1 + $0x88] sm:$0xf]
  %v86 = vld [vmem:[%s1 + $0x8c] sm:$0xff]
  %v87 = vld [vmem:[%s1 + $0x94] sm:$0xff]
  %v88 = vld [vmem:[%s1 + $0x9c] sm:$0xf]
  %v89 = vld [vmem:[%s1 + $0xa0] sm:$0xff]
  %v90 = vld [vmem:[%s1 + $0xa8] sm:$0xff]
  %v91 = vld [vmem:[%s1 + $0xb0] sm:$0xf]
  %v92 = vld [vmem:[%s1 + $0xb4] sm:$0xff]
  %v93 = vld [vmem:[%s1 + $0xbc] sm:$0xff]
  %v94 = vld [vmem:[%s1 + $0xc4] sm:$0xf]
  %v95 = vld [vmem:[%s1 + $0xc8] sm:$0x33]
  %v96 = vld [vmem:[%s1 + $0xd0] sm:$0x33]
  %v97 = vld [vmem:[%s1 + $0xd8] sm:$0x3]
  %v98 = vld [vmem:[%s2] sm:$0x1f]
  %v100 = vlaneseq
  %v101 = vshrl.u32 %v100, 7
  %v102 = vsub.s32 0, %v101
  %v103 = vrot.slane %v98, %v102
  %v104 = vlaneseq
  %v105 = vshrl.u32 %v104, 7
  %v106 = vsub.s32 1, %v105
  %v107 = vrot.slane %v98, %v106
  %v108 = vlaneseq
  %v109 = vshrl.u32 %v108, 7
  %v110 = vsub.s32 2, %v109
  %v111 = vrot.slane %v98, %v110
  %v112 = vlaneseq
  %v113 = vshrl.u32 %v112, 7
  %v114 = vsub.s32 3, %v113
  %v115 = vrot.slane %v98, %v114
  %v116 = vlaneseq
  %v117 = vshrl.u32 %v116, 7
  %v118 = vsub.s32 4, %v117
  %v119 = vrot.slane %v98, %v118
  %v151 = vunpack.c.l.b16 %v39
  %v152 = vunpack.c.l.b16 %v40
  %v153 = vunpack.c.l.b16 %v41
  %v154 = vunpack.c.l.b16 %v42
  %v155 = vunpack.c.l.b16 %v43
  %v156 = vunpack.c.l.b16 %v44
  %v157 = vunpack.c.l.b16 %v45
  %v158 = vunpack.c.l.b16 %v46
  %v159 = vunpack.c.l.b16 %v47
  %v160 = vunpack.c.l.b16 %v48
  %v161 = vunpack.c.l.b16 %v49
  %v162 = vunpack.c.l.b16 %v50
  %v163 = vunpack.c.l.b16 %v51
  %v164 = vunpack.c.l.b16 %v52
  %v165 = vunpack.c.l.b16 %v53
  %v166 = vunpack.c.l.b16 %v54
  %v167 = vunpack.c.l.b16 %v55
  %v168 = vunpack.c.l.b16 %v56
  %v169 = vunpack.c.l.b16 %v57
  %v170 = vunpack.c.l.b16 %v58
  %v171 = vunpack.c.l.b16 %v59
  %v172 = vunpack.c.l.b16 %v60
  %v173 = vunpack.c.l.b16 %v61
  %v174 = vunpack.c.l.b16 %v62
  %v175 = vunpack.c.l.b16 %v63
  %v176 = vunpack.c.l.b16 %v64
  %v177 = vpack.c.b16 %v152, %v151
  %v178 = vpack.c.b16 %v154, %v153
  %v179 = vpack.c.b16 %v156, %v155
  %v180 = vpack.c.b16 %v158, %v157
  %v181 = vpack.c.b16 %v160, %v159
  %v182 = vpack.c.b16 %v162, %v161
  %v183 = vpack.c.b16 %v164, %v163
  %v184 = vpack.c.b16 %v166, %v165
  %v185 = vpack.c.b16 %v168, %v167
  %v186 = vpack.c.b16 %v170, %v169
  %v187 = vpack.c.b16 %v172, %v171
  %v188 = vpack.c.b16 %v174, %v173
  %v189 = vpack.c.b16 %v176, %v175
  %v223 = vunpack.c.l.b16 %v65
  %v224 = vunpack.c.h.b16 %v65
  %v225 = vunpack.c.l.b16 %v66
  %v226 = vunpack.c.h.b16 %v66
  %v227 = vunpack.c.l.b16 %v67
  %v228 = vunpack.c.l.b16 %v68
  %v229 = vunpack.c.h.b16 %v68
  %v230 = vunpack.c.l.b16 %v69
  %v231 = vunpack.c.h.b16 %v69
  %v232 = vunpack.c.l.b16 %v70
  %v233 = vunpack.c.l.b16 %v71
  %v234 = vunpack.c.h.b16 %v71
  %v235 = vunpack.c.l.b16 %v72
  %v236 = vunpack.c.h.b16 %v72
  %v237 = vunpack.c.l.b16 %v73
  %v238 = vunpack.c.l.b16 %v74
  %v239 = vunpack.c.h.b16 %v74
  %v240 = vunpack.c.l.b16 %v75
  %v241 = vunpack.c.h.b16 %v75
  %v242 = vunpack.c.l.b16 %v76
  %v243 = vunpack.c.l.b16 %v77
  %v244 = vunpack.c.h.b16 %v77
  %v245 = vunpack.c.l.b16 %v78
  %v246 = vunpack.c.h.b16 %v78
  %v247 = vunpack.c.l.b16 %v79
  %v248 = vunpack.c.l.b16 %v80
  %v249 = vunpack.c.h.b16 %v80
  %v250 = vunpack.c.l.b16 %v81
  %v251 = vunpack.c.h.b16 %v81
  %v252 = vunpack.c.l.b16 %v82
  %v253 = vunpack.c.l.b16 %v83
  %v254 = vunpack.c.h.b16 %v83
  %v255 = vunpack.c.l.b16 %v84
  %v256 = vunpack.c.h.b16 %v84
  %v257 = vunpack.c.l.b16 %v85
  %v258 = vunpack.c.l.b16 %v86
  %v259 = vunpack.c.h.b16 %v86
  %v260 = vunpack.c.l.b16 %v87
  %v261 = vunpack.c.h.b16 %v87
  %v262 = vunpack.c.l.b16 %v88
  %v263 = vunpack.c.l.b16 %v89
  %v264 = vunpack.c.h.b16 %v89
  %v265 = vunpack.c.l.b16 %v90
  %v266 = vunpack.c.h.b16 %v90
  %v267 = vunpack.c.l.b16 %v91
  %v268 = vunpack.c.l.b16 %v92
  %v269 = vunpack.c.h.b16 %v92
  %v270 = vunpack.c.l.b16 %v93
  %v271 = vunpack.c.h.b16 %v93
  %v272 = vunpack.c.l.b16 %v94
  %v273 = vunpack.c.l.b16 %v95
  %v274 = vunpack.c.h.b16 %v95
  %v275 = vunpack.c.l.b16 %v96
  %v276 = vunpack.c.h.b16 %v96
  %v277 = vunpack.c.l.b16 %v97
  %v278 = vpack.c.b16 %v228, %v223
  %v279 = vpack.c.b16 %v229, %v224
  %v280 = vpack.c.b16 %v230, %v225
  %v281 = vpack.c.b16 %v231, %v226
  %v282 = vpack.c.b16 %v232, %v227
  %v283 = vpack.c.b16 %v238, %v233
  %v284 = vpack.c.b16 %v239, %v234
  %v285 = vpack.c.b16 %v240, %v235
  %v286 = vpack.c.b16 %v241, %v236
  %v287 = vpack.c.b16 %v242, %v237
  %v288 = vpack.c.b16 %v248, %v243
  %v289 = vpack.c.b16 %v249, %v244
  %v290 = vpack.c.b16 %v250, %v245
  %v291 = vpack.c.b16 %v251, %v246
  %v292 = vpack.c.b16 %v252, %v247
  %v293 = vpack.c.b16 %v258, %v253
  %v294 = vpack.c.b16 %v259, %v254
  %v295 = vpack.c.b16 %v260, %v255
  %v296 = vpack.c.b16 %v261, %v256
  %v297 = vpack.c.b16 %v262, %v257
  %v298 = vpack.c.b16 %v268, %v263
  %v299 = vpack.c.b16 %v269, %v264
  %v300 = vpack.c.b16 %v270, %v265
  %v301 = vpack.c.b16 %v271, %v266
  %v302 = vpack.c.b16 %v272, %v267
  %v303 = vpack.c.b16 %v273, %v273
  %v304 = vpack.c.b16 %v274, %v274
  %v305 = vpack.c.b16 %v275, %v275
  %v306 = vpack.c.b16 %v276, %v276
  %v307 = vpack.c.b16 %v277, %v277
  %vm333 = vcmask 687104
  %v335 = vsel %vm333, %v177, 0
  %v338 = vsel %vm333, %v178, 0
  %v341 = vsel %vm333, %v179, 0
  %v344 = vsel %vm333, %v180, 0
  %v347 = vsel %vm333, %v181, 0
  %v350 = vsel %vm333, %v182, 0
  %v353 = vsel %vm333, %v183, 0
  %v356 = vsel %vm333, %v184, 0
  %v359 = vsel %vm333, %v185, 0
  %v362 = vsel %vm333, %v186, 0
  %v365 = vsel %vm333, %v187, 0
  %v368 = vsel %vm333, %v188, 0
  %v371 = vsel %vm333, %v189, 0
  %vm373 = vcmask 1041408
  %v375 = vsel %vm373, %v303, 0
  %v378 = vsel %vm373, %v304, 0
  %v381 = vsel %vm373, %v305, 0
  %v384 = vsel %vm373, %v306, 0
  %v387 = vsel %vm373, %v307, 0
  %389 = vmatprep.subr.bf16.mxu0 0
  %390 = vmatpush1.bf16.msra.mxu0 0
  %391 = vmatprep.subr.bf16.mxu0 0
  %392 = vmatpush1.bf16.msra.mxu0 0
  %393 = vmatprep.subr.bf16.mxu0 %v378
  %394 = vmatpush1.bf16.msra.mxu0 %v375
  %395 = vmatprep.subr.bf16.mxu0 %v299
  %396 = vmatpush1.bf16.msra.mxu0 %v298
  %397 = vmatprep.subr.bf16.mxu0 %v294
  %398 = vmatpush1.bf16.msra.mxu0 %v293
  %399 = vmatprep.subr.bf16.mxu0 %v289
  %400 = vmatpush1.bf16.msra.mxu0 %v288
  %401 = vmatprep.subr.bf16.mxu0 %v284
  %402 = vmatpush1.bf16.msra.mxu0 %v283
  %403 = vmatprep.subr.bf16.mxu0 %v279
  %404 = vmatpush1.bf16.msra.mxu0 %v278
  %405 = vmatprep.subr.bf16.mxu0 0
  %406 = vmatpush2.bf16.msra.mxu0 0
  %407 = vmatprep.subr.bf16.mxu0 0
  %408 = vmatpush2.bf16.msra.mxu0 0
  %409 = vmatprep.subr.bf16.mxu0 0
  %410 = vmatpush2.bf16.msra.mxu0 0
  %411 = vmatprep.subr.bf16.mxu0 0
  %412 = vmatpush2.bf16.msra.mxu0 0
  %413 = vmatprep.subr.bf16.mxu0 0
  %414 = vmatpush2.bf16.msra.mxu0 0
  %415 = vmatprep.subr.bf16.mxu0 0
  %416 = vmatpush2.bf16.msra.mxu0 0
  %417 = vmatprep.subr.bf16.mxu0 0
  %418 = vmatpush2.bf16.msra.mxu0 0
  %419 = vmatprep.subr.bf16.mxu0 0
  %420 = vmatpush2.bf16.msra.mxu0 0
  %421 = vmatprep.mubr.bf16.mxu0 0
  %422 = vmatmul.mubr.bf16.gmra.mxu0 %v335
  %v423 = vpop.f32.mrf.mxu0
  %v424 = vadd.f32 %v103, %v423
  %v425 = vpop.f32.mrf.mxu0
  %v426 = vadd.f32 %v107, %v425
  %v427 = vpop.f32.mrf.mxu0
  %v428 = vadd.f32 %v103, %v427
  %v429 = vpop.f32.mrf.mxu0
  %v430 = vadd.f32 %v107, %v429
  %431 = vmatprep.mubr.bf16.mxu0 0
  %432 = vmatmul.mubr.bf16.gmra.mxu0 %v338
  %v433 = vpop.f32.mrf.mxu0
  %v434 = vadd.f32 %v103, %v433
  %v435 = vpop.f32.mrf.mxu0
  %v436 = vadd.f32 %v107, %v435
  %v437 = vpop.f32.mrf.mxu0
  %v438 = vadd.f32 %v103, %v437
  %v439 = vpop.f32.mrf.mxu0
  %v440 = vadd.f32 %v107, %v439
  %441 = vmatprep.mubr.bf16.mxu0 0
  %442 = vmatmul.mubr.bf16.gmra.mxu0 %v341
  %v443 = vpop.f32.mrf.mxu0
  %v444 = vadd.f32 %v103, %v443
  %v445 = vpop.f32.mrf.mxu0
  %v446 = vadd.f32 %v107, %v445
  %v447 = vpop.f32.mrf.mxu0
  %v448 = vadd.f32 %v103, %v447
  %v449 = vpop.f32.mrf.mxu0
  %v450 = vadd.f32 %v107, %v449
  %451 = vmatprep.mubr.bf16.mxu0 0
  %452 = vmatmul.mubr.bf16.gmra.mxu0 %v344
  %v453 = vpop.f32.mrf.mxu0
  %v454 = vadd.f32 %v103, %v453
  %v455 = vpop.f32.mrf.mxu0
  %v456 = vadd.f32 %v107, %v455
  %v457 = vpop.f32.mrf.mxu0
  %v458 = vadd.f32 %v103, %v457
  %v459 = vpop.f32.mrf.mxu0
  %v460 = vadd.f32 %v107, %v459
  %461 = vmatprep.mubr.bf16.mxu0 0
  %462 = vmatmul.mubr.bf16.gmra.mxu0 %v347
  %v463 = vpop.f32.mrf.mxu0
  %v464 = vadd.f32 %v103, %v463
  %v465 = vpop.f32.mrf.mxu0
  %v466 = vadd.f32 %v107, %v465
  %v467 = vpop.f32.mrf.mxu0
  %v468 = vadd.f32 %v103, %v467
  %v469 = vpop.f32.mrf.mxu0
  %v470 = vadd.f32 %v107, %v469
  %471 = vmatprep.mubr.bf16.mxu0 0
  %472 = vmatmul.mubr.bf16.gmra.mxu0 %v350
  %v473 = vpop.f32.mrf.mxu0
  %v474 = vadd.f32 %v103, %v473
  %v475 = vpop.f32.mrf.mxu0
  %v476 = vadd.f32 %v107, %v475
  %v477 = vpop.f32.mrf.mxu0
  %v478 = vadd.f32 %v103, %v477
  %v479 = vpop.f32.mrf.mxu0
  %v480 = vadd.f32 %v107, %v479
  %481 = vmatprep.mubr.bf16.mxu0 0
  %482 = vmatmul.mubr.bf16.gmra.mxu0 %v353
  %v483 = vpop.f32.mrf.mxu0
  %v484 = vadd.f32 %v103, %v483
  %v485 = vpop.f32.mrf.mxu0
  %v486 = vadd.f32 %v107, %v485
  %v487 = vpop.f32.mrf.mxu0
  %v488 = vadd.f32 %v103, %v487
  %v489 = vpop.f32.mrf.mxu0
  %v490 = vadd.f32 %v107, %v489
  %491 = vmatprep.mubr.bf16.mxu0 0
  %492 = vmatmul.mubr.bf16.gmra.mxu0 %v356
  %v493 = vpop.f32.mrf.mxu0
  %v494 = vadd.f32 %v103, %v493
  %v495 = vpop.f32.mrf.mxu0
  %v496 = vadd.f32 %v107, %v495
  %v497 = vpop.f32.mrf.mxu0
  %v498 = vadd.f32 %v103, %v497
  %v499 = vpop.f32.mrf.mxu0
  %v500 = vadd.f32 %v107, %v499
  %501 = vmatprep.mubr.bf16.mxu0 0
  %502 = vmatmul.mubr.bf16.gmra.mxu0 %v359
  %v503 = vpop.f32.mrf.mxu0
  %v504 = vadd.f32 %v103, %v503
  %v505 = vpop.f32.mrf.mxu0
  %v506 = vadd.f32 %v107, %v505
  %v507 = vpop.f32.mrf.mxu0
  %v508 = vadd.f32 %v103, %v507
  %v509 = vpop.f32.mrf.mxu0
  %v510 = vadd.f32 %v107, %v509
  %511 = vmatprep.mubr.bf16.mxu0 0
  %512 = vmatmul.mubr.bf16.gmra.mxu0 %v362
  %v513 = vpop.f32.mrf.mxu0
  %v514 = vadd.f32 %v103, %v513
  %v515 = vpop.f32.mrf.mxu0
  %v516 = vadd.f32 %v107, %v515
  %v517 = vpop.f32.mrf.mxu0
  %v518 = vadd.f32 %v103, %v517
  %v519 = vpop.f32.mrf.mxu0
  %v520 = vadd.f32 %v107, %v519
  %521 = vmatprep.mubr.bf16.mxu0 0
  %522 = vmatmul.mubr.bf16.gmra.mxu0 %v365
  %v523 = vpop.f32.mrf.mxu0
  %v524 = vadd.f32 %v103, %v523
  %v525 = vpop.f32.mrf.mxu0
  %v526 = vadd.f32 %v107, %v525
  %v527 = vpop.f32.mrf.mxu0
  %v528 = vadd.f32 %v103, %v527
  %v529 = vpop.f32.mrf.mxu0
  %v530 = vadd.f32 %v107, %v529
  %531 = vmatprep.mubr.bf16.mxu0 0
  %532 = vmatmul.mubr.bf16.gmra.mxu0 %v368
  %v533 = vpop.f32.mrf.mxu0
  %v534 = vadd.f32 %v103, %v533
  %v535 = vpop.f32.mrf.mxu0
  %v536 = vadd.f32 %v107, %v535
  %v537 = vpop.f32.mrf.mxu0
  %v538 = vadd.f32 %v103, %v537
  %v539 = vpop.f32.mrf.mxu0
  %v540 = vadd.f32 %v107, %v539
  %541 = vmatprep.mubr.bf16.mxu0 0
  %542 = vmatmul.mubr.bf16.gmra.mxu0 %v371
  %v543 = vpop.f32.mrf.mxu0
  %v544 = vadd.f32 %v103, %v543
  %v545 = vpop.f32.mrf.mxu0
  %v546 = vadd.f32 %v107, %v545
  %v547 = vpop.f32.mrf.mxu0
  %v548 = vadd.f32 %v103, %v547
  %v549 = vpop.f32.mrf.mxu0
  %v550 = vadd.f32 %v107, %v549
  %551 = vdwg.mxu0
  %552 = vmatprep.subr.bf16.mxu0 0
  %553 = vmatpush1.bf16.msra.mxu0 0
  %554 = vmatprep.subr.bf16.mxu0 0
  %555 = vmatpush1.bf16.msra.mxu0 0
  %556 = vmatprep.subr.bf16.mxu0 %v384
  %557 = vmatpush1.bf16.msra.mxu0 %v381
  %558 = vmatprep.subr.bf16.mxu0 %v301
  %559 = vmatpush1.bf16.msra.mxu0 %v300
  %560 = vmatprep.subr.bf16.mxu0 %v296
  %561 = vmatpush1.bf16.msra.mxu0 %v295
  %562 = vmatprep.subr.bf16.mxu0 %v291
  %563 = vmatpush1.bf16.msra.mxu0 %v290
  %564 = vmatprep.subr.bf16.mxu0 %v286
  %565 = vmatpush1.bf16.msra.mxu0 %v285
  %566 = vmatprep.subr.bf16.mxu0 %v281
  %567 = vmatpush1.bf16.msra.mxu0 %v280
  %568 = vmatprep.subr.bf16.mxu0 0
  %569 = vmatpush2.bf16.msra.mxu0 0
  %570 = vmatprep.subr.bf16.mxu0 0
  %571 = vmatpush2.bf16.msra.mxu0 0
  %572 = vmatprep.subr.bf16.mxu0 0
  %573 = vmatpush2.bf16.msra.mxu0 0
  %574 = vmatprep.subr.bf16.mxu0 0
  %575 = vmatpush2.bf16.msra.mxu0 0
  %576 = vmatprep.subr.bf16.mxu0 0
  %577 = vmatpush2.bf16.msra.mxu0 0
  %578 = vmatprep.subr.bf16.mxu0 0
  %579 = vmatpush2.bf16.msra.mxu0 0
  %580 = vmatprep.subr.bf16.mxu0 0
  %581 = vmatpush2.bf16.msra.mxu0 0
  %582 = vmatprep.subr.bf16.mxu0 0
  %583 = vmatpush2.bf16.msra.mxu0 0
  %584 = vmatprep.mubr.bf16.mxu0 0
  %585 = vmatmul.mubr.bf16.gmra.mxu0 %v335
  %v586 = vpop.f32.mrf.mxu0
  %v587 = vadd.f32 %v111, %v586
  %v588 = vpop.f32.mrf.mxu0
  %v589 = vadd.f32 %v115, %v588
  %v590 = vpop.f32.mrf.mxu0
  %v591 = vadd.f32 %v111, %v590
  %v592 = vpop.f32.mrf.mxu0
  %v593 = vadd.f32 %v115, %v592
  %594 = vmatprep.mubr.bf16.mxu0 0
  %595 = vmatmul.mubr.bf16.gmra.mxu0 %v338
  %v596 = vpop.f32.mrf.mxu0
  %v597 = vadd.f32 %v111, %v596
  %v598 = vpop.f32.mrf.mxu0
  %v599 = vadd.f32 %v115, %v598
  %v600 = vpop.f32.mrf.mxu0
  %v601 = vadd.f32 %v111, %v600
  %v602 = vpop.f32.mrf.mxu0
  %v603 = vadd.f32 %v115, %v602
  %604 = vmatprep.mubr.bf16.mxu0 0
  %605 = vmatmul.mubr.bf16.gmra.mxu0 %v341
  %v606 = vpop.f32.mrf.mxu0
  %v607 = vadd.f32 %v111, %v606
  %v608 = vpop.f32.mrf.mxu0
  %v609 = vadd.f32 %v115, %v608
  %v610 = vpop.f32.mrf.mxu0
  %v611 = vadd.f32 %v111, %v610
  %v612 = vpop.f32.mrf.mxu0
  %v613 = vadd.f32 %v115, %v612
  %614 = vmatprep.mubr.bf16.mxu0 0
  %615 = vmatmul.mubr.bf16.gmra.mxu0 %v344
  %v616 = vpop.f32.mrf.mxu0
  %v617 = vadd.f32 %v111, %v616
  %v618 = vpop.f32.mrf.mxu0
  %v619 = vadd.f32 %v115, %v618
  %v620 = vpop.f32.mrf.mxu0
  %v621 = vadd.f32 %v111, %v620
  %v622 = vpop.f32.mrf.mxu0
  %v623 = vadd.f32 %v115, %v622
  %624 = vmatprep.mubr.bf16.mxu0 0
  %625 = vmatmul.mubr.bf16.gmra.mxu0 %v347
  %v626 = vpop.f32.mrf.mxu0
  %v627 = vadd.f32 %v111, %v626
  %v628 = vpop.f32.mrf.mxu0
  %v629 = vadd.f32 %v115, %v628
  %v630 = vpop.f32.mrf.mxu0
  %v631 = vadd.f32 %v111, %v630
  %v632 = vpop.f32.mrf.mxu0
  %v633 = vadd.f32 %v115, %v632
  %634 = vmatprep.mubr.bf16.mxu0 0
  %635 = vmatmul.mubr.bf16.gmra.mxu0 %v350
  %v636 = vpop.f32.mrf.mxu0
  %v637 = vadd.f32 %v111, %v636
  %v638 = vpop.f32.mrf.mxu0
  %v639 = vadd.f32 %v115, %v638
  %v640 = vpop.f32.mrf.mxu0
  %v641 = vadd.f32 %v111, %v640
  %v642 = vpop.f32.mrf.mxu0
  %v643 = vadd.f32 %v115, %v642
  %644 = vmatprep.mubr.bf16.mxu0 0
  %645 = vmatmul.mubr.bf16.gmra.mxu0 %v353
  %v646 = vpop.f32.mrf.mxu0
  %v647 = vadd.f32 %v111, %v646
  %v648 = vpop.f32.mrf.mxu0
  %v649 = vadd.f32 %v115, %v648
  %v650 = vpop.f32.mrf.mxu0
  %v651 = vadd.f32 %v111, %v650
  %v652 = vpop.f32.mrf.mxu0
  %v653 = vadd.f32 %v115, %v652
  %654 = vmatprep.mubr.bf16.mxu0 0
  %655 = vmatmul.mubr.bf16.gmra.mxu0 %v356
  %v656 = vpop.f32.mrf.mxu0
  %v657 = vadd.f32 %v111, %v656
  %v658 = vpop.f32.mrf.mxu0
  %v659 = vadd.f32 %v115, %v658
  %v660 = vpop.f32.mrf.mxu0
  %v661 = vadd.f32 %v111, %v660
  %v662 = vpop.f32.mrf.mxu0
  %v663 = vadd.f32 %v115, %v662
  %664 = vmatprep.mubr.bf16.mxu0 0
  %665 = vmatmul.mubr.bf16.gmra.mxu0 %v359
  %v666 = vpop.f32.mrf.mxu0
  %v667 = vadd.f32 %v111, %v666
  %v668 = vpop.f32.mrf.mxu0
  %v669 = vadd.f32 %v115, %v668
  %v670 = vpop.f32.mrf.mxu0
  %v671 = vadd.f32 %v111, %v670
  %v672 = vpop.f32.mrf.mxu0
  %v673 = vadd.f32 %v115, %v672
  %674 = vmatprep.mubr.bf16.mxu0 0
  %675 = vmatmul.mubr.bf16.gmra.mxu0 %v362
  %v676 = vpop.f32.mrf.mxu0
  %v677 = vadd.f32 %v111, %v676
  %v678 = vpop.f32.mrf.mxu0
  %v679 = vadd.f32 %v115, %v678
  %v680 = vpop.f32.mrf.mxu0
  %v681 = vadd.f32 %v111, %v680
  %v682 = vpop.f32.mrf.mxu0
  %v683 = vadd.f32 %v115, %v682
  %684 = vmatprep.mubr.bf16.mxu0 0
  %685 = vmatmul.mubr.bf16.gmra.mxu0 %v365
  %v686 = vpop.f32.mrf.mxu0
  %v687 = vadd.f32 %v111, %v686
  %v688 = vpop.f32.mrf.mxu0
  %v689 = vadd.f32 %v115, %v688
  %v690 = vpop.f32.mrf.mxu0
  %v691 = vadd.f32 %v111, %v690
  %v692 = vpop.f32.mrf.mxu0
  %v693 = vadd.f32 %v115, %v692
  %694 = vmatprep.mubr.bf16.mxu0 0
  %695 = vmatmul.mubr.bf16.gmra.mxu0 %v368
  %v696 = vpop.f32.mrf.mxu0
  %v697 = vadd.f32 %v111, %v696
  %v698 = vpop.f32.mrf.mxu0
  %v699 = vadd.f32 %v115, %v698
  %v700 = vpop.f32.mrf.mxu0
  %v701 = vadd.f32 %v111, %v700
  %v702 = vpop.f32.mrf.mxu0
  %v703 = vadd.f32 %v115, %v702
  %704 = vmatprep.mubr.bf16.mxu0 0
  %705 = vmatmul.mubr.bf16.gmra.mxu0 %v371
  %v706 = vpop.f32.mrf.mxu0
  %v707 = vadd.f32 %v111, %v706
  %v708 = vpop.f32.mrf.mxu0
  %v709 = vadd.f32 %v115, %v708
  %v710 = vpop.f32.mrf.mxu0
  %v711 = vadd.f32 %v111, %v710
  %v712 = vpop.f32.mrf.mxu0
  %v713 = vadd.f32 %v115, %v712
  %714 = vdwg.mxu0
  %715 = vmatprep.subr.bf16.mxu0 0
  %716 = vmatpush1.bf16.msra.mxu0 0
  %717 = vmatprep.subr.bf16.mxu0 0
  %718 = vmatpush1.bf16.msra.mxu0 0
  %719 = vmatprep.subr.bf16.mxu0 0
  %720 = vmatpush1.bf16.msra.mxu0 %v387
  %721 = vmatprep.subr.bf16.mxu0 0
  %722 = vmatpush1.bf16.msra.mxu0 %v302
  %723 = vmatprep.subr.bf16.mxu0 0
  %724 = vmatpush1.bf16.msra.mxu0 %v297
  %725 = vmatprep.subr.bf16.mxu0 0
  %726 = vmatpush1.bf16.msra.mxu0 %v292
  %727 = vmatprep.subr.bf16.mxu0 0
  %728 = vmatpush1.bf16.msra.mxu0 %v287
  %729 = vmatprep.subr.bf16.mxu0 0
  %730 = vmatpush1.bf16.msra.mxu0 %v282
  %731 = vmatprep.subr.bf16.mxu0 0
  %732 = vmatpush2.bf16.msra.mxu0 0
  %733 = vmatprep.subr.bf16.mxu0 0
  %734 = vmatpush2.bf16.msra.mxu0 0
  %735 = vmatprep.subr.bf16.mxu0 0
  %736 = vmatpush2.bf16.msra.mxu0 0
  %737 = vmatprep.subr.bf16.mxu0 0
  %738 = vmatpush2.bf16.msra.mxu0 0
  %739 = vmatprep.subr.bf16.mxu0 0
  %740 = vmatpush2.bf16.msra.mxu0 0
  %741 = vmatprep.subr.bf16.mxu0 0
  %742 = vmatpush2.bf16.msra.mxu0 0
  %743 = vmatprep.subr.bf16.mxu0 0
  %744 = vmatpush2.bf16.msra.mxu0 0
  %745 = vmatprep.subr.bf16.mxu0 0
  %746 = vmatpush2.bf16.msra.mxu0 0
  %747 = vmatprep.mubr.bf16.mxu0 0
  %748 = vmatmul.mubr.bf16.gmra.mxu0 %v335
  %v749 = vpop.f32.mrf.mxu0
  %v750 = vadd.f32 %v119, %v749
  %v751 = vpop.f32.mrf.mxu0
  %v752 = vpop.f32.mrf.mxu0
  %v753 = vadd.f32 %v119, %v752
  %v754 = vpop.f32.mrf.mxu0
  %755 = vmatprep.mubr.bf16.mxu0 0
  %756 = vmatmul.mubr.bf16.gmra.mxu0 %v338
  %v757 = vpop.f32.mrf.mxu0
  %v758 = vadd.f32 %v119, %v757
  %v759 = vpop.f32.mrf.mxu0
  %v760 = vpop.f32.mrf.mxu0
  %v761 = vadd.f32 %v119, %v760
  %v762 = vpop.f32.mrf.mxu0
  %763 = vmatprep.mubr.bf16.mxu0 0
  %764 = vmatmul.mubr.bf16.gmra.mxu0 %v341
  %v765 = vpop.f32.mrf.mxu0
  %v766 = vadd.f32 %v119, %v765
  %v767 = vpop.f32.mrf.mxu0
  %v768 = vpop.f32.mrf.mxu0
  %v769 = vadd.f32 %v119, %v768
  %v770 = vpop.f32.mrf.mxu0
  %771 = vmatprep.mubr.bf16.mxu0 0
  %772 = vmatmul.mubr.bf16.gmra.mxu0 %v344
  %v773 = vpop.f32.mrf.mxu0
  %v774 = vadd.f32 %v119, %v773
  %v775 = vpop.f32.mrf.mxu0
  %v776 = vpop.f32.mrf.mxu0
  %v777 = vadd.f32 %v119, %v776
  %v778 = vpop.f32.mrf.mxu0
  %779 = vmatprep.mubr.bf16.mxu0 0
  %780 = vmatmul.mubr.bf16.gmra.mxu0 %v347
  %v781 = vpop.f32.mrf.mxu0
  %v782 = vadd.f32 %v119, %v781
  %v783 = vpop.f32.mrf.mxu0
  %v784 = vpop.f32.mrf.mxu0
  %v785 = vadd.f32 %v119, %v784
  %v786 = vpop.f32.mrf.mxu0
  %787 = vmatprep.mubr.bf16.mxu0 0
  %788 = vmatmul.mubr.bf16.gmra.mxu0 %v350
  %v789 = vpop.f32.mrf.mxu0
  %v790 = vadd.f32 %v119, %v789
  %v791 = vpop.f32.mrf.mxu0
  %v792 = vpop.f32.mrf.mxu0
  %v793 = vadd.f32 %v119, %v792
  %v794 = vpop.f32.mrf.mxu0
  %795 = vmatprep.mubr.bf16.mxu0 0
  %796 = vmatmul.mubr.bf16.gmra.mxu0 %v353
  %v797 = vpop.f32.mrf.mxu0
  %v798 = vadd.f32 %v119, %v797
  %v799 = vpop.f32.mrf.mxu0
  %v800 = vpop.f32.mrf.mxu0
  %v801 = vadd.f32 %v119, %v800
  %v802 = vpop.f32.mrf.mxu0
  %803 = vmatprep.mubr.bf16.mxu0 0
  %804 = vmatmul.mubr.bf16.gmra.mxu0 %v356
  %v805 = vpop.f32.mrf.mxu0
  %v806 = vadd.f32 %v119, %v805
  %v807 = vpop.f32.mrf.mxu0
  %v808 = vpop.f32.mrf.mxu0
  %v809 = vadd.f32 %v119, %v808
  %v810 = vpop.f32.mrf.mxu0
  %811 = vmatprep.mubr.bf16.mxu0 0
  %812 = vmatmul.mubr.bf16.gmra.mxu0 %v359
  %v813 = vpop.f32.mrf.mxu0
  %v814 = vadd.f32 %v119, %v813
  %v815 = vpop.f32.mrf.mxu0
  %v816 = vpop.f32.mrf.mxu0
  %v817 = vadd.f32 %v119, %v816
  %v818 = vpop.f32.mrf.mxu0
  %819 = vmatprep.mubr.bf16.mxu0 0
  %820 = vmatmul.mubr.bf16.gmra.mxu0 %v362
  %v821 = vpop.f32.mrf.mxu0
  %v822 = vadd.f32 %v119, %v821
  %v823 = vpop.f32.mrf.mxu0
  %v824 = vpop.f32.mrf.mxu0
  %v825 = vadd.f32 %v119, %v824
  %v826 = vpop.f32.mrf.mxu0
  %827 = vmatprep.mubr.bf16.mxu0 0
  %828 = vmatmul.mubr.bf16.gmra.mxu0 %v365
  %v829 = vpop.f32.mrf.mxu0
  %v830 = vadd.f32 %v119, %v829
  %v831 = vpop.f32.mrf.mxu0
  %v832 = vpop.f32.mrf.mxu0
  %v833 = vadd.f32 %v119, %v832
  %v834 = vpop.f32.mrf.mxu0
  %835 = vmatprep.mubr.bf16.mxu0 0
  %836 = vmatmul.mubr.bf16.gmra.mxu0 %v368
  %v837 = vpop.f32.mrf.mxu0
  %v838 = vadd.f32 %v119, %v837
  %v839 = vpop.f32.mrf.mxu0
  %v840 = vpop.f32.mrf.mxu0
  %v841 = vadd.f32 %v119, %v840
  %v842 = vpop.f32.mrf.mxu0
  %843 = vmatprep.mubr.bf16.mxu0 0
  %844 = vmatmul.mubr.bf16.gmra.mxu0 %v371
  %v845 = vpop.f32.mrf.mxu0
  %v846 = vadd.f32 %v119, %v845
  %v847 = vpop.f32.mrf.mxu0
  %v848 = vpop.f32.mrf.mxu0
  %v849 = vadd.f32 %v119, %v848
  %v850 = vpop.f32.mrf.mxu0
  %851 = vdwg.mxu0
  %v852 = vmax.f32 %v424, 0.0
  %v853 = vmax.f32 %v426, 0.0
  %v854 = vmax.f32 %v587, 0.0
  %v855 = vmax.f32 %v589, 0.0
  %v856 = vmax.f32 %v750, 0.0
  %v857 = vmax.f32 %v428, 0.0
  %v858 = vmax.f32 %v430, 0.0
  %v859 = vmax.f32 %v591, 0.0
  %v860 = vmax.f32 %v593, 0.0
  %v861 = vmax.f32 %v753, 0.0
  %v862 = vmax.f32 %v434, 0.0
  %v863 = vmax.f32 %v436, 0.0
  %v864 = vmax.f32 %v597, 0.0
  %v865 = vmax.f32 %v599, 0.0
  %v866 = vmax.f32 %v758, 0.0
  %v867 = vmax.f32 %v438, 0.0
  %v868 = vmax.f32 %v440, 0.0
  %v869 = vmax.f32 %v601, 0.0
  %v870 = vmax.f32 %v603, 0.0
  %v871 = vmax.f32 %v761, 0.0
  %v872 = vmax.f32 %v444, 0.0
  %v873 = vmax.f32 %v446, 0.0
  %v874 = vmax.f32 %v607, 0.0
  %v875 = vmax.f32 %v609, 0.0
  %v876 = vmax.f32 %v766, 0.0
  %v877 = vmax.f32 %v448, 0.0
  %v878 = vmax.f32 %v450, 0.0
  %v879 = vmax.f32 %v611, 0.0
  %v880 = vmax.f32 %v613, 0.0
  %v881 = vmax.f32 %v769, 0.0
  %v882 = vmax.f32 %v454, 0.0
  %v883 = vmax.f32 %v456, 0.0
  %v884 = vmax.f32 %v617, 0.0
  %v885 = vmax.f32 %v619, 0.0
  %v886 = vmax.f32 %v774, 0.0
  %v887 = vmax.f32 %v458, 0.0
  %v888 = vmax.f32 %v460, 0.0
  %v889 = vmax.f32 %v621, 0.0
  %v890 = vmax.f32 %v623, 0.0
  %v891 = vmax.f32 %v777, 0.0
  %v892 = vmax.f32 %v464, 0.0
  %v893 = vmax.f32 %v466, 0.0
  %v894 = vmax.f32 %v627, 0.0
  %v895 = vmax.f32 %v629, 0.0
  %v896 = vmax.f32 %v782, 0.0
  %v897 = vmax.f32 %v468, 0.0
  %v898 = vmax.f32 %v470, 0.0
  %v899 = vmax.f32 %v631, 0.0
  %v900 = vmax.f32 %v633, 0.0
  %v901 = vmax.f32 %v785, 0.0
  %v902 = vmax.f32 %v474, 0.0
  %v903 = vmax.f32 %v476, 0.0
  %v904 = vmax.f32 %v637, 0.0
  %v905 = vmax.f32 %v639, 0.0
  %v906 = vmax.f32 %v790, 0.0
  %v907 = vmax.f32 %v478, 0.0
  %v908 = vmax.f32 %v480, 0.0
  %v909 = vmax.f32 %v641, 0.0
  %v910 = vmax.f32 %v643, 0.0
  %v911 = vmax.f32 %v793, 0.0
  %v912 = vmax.f32 %v484, 0.0
  %v913 = vmax.f32 %v486, 0.0
  %v914 = vmax.f32 %v647, 0.0
  %v915 = vmax.f32 %v649, 0.0
  %v916 = vmax.f32 %v798, 0.0
  %v917 = vmax.f32 %v488, 0.0
  %v918 = vmax.f32 %v490, 0.0
  %v919 = vmax.f32 %v651, 0.0
  %v920 = vmax.f32 %v653, 0.0
  %v921 = vmax.f32 %v801, 0.0
  %v922 = vmax.f32 %v494, 0.0
  %v923 = vmax.f32 %v496, 0.0
  %v924 = vmax.f32 %v657, 0.0
  %v925 = vmax.f32 %v659, 0.0
  %v926 = vmax.f32 %v806, 0.0
  %v927 = vmax.f32 %v498, 0.0
  %v928 = vmax.f32 %v500, 0.0
  %v929 = vmax.f32 %v661, 0.0
  %v930 = vmax.f32 %v663, 0.0
  %v931 = vmax.f32 %v809, 0.0
  %v932 = vmax.f32 %v504, 0.0
  %v933 = vmax.f32 %v506, 0.0
  %v934 = vmax.f32 %v667, 0.0
  %v935 = vmax.f32 %v669, 0.0
  %v936 = vmax.f32 %v814, 0.0
  %v937 = vmax.f32 %v508, 0.0
  %v938 = vmax.f32 %v510, 0.0
  %v939 = vmax.f32 %v671, 0.0
  %v940 = vmax.f32 %v673, 0.0
  %v941 = vmax.f32 %v817, 0.0
  %v942 = vmax.f32 %v514, 0.0
  %v943 = vmax.f32 %v516, 0.0
  %v944 = vmax.f32 %v677, 0.0
  %v945 = vmax.f32 %v679, 0.0
  %v946 = vmax.f32 %v822, 0.0
  %v947 = vmax.f32 %v518, 0.0
  %v948 = vmax.f32 %v520, 0.0
  %v949 = vmax.f32 %v681, 0.0
  %v950 = vmax.f32 %v683, 0.0
  %v951 = vmax.f32 %v825, 0.0
  %v952 = vmax.f32 %v524, 0.0
  %v953 = vmax.f32 %v526, 0.0
  %v954 = vmax.f32 %v687, 0.0
  %v955 = vmax.f32 %v689, 0.0
  %v956 = vmax.f32 %v830, 0.0
  %v957 = vmax.f32 %v528, 0.0
  %v958 = vmax.f32 %v530, 0.0
  %v959 = vmax.f32 %v691, 0.0
  %v960 = vmax.f32 %v693, 0.0
  %v961 = vmax.f32 %v833, 0.0
  %v962 = vmax.f32 %v534, 0.0
  %v963 = vmax.f32 %v536, 0.0
  %v964 = vmax.f32 %v697, 0.0
  %v965 = vmax.f32 %v699, 0.0
  %v966 = vmax.f32 %v838, 0.0
  %v967 = vmax.f32 %v538, 0.0
  %v968 = vmax.f32 %v540, 0.0
  %v969 = vmax.f32 %v701, 0.0
  %v970 = vmax.f32 %v703, 0.0
  %v971 = vmax.f32 %v841, 0.0
  %v972 = vmax.f32 %v544, 0.0
  %v973 = vmax.f32 %v546, 0.0
  %v974 = vmax.f32 %v707, 0.0
  %v975 = vmax.f32 %v709, 0.0
  %v976 = vmax.f32 %v846, 0.0
  %v977 = vmax.f32 %v548, 0.0
  %v978 = vmax.f32 %v550, 0.0
  %v979 = vmax.f32 %v711, 0.0
  %v980 = vmax.f32 %v713, 0.0
  %v981 = vmax.f32 %v849, 0.0
  %1060 = vrot.lane.b32.xlu0 %v854, 124
  %v1061 = vpop.permute.xlu0 %1060
  %1062 = vrot.lane.b32.xlu0 %v855, 124
  %v1063 = vpop.permute.xlu0 %1062
  %1064 = vrot.lane.b32.xlu0 %v856, 124
  %v1065 = vpop.permute.xlu0 %1064
  %1066 = vrot.lane.b32.xlu0 %v859, 124
  %v1067 = vpop.permute.xlu0 %1066
  %1068 = vrot.lane.b32.xlu0 %v860, 124
  %v1069 = vpop.permute.xlu0 %1068
  %1070 = vrot.lane.b32.xlu0 %v861, 124
  %v1071 = vpop.permute.xlu0 %1070
  %1072 = vrot.lane.b32.xlu0 %v864, 124
  %v1073 = vpop.permute.xlu0 %1072
  %1074 = vrot.lane.b32.xlu0 %v865, 124
  %v1075 = vpop.permute.xlu0 %1074
  %1076 = vrot.lane.b32.xlu0 %v866, 124
  %v1077 = vpop.permute.xlu0 %1076
  %1078 = vrot.lane.b32.xlu0 %v869, 124
  %v1079 = vpop.permute.xlu0 %1078
  %1080 = vrot.lane.b32.xlu0 %v870, 124
  %v1081 = vpop.permute.xlu0 %1080
  %1082 = vrot.lane.b32.xlu0 %v871, 124
  %v1083 = vpop.permute.xlu0 %1082
  %1084 = vrot.lane.b32.xlu0 %v874, 124
  %v1085 = vpop.permute.xlu0 %1084
  %1086 = vrot.lane.b32.xlu0 %v875, 124
  %v1087 = vpop.permute.xlu0 %1086
  %1088 = vrot.lane.b32.xlu0 %v876, 124
  %v1089 = vpop.permute.xlu0 %1088
  %1090 = vrot.lane.b32.xlu0 %v879, 124
  %v1091 = vpop.permute.xlu0 %1090
  %1092 = vrot.lane.b32.xlu0 %v880, 124
  %v1093 = vpop.permute.xlu0 %1092
  %1094 = vrot.lane.b32.xlu0 %v881, 124
  %v1095 = vpop.permute.xlu0 %1094
  %1096 = vrot.lane.b32.xlu0 %v884, 124
  %v1097 = vpop.permute.xlu0 %1096
  %1098 = vrot.lane.b32.xlu0 %v885, 124
  %v1099 = vpop.permute.xlu0 %1098
  %1100 = vrot.lane.b32.xlu0 %v886, 124
  %v1101 = vpop.permute.xlu0 %1100
  %1102 = vrot.lane.b32.xlu0 %v889, 124
  %v1103 = vpop.permute.xlu0 %1102
  %1104 = vrot.lane.b32.xlu0 %v890, 124
  %v1105 = vpop.permute.xlu0 %1104
  %1106 = vrot.lane.b32.xlu0 %v891, 124
  %v1107 = vpop.permute.xlu0 %1106
  %1108 = vrot.lane.b32.xlu0 %v894, 124
  %v1109 = vpop.permute.xlu0 %1108
  %1110 = vrot.lane.b32.xlu0 %v895, 124
  %v1111 = vpop.permute.xlu0 %1110
  %1112 = vrot.lane.b32.xlu0 %v896, 124
  %v1113 = vpop.permute.xlu0 %1112
  %1114 = vrot.lane.b32.xlu0 %v899, 124
  %v1115 = vpop.permute.xlu0 %1114
  %1116 = vrot.lane.b32.xlu0 %v900, 124
  %v1117 = vpop.permute.xlu0 %1116
  %1118 = vrot.lane.b32.xlu0 %v901, 124
  %v1119 = vpop.permute.xlu0 %1118
  %1120 = vrot.lane.b32.xlu0 %v904, 124
  %v1121 = vpop.permute.xlu0 %1120
  %1122 = vrot.lane.b32.xlu0 %v905, 124
  %v1123 = vpop.permute.xlu0 %1122
  %1124 = vrot.lane.b32.xlu0 %v906, 124
  %v1125 = vpop.permute.xlu0 %1124
  %1126 = vrot.lane.b32.xlu0 %v909, 124
  %v1127 = vpop.permute.xlu0 %1126
  %1128 = vrot.lane.b32.xlu0 %v910, 124
  %v1129 = vpop.permute.xlu0 %1128
  %1130 = vrot.lane.b32.xlu0 %v911, 124
  %v1131 = vpop.permute.xlu0 %1130
  %1132 = vrot.lane.b32.xlu0 %v914, 124
  %v1133 = vpop.permute.xlu0 %1132
  %1134 = vrot.lane.b32.xlu0 %v915, 124
  %v1135 = vpop.permute.xlu0 %1134
  %1136 = vrot.lane.b32.xlu0 %v916, 124
  %v1137 = vpop.permute.xlu0 %1136
  %1138 = vrot.lane.b32.xlu0 %v919, 124
  %v1139 = vpop.permute.xlu0 %1138
  %1140 = vrot.lane.b32.xlu0 %v920, 124
  %v1141 = vpop.permute.xlu0 %1140
  %1142 = vrot.lane.b32.xlu0 %v921, 124
  %v1143 = vpop.permute.xlu0 %1142
  %1144 = vrot.lane.b32.xlu0 %v924, 124
  %v1145 = vpop.permute.xlu0 %1144
  %1146 = vrot.lane.b32.xlu0 %v925, 124
  %v1147 = vpop.permute.xlu0 %1146
  %1148 = vrot.lane.b32.xlu0 %v926, 124
  %v1149 = vpop.permute.xlu0 %1148
  %1150 = vrot.lane.b32.xlu0 %v929, 124
  %v1151 = vpop.permute.xlu0 %1150
  %1152 = vrot.lane.b32.xlu0 %v930, 124
  %v1153 = vpop.permute.xlu0 %1152
  %1154 = vrot.lane.b32.xlu0 %v931, 124
  %v1155 = vpop.permute.xlu0 %1154
  %1156 = vrot.lane.b32.xlu0 %v934, 124
  %v1157 = vpop.permute.xlu0 %1156
  %1158 = vrot.lane.b32.xlu0 %v935, 124
  %v1159 = vpop.permute.xlu0 %1158
  %1160 = vrot.lane.b32.xlu0 %v936, 124
  %v1161 = vpop.permute.xlu0 %1160
  %1162 = vrot.lane.b32.xlu0 %v939, 124
  %v1163 = vpop.permute.xlu0 %1162
  %1164 = vrot.lane.b32.xlu0 %v940, 124
  %v1165 = vpop.permute.xlu0 %1164
  %1166 = vrot.lane.b32.xlu0 %v941, 124
  %v1167 = vpop.permute.xlu0 %1166
  %1168 = vrot.lane.b32.xlu0 %v944, 124
  %v1169 = vpop.permute.xlu0 %1168
  %1170 = vrot.lane.b32.xlu0 %v945, 124
  %v1171 = vpop.permute.xlu0 %1170
  %1172 = vrot.lane.b32.xlu0 %v946, 124
  %v1173 = vpop.permute.xlu0 %1172
  %1174 = vrot.lane.b32.xlu0 %v949, 124
  %v1175 = vpop.permute.xlu0 %1174
  %1176 = vrot.lane.b32.xlu0 %v950, 124
  %v1177 = vpop.permute.xlu0 %1176
  %1178 = vrot.lane.b32.xlu0 %v951, 124
  %v1179 = vpop.permute.xlu0 %1178
  %1180 = vrot.lane.b32.xlu0 %v954, 124
  %v1181 = vpop.permute.xlu0 %1180
  %1182 = vrot.lane.b32.xlu0 %v955, 124
  %v1183 = vpop.permute.xlu0 %1182
  %1184 = vrot.lane.b32.xlu0 %v956, 124
  %v1185 = vpop.permute.xlu0 %1184
  %1186 = vrot.lane.b32.xlu0 %v959, 124
  %v1187 = vpop.permute.xlu0 %1186
  %1188 = vrot.lane.b32.xlu0 %v960, 124
  %v1189 = vpop.permute.xlu0 %1188
  %1190 = vrot.lane.b32.xlu0 %v961, 124
  %v1191 = vpop.permute.xlu0 %1190
  %1192 = vrot.lane.b32.xlu0 %v964, 124
  %v1193 = vpop.permute.xlu0 %1192
  %1194 = vrot.lane.b32.xlu0 %v965, 124
  %v1195 = vpop.permute.xlu0 %1194
  %1196 = vrot.lane.b32.xlu0 %v966, 124
  %v1197 = vpop.permute.xlu0 %1196
  %1198 = vrot.lane.b32.xlu0 %v969, 124
  %v1199 = vpop.permute.xlu0 %1198
  %1200 = vrot.lane.b32.xlu0 %v970, 124
  %v1201 = vpop.permute.xlu0 %1200
  %1202 = vrot.lane.b32.xlu0 %v971, 124
  %v1203 = vpop.permute.xlu0 %1202
  %1204 = vrot.lane.b32.xlu0 %v974, 124
  %v1205 = vpop.permute.xlu0 %1204
  %1206 = vrot.lane.b32.xlu0 %v975, 124
  %v1207 = vpop.permute.xlu0 %1206
  %1208 = vrot.lane.b32.xlu0 %v976, 124
  %v1209 = vpop.permute.xlu0 %1208
  %1210 = vrot.lane.b32.xlu0 %v979, 124
  %v1211 = vpop.permute.xlu0 %1210
  %1212 = vrot.lane.b32.xlu0 %v980, 124
  %v1213 = vpop.permute.xlu0 %1212
  %1214 = vrot.lane.b32.xlu0 %v981, 124
  %v1215 = vpop.permute.xlu0 %1214
  %vm1216 = vcmask 1014784
  %v1217 = vsel %vm1216, %v1061, %v1063
  %v1218 = vsel %vm1216, %v1063, %v1065
  %v1219 = vsel %vm1216, %v1067, %v1069
  %v1220 = vsel %vm1216, %v1069, %v1071
  %v1221 = vsel %vm1216, %v1073, %v1075
  %v1222 = vsel %vm1216, %v1075, %v1077
  %v1223 = vsel %vm1216, %v1079, %v1081
  %v1224 = vsel %vm1216, %v1081, %v1083
  %v1225 = vsel %vm1216, %v1085, %v1087
  %v1226 = vsel %vm1216, %v1087, %v1089
  %v1227 = vsel %vm1216, %v1091, %v1093
  %v1228 = vsel %vm1216, %v1093, %v1095
  %v1229 = vsel %vm1216, %v1097, %v1099
  %v1230 = vsel %vm1216, %v1099, %v1101
  %v1231 = vsel %vm1216, %v1103, %v1105
  %v1232 = vsel %vm1216, %v1105, %v1107
  %v1233 = vsel %vm1216, %v1109, %v1111
  %v1234 = vsel %vm1216, %v1111, %v1113
  %v1235 = vsel %vm1216, %v1115, %v1117
  %v1236 = vsel %vm1216, %v1117, %v1119
  %v1237 = vsel %vm1216, %v1121, %v1123
  %v1238 = vsel %vm1216, %v1123, %v1125
  %v1239 = vsel %vm1216, %v1127, %v1129
  %v1240 = vsel %vm1216, %v1129, %v1131
  %v1241 = vsel %vm1216, %v1133, %v1135
  %v1242 = vsel %vm1216, %v1135, %v1137
  %v1243 = vsel %vm1216, %v1139, %v1141
  %v1244 = vsel %vm1216, %v1141, %v1143
  %v1245 = vsel %vm1216, %v1145, %v1147
  %v1246 = vsel %vm1216, %v1147, %v1149
  %v1247 = vsel %vm1216, %v1151, %v1153
  %v1248 = vsel %vm1216, %v1153, %v1155
  %v1249 = vsel %vm1216, %v1157, %v1159
  %v1250 = vsel %vm1216, %v1159, %v1161
  %v1251 = vsel %vm1216, %v1163, %v1165
  %v1252 = vsel %vm1216, %v1165, %v1167
  %v1253 = vsel %vm1216, %v1169, %v1171
  %v1254 = vsel %vm1216, %v1171, %v1173
  %v1255 = vsel %vm1216, %v1175, %v1177
  %v1256 = vsel %vm1216, %v1177, %v1179
  %v1257 = vsel %vm1216, %v1181, %v1183
  %v1258 = vsel %vm1216, %v1183, %v1185
  %v1259 = vsel %vm1216, %v1187, %v1189
  %v1260 = vsel %vm1216, %v1189, %v1191
  %v1261 = vsel %vm1216, %v1193, %v1195
  %v1262 = vsel %vm1216, %v1195, %v1197
  %v1263 = vsel %vm1216, %v1199, %v1201
  %v1264 = vsel %vm1216, %v1201, %v1203
  %v1265 = vsel %vm1216, %v1205, %v1207
  %v1266 = vsel %vm1216, %v1207, %v1209
  %v1267 = vsel %vm1216, %v1211, %v1213
  %v1268 = vsel %vm1216, %v1213, %v1215
  %v1347 = vmax.f32 %v852, %v1217
  %v1348 = vmax.f32 %v853, %v1218
  %v1349 = vmax.f32 %v854, %v1065
  %v1350 = vmax.f32 %v857, %v1219
  %v1351 = vmax.f32 %v858, %v1220
  %v1352 = vmax.f32 %v859, %v1071
  %v1353 = vmax.f32 %v862, %v1221
  %v1354 = vmax.f32 %v863, %v1222
  %v1355 = vmax.f32 %v864, %v1077
  %v1356 = vmax.f32 %v867, %v1223
  %v1357 = vmax.f32 %v868, %v1224
  %v1358 = vmax.f32 %v869, %v1083
  %v1359 = vmax.f32 %v872, %v1225
  %v1360 = vmax.f32 %v873, %v1226
  %v1361 = vmax.f32 %v874, %v1089
  %v1362 = vmax.f32 %v877, %v1227
  %v1363 = vmax.f32 %v878, %v1228
  %v1364 = vmax.f32 %v879, %v1095
  %v1365 = vmax.f32 %v882, %v1229
  %v1366 = vmax.f32 %v883, %v1230
  %v1367 = vmax.f32 %v884, %v1101
  %v1368 = vmax.f32 %v887, %v1231
  %v1369 = vmax.f32 %v888, %v1232
  %v1370 = vmax.f32 %v889, %v1107
  %v1371 = vmax.f32 %v892, %v1233
  %v1372 = vmax.f32 %v893, %v1234
  %v1373 = vmax.f32 %v894, %v1113
  %v1374 = vmax.f32 %v897, %v1235
  %v1375 = vmax.f32 %v898, %v1236
  %v1376 = vmax.f32 %v899, %v1119
  %v1377 = vmax.f32 %v902, %v1237
  %v1378 = vmax.f32 %v903, %v1238
  %v1379 = vmax.f32 %v904, %v1125
  %v1380 = vmax.f32 %v907, %v1239
  %v1381 = vmax.f32 %v908, %v1240
  %v1382 = vmax.f32 %v909, %v1131
  %v1383 = vmax.f32 %v912, %v1241
  %v1384 = vmax.f32 %v913, %v1242
  %v1385 = vmax.f32 %v914, %v1137
  %v1386 = vmax.f32 %v917, %v1243
  %v1387 = vmax.f32 %v918, %v1244
  %v1388 = vmax.f32 %v919, %v1143
  %v1389 = vmax.f32 %v922, %v1245
  %v1390 = vmax.f32 %v923, %v1246
  %v1391 = vmax.f32 %v924, %v1149
  %v1392 = vmax.f32 %v927, %v1247
  %v1393 = vmax.f32 %v928, %v1248
  %v1394 = vmax.f32 %v929, %v1155
  %v1395 = vmax.f32 %v932, %v1249
  %v1396 = vmax.f32 %v933, %v1250
  %v1397 = vmax.f32 %v934, %v1161
  %v1398 = vmax.f32 %v937, %v1251
  %v1399 = vmax.f32 %v938, %v1252
  %v1400 = vmax.f32 %v939, %v1167
  %v1401 = vmax.f32 %v942, %v1253
  %v1402 = vmax.f32 %v943, %v1254
  %v1403 = vmax.f32 %v944, %v1173
  %v1404 = vmax.f32 %v947, %v1255
  %v1405 = vmax.f32 %v948, %v1256
  %v1406 = vmax.f32 %v949, %v1179
  %v1407 = vmax.f32 %v952, %v1257
  %v1408 = vmax.f32 %v953, %v1258
  %v1409 = vmax.f32 %v954, %v1185
  %v1410 = vmax.f32 %v957, %v1259
  %v1411 = vmax.f32 %v958, %v1260
  %v1412 = vmax.f32 %v959, %v1191
  %v1413 = vmax.f32 %v962, %v1261
  %v1414 = vmax.f32 %v963, %v1262
  %v1415 = vmax.f32 %v964, %v1197
  %v1416 = vmax.f32 %v967, %v1263
  %v1417 = vmax.f32 %v968, %v1264
  %v1418 = vmax.f32 %v969, %v1203
  %v1419 = vmax.f32 %v972, %v1265
  %v1420 = vmax.f32 %v973, %v1266
  %v1421 = vmax.f32 %v974, %v1209
  %v1422 = vmax.f32 %v977, %v1267
  %v1423 = vmax.f32 %v978, %v1268
  %v1424 = vmax.f32 %v979, %v1215
  %v1425 = vmax.f32 %v1347, %v1386
  %v1426 = vmax.f32 %v1348, %v1387
  %v1427 = vmax.f32 %v1349, %v1388
  %v1428 = vmax.f32 %v1350, %v1389
  %v1429 = vmax.f32 %v1351, %v1390
  %v1430 = vmax.f32 %v1352, %v1391
  %v1431 = vmax.f32 %v1353, %v1392
  %v1432 = vmax.f32 %v1354, %v1393
  %v1433 = vmax.f32 %v1355, %v1394
  %v1434 = vmax.f32 %v1356, %v1395
  %v1435 = vmax.f32 %v1357, %v1396
  %v1436 = vmax.f32 %v1358, %v1397
  %v1437 = vmax.f32 %v1359, %v1398
  %v1438 = vmax.f32 %v1360, %v1399
  %v1439 = vmax.f32 %v1361, %v1400
  %v1440 = vmax.f32 %v1362, %v1401
  %v1441 = vmax.f32 %v1363, %v1402
  %v1442 = vmax.f32 %v1364, %v1403
  %v1443 = vmax.f32 %v1365, %v1404
  %v1444 = vmax.f32 %v1366, %v1405
  %v1445 = vmax.f32 %v1367, %v1406
  %v1446 = vmax.f32 %v1368, %v1407
  %v1447 = vmax.f32 %v1369, %v1408
  %v1448 = vmax.f32 %v1370, %v1409
  %v1449 = vmax.f32 %v1371, %v1410
  %v1450 = vmax.f32 %v1372, %v1411
  %v1451 = vmax.f32 %v1373, %v1412
  %v1452 = vmax.f32 %v1374, %v1413
  %v1453 = vmax.f32 %v1375, %v1414
  %v1454 = vmax.f32 %v1376, %v1415
  %v1455 = vmax.f32 %v1377, %v1416
  %v1456 = vmax.f32 %v1378, %v1417
  %v1457 = vmax.f32 %v1379, %v1418
  %v1458 = vmax.f32 %v1380, %v1419
  %v1459 = vmax.f32 %v1381, %v1420
  %v1460 = vmax.f32 %v1382, %v1421
  %v1461 = vmax.f32 %v1383, %v1422
  %v1462 = vmax.f32 %v1384, %v1423
  %v1463 = vmax.f32 %v1385, %v1424
  %v1464 = vpack.c.bf16 %v1428, %v1425
  %v1465 = vpack.c.bf16 %v1429, %v1426
  %v1466 = vpack.c.bf16 %v1430, %v1427
  %v1467 = vpack.c.bf16 %v1434, %v1431
  %v1468 = vpack.c.bf16 %v1435, %v1432
  %v1469 = vpack.c.bf16 %v1436, %v1433
  %v1470 = vpack.c.bf16 %v1440, %v1437
  %v1471 = vpack.c.bf16 %v1441, %v1438
  %v1472 = vpack.c.bf16 %v1442, %v1439
  %v1473 = vpack.c.bf16 %v1446, %v1443
  %v1474 = vpack.c.bf16 %v1447, %v1444
  %v1475 = vpack.c.bf16 %v1448, %v1445
  %v1476 = vpack.c.bf16 %v1452, %v1449
  %v1477 = vpack.c.bf16 %v1453, %v1450
  %v1478 = vpack.c.bf16 %v1454, %v1451
  %v1479 = vpack.c.bf16 %v1458, %v1455
  %v1480 = vpack.c.bf16 %v1459, %v1456
  %v1481 = vpack.c.bf16 %v1460, %v1457
  %v1482 = vpack.c.bf16 %v1461, %v1461
  %v1483 = vpack.c.bf16 %v1462, %v1462
  %v1484 = vpack.c.bf16 %v1463, %v1463
  %v1485 = vld [vmem:[%s3] sm:$0xff]
  %v1486 = vld [vmem:[%s3 + $0x8] sm:$0xf]
  %v1487 = vld [vmem:[%s3 + $0xc] sm:$0xff]
  %v1488 = vld [vmem:[%s3 + $0x14] sm:$0xf]
  %v1489 = vld [vmem:[%s3 + $0x18] sm:$0xff]
  %v1490 = vld [vmem:[%s3 + $0x20] sm:$0xf]
  %v1491 = vld [vmem:[%s3 + $0x24] sm:$0xff]
  %v1492 = vld [vmem:[%s3 + $0x2c] sm:$0xf]
  %v1493 = vld [vmem:[%s3 + $0x30] sm:$0xff]
  %v1494 = vld [vmem:[%s3 + $0x38] sm:$0xf]
  %v1495 = vld [vmem:[%s3 + $0x3c] sm:$0xff]
  %v1496 = vld [vmem:[%s3 + $0x44] sm:$0xf]
  %v1497 = vld [vmem:[%s3 + $0x48] sm:$0xff]
  %v1498 = vld [vmem:[%s3 + $0x50] sm:$0xf]
  %v1499 = vld [vmem:[%s3 + $0x54] sm:$0xff]
  %v1500 = vld [vmem:[%s3 + $0x5c] sm:$0xf]
  %v1501 = vld [vmem:[%s3 + $0x60] sm:$0xff]
  %v1502 = vld [vmem:[%s3 + $0x68] sm:$0xf]
  %v1503 = vld [vmem:[%s3 + $0x6c] sm:$0xff]
  %v1504 = vld [vmem:[%s3 + $0x74] sm:$0xf]
  %v1505 = vld [vmem:[%s3 + $0x78] sm:$0xff]
  %v1506 = vld [vmem:[%s3 + $0x80] sm:$0xf]
  %v1507 = vld [vmem:[%s3 + $0x84] sm:$0xff]
  %v1508 = vld [vmem:[%s3 + $0x8c] sm:$0xf]
  %v1509 = vld [vmem:[%s3 + $0x90] sm:$0xff]
  %v1510 = vld [vmem:[%s3 + $0x98] sm:$0xf]
  %v1511 = vld [vmem:[%s3 + $0x9c] sm:$0xff]
  %v1512 = vld [vmem:[%s3 + $0xa4] sm:$0xf]
  %v1513 = vld [vmem:[%s3 + $0xa8] sm:$0xff]
  %v1514 = vld [vmem:[%s3 + $0xb0] sm:$0xf]
  %v1515 = vld [vmem:[%s3 + $0xb4] sm:$0xff]
  %v1516 = vld [vmem:[%s3 + $0xbc] sm:$0xf]
  %v1517 = vld [vmem:[%s3 + $0xc0] sm:$0xff]
  %v1518 = vld [vmem:[%s3 + $0xc8] sm:$0xf]
  %v1519 = vld [vmem:[%s3 + $0xcc] sm:$0xff]
  %v1520 = vld [vmem:[%s3 + $0xd4] sm:$0xf]
  %v1521 = vld [vmem:[%s3 + $0xd8] sm:$0xff]
  %v1522 = vld [vmem:[%s3 + $0xe0] sm:$0xf]
  %v1523 = vld [vmem:[%s3 + $0xe4] sm:$0xff]
  %v1524 = vld [vmem:[%s3 + $0xec] sm:$0xf]
  %v1525 = vld [vmem:[%s3 + $0xf0] sm:$0xff]
  %v1526 = vld [vmem:[%s3 + $0xf8] sm:$0xf]
  %v1527 = vld [vmem:[%s3 + $0xfc] sm:$0xff]
  %v1528 = vld [vmem:[%s3 + $0x104] sm:$0xf]
  %v1529 = vld [vmem:[%s3 + $0x108] sm:$0xff]
  %v1530 = vld [vmem:[%s3 + $0x110] sm:$0xf]
  %v1531 = vld [vmem:[%s3 + $0x114] sm:$0xff]
  %v1532 = vld [vmem:[%s3 + $0x11c] sm:$0xf]
  %v1533 = vld [vmem:[%s3 + $0x120] sm:$0xff]
  %v1534 = vld [vmem:[%s3 + $0x128] sm:$0xf]
  %v1535 = vld [vmem:[%s3 + $0x12c] sm:$0xff]
  %v1536 = vld [vmem:[%s3 + $0x134] sm:$0xf]
  %v1537 = vld [vmem:[%s3 + $0x138] sm:$0xff]
  %v1538 = vld [vmem:[%s3 + $0x140] sm:$0xf]
  %v1539 = vld [vmem:[%s3 + $0x144] sm:$0xff]
  %v1540 = vld [vmem:[%s3 + $0x14c] sm:$0xf]
  %v1541 = vld [vmem:[%s3 + $0x150] sm:$0xff]
  %v1542 = vld [vmem:[%s3 + $0x158] sm:$0xf]
  %v1543 = vld [vmem:[%s3 + $0x15c] sm:$0xff]
  %v1544 = vld [vmem:[%s3 + $0x164] sm:$0xf]
  %v1545 = vld [vmem:[%s3 + $0x168] sm:$0xff]
  %v1546 = vld [vmem:[%s3 + $0x170] sm:$0xf]
  %v1547 = vld [vmem:[%s3 + $0x174] sm:$0xff]
  %v1548 = vld [vmem:[%s3 + $0x17c] sm:$0xf]
  %v1549 = vld [vmem:[%s3 + $0x180] sm:$0x33]
  %v1550 = vld [vmem:[%s3 + $0x188] sm:$0x3]
  %s1551 = scalar_lea.vmem %s3, 396
  %v1552 = vld [vmem:[%s1551] sm:$0xff]
  %v1553 = vld [vmem:[%s1551 + $0x8] sm:$0xf]
  %v1554 = vld [vmem:[%s1551 + $0xc] sm:$0xff]
  %v1555 = vld [vmem:[%s1551 + $0x14] sm:$0xf]
  %v1556 = vld [vmem:[%s1551 + $0x18] sm:$0xff]
  %v1557 = vld [vmem:[%s1551 + $0x20] sm:$0xf]
  %v1558 = vld [vmem:[%s1551 + $0x24] sm:$0xff]
  %v1559 = vld [vmem:[%s1551 + $0x2c] sm:$0xf]
  %v1560 = vld [vmem:[%s1551 + $0x30] sm:$0xff]
  %v1561 = vld [vmem:[%s1551 + $0x38] sm:$0xf]
  %v1562 = vld [vmem:[%s1551 + $0x3c] sm:$0xff]
  %v1563 = vld [vmem:[%s1551 + $0x44] sm:$0xf]
  %v1564 = vld [vmem:[%s1551 + $0x48] sm:$0xff]
  %v1565 = vld [vmem:[%s1551 + $0x50] sm:$0xf]
  %v1566 = vld [vmem:[%s1551 + $0x54] sm:$0xff]
  %v1567 = vld [vmem:[%s1551 + $0x5c] sm:$0xf]
  %v1568 = vld [vmem:[%s1551 + $0x60] sm:$0xff]
  %v1569 = vld [vmem:[%s1551 + $0x68] sm:$0xf]
  %v1570 = vld [vmem:[%s1551 + $0x6c] sm:$0xff]
  %v1571 = vld [vmem:[%s1551 + $0x74] sm:$0xf]
  %v1572 = vld [vmem:[%s1551 + $0x78] sm:$0xff]
  %v1573 = vld [vmem:[%s1551 + $0x80] sm:$0xf]
  %v1574 = vld [vmem:[%s1551 + $0x84] sm:$0xff]
  %v1575 = vld [vmem:[%s1551 + $0x8c] sm:$0xf]
  %v1576 = vld [vmem:[%s1551 + $0x90] sm:$0xff]
  %v1577 = vld [vmem:[%s1551 + $0x98] sm:$0xf]
  %v1578 = vld [vmem:[%s1551 + $0x9c] sm:$0xff]
  %v1579 = vld [vmem:[%s1551 + $0xa4] sm:$0xf]
  %v1580 = vld [vmem:[%s1551 + $0xa8] sm:$0xff]
  %v1581 = vld [vmem:[%s1551 + $0xb0] sm:$0xf]
  %v1582 = vld [vmem:[%s1551 + $0xb4] sm:$0xff]
  %v1583 = vld [vmem:[%s1551 + $0xbc] sm:$0xf]
  %v1584 = vld [vmem:[%s1551 + $0xc0] sm:$0xff]
  %v1585 = vld [vmem:[%s1551 + $0xc8] sm:$0xf]
  %v1586 = vld [vmem:[%s1551 + $0xcc] sm:$0xff]
  %v1587 = vld [vmem:[%s1551 + $0xd4] sm:$0xf]
  %v1588 = vld [vmem:[%s1551 + $0xd8] sm:$0xff]
  %v1589 = vld [vmem:[%s1551 + $0xe0] sm:$0xf]
  %v1590 = vld [vmem:[%s1551 + $0xe4] sm:$0xff]
  %v1591 = vld [vmem:[%s1551 + $0xec] sm:$0xf]
  %v1592 = vld [vmem:[%s1551 + $0xf0] sm:$0xff]
  %v1593 = vld [vmem:[%s1551 + $0xf8] sm:$0xf]
  %v1594 = vld [vmem:[%s1551 + $0xfc] sm:$0xff]
  %v1595 = vld [vmem:[%s1551 + $0x104] sm:$0xf]
  %v1596 = vld [vmem:[%s1551 + $0x108] sm:$0xff]
  %v1597 = vld [vmem:[%s1551 + $0x110] sm:$0xf]
  %v1598 = vld [vmem:[%s1551 + $0x114] sm:$0xff]
  %v1599 = vld [vmem:[%s1551 + $0x11c] sm:$0xf]
  %v1600 = vld [vmem:[%s1551 + $0x120] sm:$0xff]
  %v1601 = vld [vmem:[%s1551 + $0x128] sm:$0xf]
  %v1602 = vld [vmem:[%s1551 + $0x12c] sm:$0xff]
  %v1603 = vld [vmem:[%s1551 + $0x134] sm:$0xf]
  %v1604 = vld [vmem:[%s1551 + $0x138] sm:$0xff]
  %v1605 = vld [vmem:[%s1551 + $0x140] sm:$0xf]
  %v1606 = vld [vmem:[%s1551 + $0x144] sm:$0xff]
  %v1607 = vld [vmem:[%s1551 + $0x14c] sm:$0xf]
  %v1608 = vld [vmem:[%s1551 + $0x150] sm:$0xff]
  %v1609 = vld [vmem:[%s1551 + $0x158] sm:$0xf]
  %v1610 = vld [vmem:[%s1551 + $0x15c] sm:$0xff]
  %v1611 = vld [vmem:[%s1551 + $0x164] sm:$0xf]
  %v1612 = vld [vmem:[%s1551 + $0x168] sm:$0xff]
  %v1613 = vld [vmem:[%s1551 + $0x170] sm:$0xf]
  %v1614 = vld [vmem:[%s1551 + $0x174] sm:$0xff]
  %v1615 = vld [vmem:[%s1551 + $0x17c] sm:$0xf]
  %v1616 = vld [vmem:[%s1551 + $0x180] sm:$0x33]
  %v1617 = vld [vmem:[%s1551 + $0x188] sm:$0x3]
  %vm1636 = vcmask 1043456
  %v1637 = vrot.slane %v1464, 4
  %v1638 = vrot.slane %v1467, 4
  %v1639 = vsel %vm1636, %v1637, %v1638
  %v1640 = vrot.slane %v1465, 4
  %v1641 = vrot.slane %v1468, 4
  %v1642 = vsel %vm1636, %v1640, %v1641
  %v1643 = vrot.slane %v1466, 4
  %v1644 = vrot.slane %v1469, 4
  %v1645 = vsel %vm1636, %v1643, %v1644
  %v1646 = vrot.slane %v1470, 4
  %v1647 = vsel %vm1636, %v1638, %v1646
  %v1648 = vrot.slane %v1471, 4
  %v1649 = vsel %vm1636, %v1641, %v1648
  %v1650 = vrot.slane %v1472, 4
  %v1651 = vsel %vm1636, %v1644, %v1650
  %v1652 = vrot.slane %v1473, 4
  %v1653 = vsel %vm1636, %v1646, %v1652
  %v1654 = vrot.slane %v1474, 4
  %v1655 = vsel %vm1636, %v1648, %v1654
  %v1656 = vrot.slane %v1475, 4
  %v1657 = vsel %vm1636, %v1650, %v1656
  %v1658 = vrot.slane %v1476, 4
  %v1659 = vsel %vm1636, %v1652, %v1658
  %v1660 = vrot.slane %v1477, 4
  %v1661 = vsel %vm1636, %v1654, %v1660
  %v1662 = vrot.slane %v1478, 4
  %v1663 = vsel %vm1636, %v1656, %v1662
  %v1664 = vrot.slane %v1479, 4
  %v1665 = vsel %vm1636, %v1658, %v1664
  %v1666 = vrot.slane %v1480, 4
  %v1667 = vsel %vm1636, %v1660, %v1666
  %v1668 = vrot.slane %v1481, 4
  %v1669 = vsel %vm1636, %v1662, %v1668
  %v1748 = vunpack.c.l.b16 %v1552
  %v1749 = vunpack.c.h.b16 %v1552
  %v1750 = vunpack.c.l.b16 %v1553
  %v1751 = vunpack.c.l.b16 %v1554
  %v1752 = vunpack.c.h.b16 %v1554
  %v1753 = vunpack.c.l.b16 %v1555
  %v1754 = vunpack.c.l.b16 %v1556
  %v1755 = vunpack.c.h.b16 %v1556
  %v1756 = vunpack.c.l.b16 %v1557
  %v1757 = vunpack.c.l.b16 %v1558
  %v1758 = vunpack.c.h.b16 %v1558
  %v1759 = vunpack.c.l.b16 %v1559
  %v1760 = vunpack.c.l.b16 %v1560
  %v1761 = vunpack.c.h.b16 %v1560
  %v1762 = vunpack.c.l.b16 %v1561
  %v1763 = vunpack.c.l.b16 %v1562
  %v1764 = vunpack.c.h.b16 %v1562
  %v1765 = vunpack.c.l.b16 %v1563
  %v1766 = vunpack.c.l.b16 %v1564
  %v1767 = vunpack.c.h.b16 %v1564
  %v1768 = vunpack.c.l.b16 %v1565
  %v1769 = vunpack.c.l.b16 %v1566
  %v1770 = vunpack.c.h.b16 %v1566
  %v1771 = vunpack.c.l.b16 %v1567
  %v1772 = vunpack.c.l.b16 %v1568
  %v1773 = vunpack.c.h.b16 %v1568
  %v1774 = vunpack.c.l.b16 %v1569
  %v1775 = vunpack.c.l.b16 %v1570
  %v1776 = vunpack.c.h.b16 %v1570
  %v1777 = vunpack.c.l.b16 %v1571
  %v1778 = vunpack.c.l.b16 %v1572
  %v1779 = vunpack.c.h.b16 %v1572
  %v1780 = vunpack.c.l.b16 %v1573
  %v1781 = vunpack.c.l.b16 %v1574
  %v1782 = vunpack.c.h.b16 %v1574
  %v1783 = vunpack.c.l.b16 %v1575
  %v1784 = vunpack.c.l.b16 %v1576
  %v1785 = vunpack.c.h.b16 %v1576
  %v1786 = vunpack.c.l.b16 %v1577
  %v1787 = vunpack.c.l.b16 %v1578
  %v1788 = vunpack.c.h.b16 %v1578
  %v1789 = vunpack.c.l.b16 %v1579
  %v1790 = vunpack.c.l.b16 %v1580
  %v1791 = vunpack.c.h.b16 %v1580
  %v1792 = vunpack.c.l.b16 %v1581
  %v1793 = vunpack.c.l.b16 %v1582
  %v1794 = vunpack.c.h.b16 %v1582
  %v1795 = vunpack.c.l.b16 %v1583
  %v1796 = vunpack.c.l.b16 %v1584
  %v1797 = vunpack.c.h.b16 %v1584
  %v1798 = vunpack.c.l.b16 %v1585
  %v1799 = vunpack.c.l.b16 %v1586
  %v1800 = vunpack.c.h.b16 %v1586
  %v1801 = vunpack.c.l.b16 %v1587
  %v1802 = vunpack.c.l.b16 %v1588
  %v1803 = vunpack.c.h.b16 %v1588
  %v1804 = vunpack.c.l.b16 %v1589
  %v1805 = vunpack.c.l.b16 %v1590
  %v1806 = vunpack.c.h.b16 %v1590
  %v1807 = vunpack.c.l.b16 %v1591
  %v1808 = vunpack.c.l.b16 %v1592
  %v1809 = vunpack.c.h.b16 %v1592
  %v1810 = vunpack.c.l.b16 %v1593
  %v1811 = vunpack.c.l.b16 %v1594
  %v1812 = vunpack.c.h.b16 %v1594
  %v1813 = vunpack.c.l.b16 %v1595
  %v1814 = vunpack.c.l.b16 %v1596
  %v1815 = vunpack.c.h.b16 %v1596
  %v1816 = vunpack.c.l.b16 %v1597
  %v1817 = vunpack.c.l.b16 %v1598
  %v1818 = vunpack.c.h.b16 %v1598
  %v1819 = vunpack.c.l.b16 %v1599
  %v1820 = vunpack.c.l.b16 %v1600
  %v1821 = vunpack.c.h.b16 %v1600
  %v1822 = vunpack.c.l.b16 %v1601
  %v1823 = vunpack.c.l.b16 %v1602
  %v1824 = vunpack.c.h.b16 %v1602
  %v1825 = vunpack.c.l.b16 %v1603
  %v1826 = vunpack.c.l.b16 %v1604
  %v1827 = vunpack.c.h.b16 %v1604
  %v1828 = vunpack.c.l.b16 %v1605
  %v1829 = vunpack.c.l.b16 %v1606
  %v1830 = vunpack.c.h.b16 %v1606
  %v1831 = vunpack.c.l.b16 %v1607
  %v1832 = vunpack.c.l.b16 %v1608
  %v1833 = vunpack.c.h.b16 %v1608
  %v1834 = vunpack.c.l.b16 %v1609
  %v1835 = vunpack.c.l.b16 %v1610
  %v1836 = vunpack.c.h.b16 %v1610
  %v1837 = vunpack.c.l.b16 %v1611
  %v1838 = vunpack.c.l.b16 %v1612
  %v1839 = vunpack.c.h.b16 %v1612
  %v1840 = vunpack.c.l.b16 %v1613
  %v1841 = vunpack.c.l.b16 %v1614
  %v1842 = vunpack.c.h.b16 %v1614
  %v1843 = vunpack.c.l.b16 %v1615
  %v1844 = vunpack.c.l.b16 %v1616
  %v1845 = vunpack.c.h.b16 %v1616
  %v1846 = vunpack.c.l.b16 %v1617
  %v1847 = vpack.c.b16 %v1751, %v1748
  %v1848 = vpack.c.b16 %v1752, %v1749
  %v1849 = vpack.c.b16 %v1753, %v1750
  %v1850 = vpack.c.b16 %v1757, %v1754
  %v1851 = vpack.c.b16 %v1758, %v1755
  %v1852 = vpack.c.b16 %v1759, %v1756
  %v1853 = vpack.c.b16 %v1763, %v1760
  %v1854 = vpack.c.b16 %v1764, %v1761
  %v1855 = vpack.c.b16 %v1765, %v1762
  %v1856 = vpack.c.b16 %v1769, %v1766
  %v1857 = vpack.c.b16 %v1770, %v1767
  %v1858 = vpack.c.b16 %v1771, %v1768
  %v1859 = vpack.c.b16 %v1775, %v1772
  %v1860 = vpack.c.b16 %v1776, %v1773
  %v1861 = vpack.c.b16 %v1777, %v1774
  %v1862 = vpack.c.b16 %v1781, %v1778
  %v1863 = vpack.c.b16 %v1782, %v1779
  %v1864 = vpack.c.b16 %v1783, %v1780
  %v1865 = vpack.c.b16 %v1787, %v1784
  %v1866 = vpack.c.b16 %v1788, %v1785
  %v1867 = vpack.c.b16 %v1789, %v1786
  %v1868 = vpack.c.b16 %v1793, %v1790
  %v1869 = vpack.c.b16 %v1794, %v1791
  %v1870 = vpack.c.b16 %v1795, %v1792
  %v1871 = vpack.c.b16 %v1799, %v1796
  %v1872 = vpack.c.b16 %v1800, %v1797
  %v1873 = vpack.c.b16 %v1801, %v1798
  %v1874 = vpack.c.b16 %v1805, %v1802
  %v1875 = vpack.c.b16 %v1806, %v1803
  %v1876 = vpack.c.b16 %v1807, %v1804
  %v1877 = vpack.c.b16 %v1811, %v1808
  %v1878 = vpack.c.b16 %v1812, %v1809
  %v1879 = vpack.c.b16 %v1813, %v1810
  %v1880 = vpack.c.b16 %v1817, %v1814
  %v1881 = vpack.c.b16 %v1818, %v1815
  %v1882 = vpack.c.b16 %v1819, %v1816
  %v1883 = vpack.c.b16 %v1823, %v1820
  %v1884 = vpack.c.b16 %v1824, %v1821
  %v1885 = vpack.c.b16 %v1825, %v1822
  %v1886 = vpack.c.b16 %v1829, %v1826
  %v1887 = vpack.c.b16 %v1830, %v1827
  %v1888 = vpack.c.b16 %v1831, %v1828
  %v1889 = vpack.c.b16 %v1835, %v1832
  %v1890 = vpack.c.b16 %v1836, %v1833
  %v1891 = vpack.c.b16 %v1837, %v1834
  %v1892 = vpack.c.b16 %v1841, %v1838
  %v1893 = vpack.c.b16 %v1842, %v1839
  %v1894 = vpack.c.b16 %v1843, %v1840
  %v1895 = vpack.c.b16 %v1844, %v1844
  %v1896 = vpack.c.b16 %v1845, %v1845
  %v1897 = vpack.c.b16 %v1846, %v1846
  %vm1946 = vcmask 31744
  %v1948 = vsel %vm1946, %v1645, 0
  %v1951 = vsel %vm1946, %v1651, 0
  %v1954 = vsel %vm1946, %v1657, 0
  %v1957 = vsel %vm1946, %v1663, 0
  %v1960 = vsel %vm1946, %v1669, 0
  %v1963 = vsel %vm1946, %v1668, 0
  %v1966 = vsel %vm373, %v1895, 0
  %v1969 = vsel %vm373, %v1896, 0
  %v1972 = vsel %vm373, %v1897, 0
  %1974 = vmatprep.subr.bf16.mxu0 %v1869
  %1975 = vmatpush1.bf16.msra.mxu0 %v1868
  %1976 = vmatprep.subr.bf16.mxu0 %v1866
  %1977 = vmatpush1.bf16.msra.mxu0 %v1865
  %1978 = vmatprep.subr.bf16.mxu0 %v1863
  %1979 = vmatpush1.bf16.msra.mxu0 %v1862
  %1980 = vmatprep.subr.bf16.mxu0 %v1860
  %1981 = vmatpush1.bf16.msra.mxu0 %v1859
  %1982 = vmatprep.subr.bf16.mxu0 %v1857
  %1983 = vmatpush1.bf16.msra.mxu0 %v1856
  %1984 = vmatprep.subr.bf16.mxu0 %v1854
  %1985 = vmatpush1.bf16.msra.mxu0 %v1853
  %1986 = vmatprep.subr.bf16.mxu0 %v1851
  %1987 = vmatpush1.bf16.msra.mxu0 %v1850
  %1988 = vmatprep.subr.bf16.mxu0 %v1848
  %1989 = vmatpush1.bf16.msra.mxu0 %v1847
  %1990 = vmatprep.subr.bf16.mxu0 %v1893
  %1991 = vmatpush2.bf16.msra.mxu0 %v1892
  %1992 = vmatprep.subr.bf16.mxu0 %v1890
  %1993 = vmatpush2.bf16.msra.mxu0 %v1889
  %1994 = vmatprep.subr.bf16.mxu0 %v1887
  %1995 = vmatpush2.bf16.msra.mxu0 %v1886
  %1996 = vmatprep.subr.bf16.mxu0 %v1884
  %1997 = vmatpush2.bf16.msra.mxu0 %v1883
  %1998 = vmatprep.subr.bf16.mxu0 %v1881
  %1999 = vmatpush2.bf16.msra.mxu0 %v1880
  %2000 = vmatprep.subr.bf16.mxu0 %v1878
  %2001 = vmatpush2.bf16.msra.mxu0 %v1877
  %2002 = vmatprep.subr.bf16.mxu0 %v1875
  %2003 = vmatpush2.bf16.msra.mxu0 %v1874
  %2004 = vmatprep.subr.bf16.mxu0 %v1872
  %2005 = vmatpush2.bf16.msra.mxu0 %v1871
  %2006 = vmatprep.mubr.bf16.mxu0 %v1642
  %2007 = vmatmul.mubr.bf16.gmra.mxu0 %v1639
  %v2008 = vpop.f32.mrf.mxu0
  %v2009 = vadd.f32 0.0, %v2008
  %v2010 = vpop.f32.mrf.mxu0
  %v2011 = vadd.f32 0.0, %v2010
  %v2012 = vpop.f32.mrf.mxu0
  %v2013 = vadd.f32 0.0, %v2012
  %v2014 = vpop.f32.mrf.mxu0
  %v2015 = vadd.f32 0.0, %v2014
  %2016 = vmatprep.mubr.bf16.mxu0 %v1649
  %2017 = vmatmul.mubr.bf16.gmra.mxu0 %v1647
  %v2018 = vpop.f32.mrf.mxu0
  %v2019 = vadd.f32 0.0, %v2018
  %v2020 = vpop.f32.mrf.mxu0
  %v2021 = vadd.f32 0.0, %v2020
  %v2022 = vpop.f32.mrf.mxu0
  %v2023 = vadd.f32 0.0, %v2022
  %v2024 = vpop.f32.mrf.mxu0
  %v2025 = vadd.f32 0.0, %v2024
  %2026 = vmatprep.mubr.bf16.mxu0 %v1655
  %2027 = vmatmul.mubr.bf16.gmra.mxu0 %v1653
  %v2028 = vpop.f32.mrf.mxu0
  %v2029 = vadd.f32 0.0, %v2028
  %v2030 = vpop.f32.mrf.mxu0
  %v2031 = vadd.f32 0.0, %v2030
  %v2032 = vpop.f32.mrf.mxu0
  %v2033 = vadd.f32 0.0, %v2032
  %v2034 = vpop.f32.mrf.mxu0
  %v2035 = vadd.f32 0.0, %v2034
  %2036 = vmatprep.mubr.bf16.mxu0 %v1661
  %2037 = vmatmul.mubr.bf16.gmra.mxu0 %v1659
  %v2038 = vpop.f32.mrf.mxu0
  %v2039 = vadd.f32 0.0, %v2038
  %v2040 = vpop.f32.mrf.mxu0
  %v2041 = vadd.f32 0.0, %v2040
  %v2042 = vpop.f32.mrf.mxu0
  %v2043 = vadd.f32 0.0, %v2042
  %v2044 = vpop.f32.mrf.mxu0
  %v2045 = vadd.f32 0.0, %v2044
  %2046 = vmatprep.mubr.bf16.mxu0 %v1667
  %2047 = vmatmul.mubr.bf16.gmra.mxu0 %v1665
  %v2048 = vpop.f32.mrf.mxu0
  %v2049 = vadd.f32 0.0, %v2048
  %v2050 = vpop.f32.mrf.mxu0
  %v2051 = vadd.f32 0.0, %v2050
  %v2052 = vpop.f32.mrf.mxu0
  %v2053 = vadd.f32 0.0, %v2052
  %v2054 = vpop.f32.mrf.mxu0
  %v2055 = vadd.f32 0.0, %v2054
  %2056 = vmatprep.mubr.bf16.mxu0 %v1666
  %2057 = vmatmul.mubr.bf16.gmra.mxu0 %v1664
  %v2058 = vpop.f32.mrf.mxu0
  %v2059 = vpop.f32.mrf.mxu0
  %v2060 = vpop.f32.mrf.mxu0
  %v2061 = vpop.f32.mrf.mxu0
  %2062 = vdwg.mxu0
  %2063 = vmatprep.subr.bf16.mxu0 0
  %2064 = vmatpush1.bf16.msra.mxu0 0
  %2065 = vmatprep.subr.bf16.mxu0 0
  %2066 = vmatpush1.bf16.msra.mxu0 0
  %2067 = vmatprep.subr.bf16.mxu0 0
  %2068 = vmatpush1.bf16.msra.mxu0 0
  %2069 = vmatprep.subr.bf16.mxu0 0
  %2070 = vmatpush1.bf16.msra.mxu0 0
  %2071 = vmatprep.subr.bf16.mxu0 0
  %2072 = vmatpush1.bf16.msra.mxu0 0
  %2073 = vmatprep.subr.bf16.mxu0 0
  %2074 = vmatpush1.bf16.msra.mxu0 0
  %2075 = vmatprep.subr.bf16.mxu0 0
  %2076 = vmatpush1.bf16.msra.mxu0 0
  %2077 = vmatprep.subr.bf16.mxu0 %v1969
  %2078 = vmatpush1.bf16.msra.mxu0 %v1966
  %2079 = vmatprep.subr.bf16.mxu0 0
  %2080 = vmatpush2.bf16.msra.mxu0 0
  %2081 = vmatprep.subr.bf16.mxu0 0
  %2082 = vmatpush2.bf16.msra.mxu0 0
  %2083 = vmatprep.subr.bf16.mxu0 0
  %2084 = vmatpush2.bf16.msra.mxu0 0
  %2085 = vmatprep.subr.bf16.mxu0 0
  %2086 = vmatpush2.bf16.msra.mxu0 0
  %2087 = vmatprep.subr.bf16.mxu0 0
  %2088 = vmatpush2.bf16.msra.mxu0 0
  %2089 = vmatprep.subr.bf16.mxu0 0
  %2090 = vmatpush2.bf16.msra.mxu0 0
  %2091 = vmatprep.subr.bf16.mxu0 0
  %2092 = vmatpush2.bf16.msra.mxu0 0
  %2093 = vmatprep.subr.bf16.mxu0 0
  %2094 = vmatpush2.bf16.msra.mxu0 0
  %2095 = vmatprep.mubr.bf16.mxu0 0
  %2096 = vmatmul.mubr.bf16.gmra.mxu0 %v1948
  %v2097 = vpop.f32.mrf.mxu0
  %v2098 = vadd.f32 %v2009, %v2097
  %v2099 = vpop.f32.mrf.mxu0
  %v2100 = vadd.f32 %v2011, %v2099
  %v2101 = vpop.f32.mrf.mxu0
  %v2102 = vadd.f32 %v2013, %v2101
  %v2103 = vpop.f32.mrf.mxu0
  %v2104 = vadd.f32 %v2015, %v2103
  %2105 = vmatprep.mubr.bf16.mxu0 0
  %2106 = vmatmul.mubr.bf16.gmra.mxu0 %v1951
  %v2107 = vpop.f32.mrf.mxu0
  %v2108 = vadd.f32 %v2019, %v2107
  %v2109 = vpop.f32.mrf.mxu0
  %v2110 = vadd.f32 %v2021, %v2109
  %v2111 = vpop.f32.mrf.mxu0
  %v2112 = vadd.f32 %v2023, %v2111
  %v2113 = vpop.f32.mrf.mxu0
  %v2114 = vadd.f32 %v2025, %v2113
  %2115 = vmatprep.mubr.bf16.mxu0 0
  %2116 = vmatmul.mubr.bf16.gmra.mxu0 %v1954
  %v2117 = vpop.f32.mrf.mxu0
  %v2118 = vadd.f32 %v2029, %v2117
  %v2119 = vpop.f32.mrf.mxu0
  %v2120 = vadd.f32 %v2031, %v2119
  %v2121 = vpop.f32.mrf.mxu0
  %v2122 = vadd.f32 %v2033, %v2121
  %v2123 = vpop.f32.mrf.mxu0
  %v2124 = vadd.f32 %v2035, %v2123
  %2125 = vmatprep.mubr.bf16.mxu0 0
  %2126 = vmatmul.mubr.bf16.gmra.mxu0 %v1957
  %v2127 = vpop.f32.mrf.mxu0
  %v2128 = vadd.f32 %v2039, %v2127
  %v2129 = vpop.f32.mrf.mxu0
  %v2130 = vadd.f32 %v2041, %v2129
  %v2131 = vpop.f32.mrf.mxu0
  %v2132 = vadd.f32 %v2043, %v2131
  %v2133 = vpop.f32.mrf.mxu0
  %v2134 = vadd.f32 %v2045, %v2133
  %2135 = vmatprep.mubr.bf16.mxu0 0
  %2136 = vmatmul.mubr.bf16.gmra.mxu0 %v1960
  %v2137 = vpop.f32.mrf.mxu0
  %v2138 = vadd.f32 %v2049, %v2137
  %v2139 = vpop.f32.mrf.mxu0
  %v2140 = vadd.f32 %v2051, %v2139
  %v2141 = vpop.f32.mrf.mxu0
  %v2142 = vadd.f32 %v2053, %v2141
  %v2143 = vpop.f32.mrf.mxu0
  %v2144 = vadd.f32 %v2055, %v2143
  %2145 = vmatprep.mubr.bf16.mxu0 0
  %2146 = vmatmul.mubr.bf16.gmra.mxu0 %v1963
  %v2147 = vpop.f32.mrf.mxu0
  %v2148 = vpop.f32.mrf.mxu0
  %v2149 = vpop.f32.mrf.mxu0
  %v2150 = vpop.f32.mrf.mxu0
  %2151 = vdwg.mxu0
  %2152 = vmatprep.subr.bf16.mxu0 0
  %2153 = vmatpush1.bf16.msra.mxu0 %v1870
  %2154 = vmatprep.subr.bf16.mxu0 0
  %2155 = vmatpush1.bf16.msra.mxu0 %v1867
  %2156 = vmatprep.subr.bf16.mxu0 0
  %2157 = vmatpush1.bf16.msra.mxu0 %v1864
  %2158 = vmatprep.subr.bf16.mxu0 0
  %2159 = vmatpush1.bf16.msra.mxu0 %v1861
  %2160 = vmatprep.subr.bf16.mxu0 0
  %2161 = vmatpush1.bf16.msra.mxu0 %v1858
  %2162 = vmatprep.subr.bf16.mxu0 0
  %2163 = vmatpush1.bf16.msra.mxu0 %v1855
  %2164 = vmatprep.subr.bf16.mxu0 0
  %2165 = vmatpush1.bf16.msra.mxu0 %v1852
  %2166 = vmatprep.subr.bf16.mxu0 0
  %2167 = vmatpush1.bf16.msra.mxu0 %v1849
  %2168 = vmatprep.subr.bf16.mxu0 0
  %2169 = vmatpush2.bf16.msra.mxu0 %v1894
  %2170 = vmatprep.subr.bf16.mxu0 0
  %2171 = vmatpush2.bf16.msra.mxu0 %v1891
  %2172 = vmatprep.subr.bf16.mxu0 0
  %2173 = vmatpush2.bf16.msra.mxu0 %v1888
  %2174 = vmatprep.subr.bf16.mxu0 0
  %2175 = vmatpush2.bf16.msra.mxu0 %v1885
  %2176 = vmatprep.subr.bf16.mxu0 0
  %2177 = vmatpush2.bf16.msra.mxu0 %v1882
  %2178 = vmatprep.subr.bf16.mxu0 0
  %2179 = vmatpush2.bf16.msra.mxu0 %v1879
  %2180 = vmatprep.subr.bf16.mxu0 0
  %2181 = vmatpush2.bf16.msra.mxu0 %v1876
  %2182 = vmatprep.subr.bf16.mxu0 0
  %2183 = vmatpush2.bf16.msra.mxu0 %v1873
  %2184 = vmatprep.mubr.bf16.mxu0 %v1642
  %2185 = vmatmul.mubr.bf16.gmra.mxu0 %v1639
  %v2186 = vpop.f32.mrf.mxu0
  %v2187 = vadd.f32 0.0, %v2186
  %v2188 = vpop.f32.mrf.mxu0
  %v2189 = vpop.f32.mrf.mxu0
  %v2190 = vadd.f32 0.0, %v2189
  %v2191 = vpop.f32.mrf.mxu0
  %2192 = vmatprep.mubr.bf16.mxu0 %v1649
  %2193 = vmatmul.mubr.bf16.gmra.mxu0 %v1647
  %v2194 = vpop.f32.mrf.mxu0
  %v2195 = vadd.f32 0.0, %v2194
  %v2196 = vpop.f32.mrf.mxu0
  %v2197 = vpop.f32.mrf.mxu0
  %v2198 = vadd.f32 0.0, %v2197
  %v2199 = vpop.f32.mrf.mxu0
  %2200 = vmatprep.mubr.bf16.mxu0 %v1655
  %2201 = vmatmul.mubr.bf16.gmra.mxu0 %v1653
  %v2202 = vpop.f32.mrf.mxu0
  %v2203 = vadd.f32 0.0, %v2202
  %v2204 = vpop.f32.mrf.mxu0
  %v2205 = vpop.f32.mrf.mxu0
  %v2206 = vadd.f32 0.0, %v2205
  %v2207 = vpop.f32.mrf.mxu0
  %2208 = vmatprep.mubr.bf16.mxu0 %v1661
  %2209 = vmatmul.mubr.bf16.gmra.mxu0 %v1659
  %v2210 = vpop.f32.mrf.mxu0
  %v2211 = vadd.f32 0.0, %v2210
  %v2212 = vpop.f32.mrf.mxu0
  %v2213 = vpop.f32.mrf.mxu0
  %v2214 = vadd.f32 0.0, %v2213
  %v2215 = vpop.f32.mrf.mxu0
  %2216 = vmatprep.mubr.bf16.mxu0 %v1667
  %2217 = vmatmul.mubr.bf16.gmra.mxu0 %v1665
  %v2218 = vpop.f32.mrf.mxu0
  %v2219 = vadd.f32 0.0, %v2218
  %v2220 = vpop.f32.mrf.mxu0
  %v2221 = vpop.f32.mrf.mxu0
  %v2222 = vadd.f32 0.0, %v2221
  %v2223 = vpop.f32.mrf.mxu0
  %2224 = vmatprep.mubr.bf16.mxu0 %v1666
  %2225 = vmatmul.mubr.bf16.gmra.mxu0 %v1664
  %v2226 = vpop.f32.mrf.mxu0
  %v2227 = vpop.f32.mrf.mxu0
  %v2228 = vpop.f32.mrf.mxu0
  %v2229 = vpop.f32.mrf.mxu0
  %2230 = vdwg.mxu0
  %2231 = vmatprep.subr.bf16.mxu0 0
  %2232 = vmatpush1.bf16.msra.mxu0 0
  %2233 = vmatprep.subr.bf16.mxu0 0
  %2234 = vmatpush1.bf16.msra.mxu0 0
  %2235 = vmatprep.subr.bf16.mxu0 0
  %2236 = vmatpush1.bf16.msra.mxu0 0
  %2237 = vmatprep.subr.bf16.mxu0 0
  %2238 = vmatpush1.bf16.msra.mxu0 0
  %2239 = vmatprep.subr.bf16.mxu0 0
  %2240 = vmatpush1.bf16.msra.mxu0 0
  %2241 = vmatprep.subr.bf16.mxu0 0
  %2242 = vmatpush1.bf16.msra.mxu0 0
  %2243 = vmatprep.subr.bf16.mxu0 0
  %2244 = vmatpush1.bf16.msra.mxu0 0
  %2245 = vmatprep.subr.bf16.mxu0 0
  %2246 = vmatpush1.bf16.msra.mxu0 %v1972
  %2247 = vmatprep.subr.bf16.mxu0 0
  %2248 = vmatpush2.bf16.msra.mxu0 0
  %2249 = vmatprep.subr.bf16.mxu0 0
  %2250 = vmatpush2.bf16.msra.mxu0 0
  %2251 = vmatprep.subr.bf16.mxu0 0
  %2252 = vmatpush2.bf16.msra.mxu0 0
  %2253 = vmatprep.subr.bf16.mxu0 0
  %2254 = vmatpush2.bf16.msra.mxu0 0
  %2255 = vmatprep.subr.bf16.mxu0 0
  %2256 = vmatpush2.bf16.msra.mxu0 0
  %2257 = vmatprep.subr.bf16.mxu0 0
  %2258 = vmatpush2.bf16.msra.mxu0 0
  %2259 = vmatprep.subr.bf16.mxu0 0
  %2260 = vmatpush2.bf16.msra.mxu0 0
  %2261 = vmatprep.subr.bf16.mxu0 0
  %2262 = vmatpush2.bf16.msra.mxu0 0
  %2263 = vmatprep.mubr.bf16.mxu0 0
  %2264 = vmatmul.mubr.bf16.gmra.mxu0 %v1948
  %v2265 = vpop.f32.mrf.mxu0
  %v2266 = vadd.f32 %v2187, %v2265
  %v2267 = vpop.f32.mrf.mxu0
  %v2268 = vpop.f32.mrf.mxu0
  %v2269 = vadd.f32 %v2190, %v2268
  %v2270 = vpop.f32.mrf.mxu0
  %2271 = vmatprep.mubr.bf16.mxu0 0
  %2272 = vmatmul.mubr.bf16.gmra.mxu0 %v1951
  %v2273 = vpop.f32.mrf.mxu0
  %v2274 = vadd.f32 %v2195, %v2273
  %v2275 = vpop.f32.mrf.mxu0
  %v2276 = vpop.f32.mrf.mxu0
  %v2277 = vadd.f32 %v2198, %v2276
  %v2278 = vpop.f32.mrf.mxu0
  %2279 = vmatprep.mubr.bf16.mxu0 0
  %2280 = vmatmul.mubr.bf16.gmra.mxu0 %v1954
  %v2281 = vpop.f32.mrf.mxu0
  %v2282 = vadd.f32 %v2203, %v2281
  %v2283 = vpop.f32.mrf.mxu0
  %v2284 = vpop.f32.mrf.mxu0
  %v2285 = vadd.f32 %v2206, %v2284
  %v2286 = vpop.f32.mrf.mxu0
  %2287 = vmatprep.mubr.bf16.mxu0 0
  %2288 = vmatmul.mubr.bf16.gmra.mxu0 %v1957
  %v2289 = vpop.f32.mrf.mxu0
  %v2290 = vadd.f32 %v2211, %v2289
  %v2291 = vpop.f32.mrf.mxu0
  %v2292 = vpop.f32.mrf.mxu0
  %v2293 = vadd.f32 %v2214, %v2292
  %v2294 = vpop.f32.mrf.mxu0
  %2295 = vmatprep.mubr.bf16.mxu0 0
  %2296 = vmatmul.mubr.bf16.gmra.mxu0 %v1960
  %v2297 = vpop.f32.mrf.mxu0
  %v2298 = vadd.f32 %v2219, %v2297
  %v2299 = vpop.f32.mrf.mxu0
  %v2300 = vpop.f32.mrf.mxu0
  %v2301 = vadd.f32 %v2222, %v2300
  %v2302 = vpop.f32.mrf.mxu0
  %2303 = vmatprep.mubr.bf16.mxu0 0
  %2304 = vmatmul.mubr.bf16.gmra.mxu0 %v1963
  %v2305 = vpop.f32.mrf.mxu0
  %v2306 = vpop.f32.mrf.mxu0
  %v2307 = vpop.f32.mrf.mxu0
  %v2308 = vpop.f32.mrf.mxu0
  %2309 = vdwg.mxu0
  %v2376 = vunpack.c.l.b16 %v1485
  %v2377 = vunpack.c.h.b16 %v1485
  %v2378 = vunpack.c.l.b16 %v1486
  %v2379 = vunpack.c.l.b16 %v1487
  %v2380 = vunpack.c.h.b16 %v1487
  %v2381 = vunpack.c.l.b16 %v1488
  %v2382 = vunpack.c.l.b16 %v1489
  %v2383 = vunpack.c.h.b16 %v1489
  %v2384 = vunpack.c.l.b16 %v1490
  %v2385 = vunpack.c.l.b16 %v1491
  %v2386 = vunpack.c.h.b16 %v1491
  %v2387 = vunpack.c.l.b16 %v1492
  %v2388 = vunpack.c.l.b16 %v1493
  %v2389 = vunpack.c.h.b16 %v1493
  %v2390 = vunpack.c.l.b16 %v1494
  %v2391 = vunpack.c.l.b16 %v1495
  %v2392 = vunpack.c.h.b16 %v1495
  %v2393 = vunpack.c.l.b16 %v1496
  %v2394 = vunpack.c.l.b16 %v1497
  %v2395 = vunpack.c.h.b16 %v1497
  %v2396 = vunpack.c.l.b16 %v1498
  %v2397 = vunpack.c.l.b16 %v1499
  %v2398 = vunpack.c.h.b16 %v1499
  %v2399 = vunpack.c.l.b16 %v1500
  %v2400 = vunpack.c.l.b16 %v1501
  %v2401 = vunpack.c.h.b16 %v1501
  %v2402 = vunpack.c.l.b16 %v1502
  %v2403 = vunpack.c.l.b16 %v1503
  %v2404 = vunpack.c.h.b16 %v1503
  %v2405 = vunpack.c.l.b16 %v1504
  %v2406 = vunpack.c.l.b16 %v1505
  %v2407 = vunpack.c.h.b16 %v1505
  %v2408 = vunpack.c.l.b16 %v1506
  %v2409 = vunpack.c.l.b16 %v1507
  %v2410 = vunpack.c.h.b16 %v1507
  %v2411 = vunpack.c.l.b16 %v1508
  %v2412 = vunpack.c.l.b16 %v1509
  %v2413 = vunpack.c.h.b16 %v1509
  %v2414 = vunpack.c.l.b16 %v1510
  %v2415 = vunpack.c.l.b16 %v1511
  %v2416 = vunpack.c.h.b16 %v1511
  %v2417 = vunpack.c.l.b16 %v1512
  %v2418 = vunpack.c.l.b16 %v1513
  %v2419 = vunpack.c.h.b16 %v1513
  %v2420 = vunpack.c.l.b16 %v1514
  %v2421 = vunpack.c.l.b16 %v1515
  %v2422 = vunpack.c.h.b16 %v1515
  %v2423 = vunpack.c.l.b16 %v1516
  %v2424 = vunpack.c.l.b16 %v1517
  %v2425 = vunpack.c.h.b16 %v1517
  %v2426 = vunpack.c.l.b16 %v1518
  %v2427 = vunpack.c.l.b16 %v1519
  %v2428 = vunpack.c.h.b16 %v1519
  %v2429 = vunpack.c.l.b16 %v1520
  %v2430 = vunpack.c.l.b16 %v1521
  %v2431 = vunpack.c.h.b16 %v1521
  %v2432 = vunpack.c.l.b16 %v1522
  %v2433 = vunpack.c.l.b16 %v1523
  %v2434 = vunpack.c.h.b16 %v1523
  %v2435 = vunpack.c.l.b16 %v1524
  %v2436 = vunpack.c.l.b16 %v1525
  %v2437 = vunpack.c.h.b16 %v1525
  %v2438 = vunpack.c.l.b16 %v1526
  %v2439 = vunpack.c.l.b16 %v1527
  %v2440 = vunpack.c.h.b16 %v1527
  %v2441 = vunpack.c.l.b16 %v1528
  %v2442 = vunpack.c.l.b16 %v1529
  %v2443 = vunpack.c.h.b16 %v1529
  %v2444 = vunpack.c.l.b16 %v1530
  %v2445 = vunpack.c.l.b16 %v1531
  %v2446 = vunpack.c.h.b16 %v1531
  %v2447 = vunpack.c.l.b16 %v1532
  %v2448 = vunpack.c.l.b16 %v1533
  %v2449 = vunpack.c.h.b16 %v1533
  %v2450 = vunpack.c.l.b16 %v1534
  %v2451 = vunpack.c.l.b16 %v1535
  %v2452 = vunpack.c.h.b16 %v1535
  %v2453 = vunpack.c.l.b16 %v1536
  %v2454 = vunpack.c.l.b16 %v1537
  %v2455 = vunpack.c.h.b16 %v1537
  %v2456 = vunpack.c.l.b16 %v1538
  %v2457 = vunpack.c.l.b16 %v1539
  %v2458 = vunpack.c.h.b16 %v1539
  %v2459 = vunpack.c.l.b16 %v1540
  %v2460 = vunpack.c.l.b16 %v1541
  %v2461 = vunpack.c.h.b16 %v1541
  %v2462 = vunpack.c.l.b16 %v1542
  %v2463 = vunpack.c.l.b16 %v1543
  %v2464 = vunpack.c.h.b16 %v1543
  %v2465 = vunpack.c.l.b16 %v1544
  %v2466 = vunpack.c.l.b16 %v1545
  %v2467 = vunpack.c.h.b16 %v1545
  %v2468 = vunpack.c.l.b16 %v1546
  %v2469 = vunpack.c.l.b16 %v1547
  %v2470 = vunpack.c.h.b16 %v1547
  %v2471 = vunpack.c.l.b16 %v1548
  %v2472 = vunpack.c.l.b16 %v1549
  %v2473 = vunpack.c.h.b16 %v1549
  %v2474 = vunpack.c.l.b16 %v1550
  %v2475 = vpack.c.b16 %v2379, %v2376
  %v2476 = vpack.c.b16 %v2380, %v2377
  %v2477 = vpack.c.b16 %v2381, %v2378
  %v2478 = vpack.c.b16 %v2385, %v2382
  %v2479 = vpack.c.b16 %v2386, %v2383
  %v2480 = vpack.c.b16 %v2387, %v2384
  %v2481 = vpack.c.b16 %v2391, %v2388
  %v2482 = vpack.c.b16 %v2392, %v2389
  %v2483 = vpack.c.b16 %v2393, %v2390
  %v2484 = vpack.c.b16 %v2397, %v2394
  %v2485 = vpack.c.b16 %v2398, %v2395
  %v2486 = vpack.c.b16 %v2399, %v2396
  %v2487 = vpack.c.b16 %v2403, %v2400
  %v2488 = vpack.c.b16 %v2404, %v2401
  %v2489 = vpack.c.b16 %v2405, %v2402
  %v2490 = vpack.c.b16 %v2409, %v2406
  %v2491 = vpack.c.b16 %v2410, %v2407
  %v2492 = vpack.c.b16 %v2411, %v2408
  %v2493 = vpack.c.b16 %v2415, %v2412
  %v2494 = vpack.c.b16 %v2416, %v2413
  %v2495 = vpack.c.b16 %v2417, %v2414
  %v2496 = vpack.c.b16 %v2421, %v2418
  %v2497 = vpack.c.b16 %v2422, %v2419
  %v2498 = vpack.c.b16 %v2423, %v2420
  %v2499 = vpack.c.b16 %v2427, %v2424
  %v2500 = vpack.c.b16 %v2428, %v2425
  %v2501 = vpack.c.b16 %v2429, %v2426
  %v2502 = vpack.c.b16 %v2433, %v2430
  %v2503 = vpack.c.b16 %v2434, %v2431
  %v2504 = vpack.c.b16 %v2435, %v2432
  %v2505 = vpack.c.b16 %v2439, %v2436
  %v2506 = vpack.c.b16 %v2440, %v2437
  %v2507 = vpack.c.b16 %v2441, %v2438
  %v2508 = vpack.c.b16 %v2445, %v2442
  %v2509 = vpack.c.b16 %v2446, %v2443
  %v2510 = vpack.c.b16 %v2447, %v2444
  %v2511 = vpack.c.b16 %v2451, %v2448
  %v2512 = vpack.c.b16 %v2452, %v2449
  %v2513 = vpack.c.b16 %v2453, %v2450
  %v2514 = vpack.c.b16 %v2457, %v2454
  %v2515 = vpack.c.b16 %v2458, %v2455
  %v2516 = vpack.c.b16 %v2459, %v2456
  %v2517 = vpack.c.b16 %v2463, %v2460
  %v2518 = vpack.c.b16 %v2464, %v2461
  %v2519 = vpack.c.b16 %v2465, %v2462
  %v2520 = vpack.c.b16 %v2469, %v2466
  %v2521 = vpack.c.b16 %v2470, %v2467
  %v2522 = vpack.c.b16 %v2471, %v2468
  %v2523 = vpack.c.b16 %v2472, %v2472
  %v2524 = vpack.c.b16 %v2473, %v2473
  %v2525 = vpack.c.b16 %v2474, %v2474
  %v2575 = vsel %vm1946, %v1466, 0
  %v2578 = vsel %vm1946, %v1469, 0
  %v2581 = vsel %vm1946, %v1472, 0
  %v2584 = vsel %vm1946, %v1475, 0
  %v2587 = vsel %vm1946, %v1478, 0
  %v2590 = vsel %vm1946, %v1481, 0
  %v2593 = vsel %vm373, %v2523, 0
  %v2596 = vsel %vm373, %v2524, 0
  %v2599 = vsel %vm373, %v2525, 0
  %2601 = vmatprep.subr.bf16.mxu0 %v2497
  %2602 = vmatpush1.bf16.msra.mxu0 %v2496
  %2603 = vmatprep.subr.bf16.mxu0 %v2494
  %2604 = vmatpush1.bf16.msra.mxu0 %v2493
  %2605 = vmatprep.subr.bf16.mxu0 %v2491
  %2606 = vmatpush1.bf16.msra.mxu0 %v2490
  %2607 = vmatprep.subr.bf16.mxu0 %v2488
  %2608 = vmatpush1.bf16.msra.mxu0 %v2487
  %2609 = vmatprep.subr.bf16.mxu0 %v2485
  %2610 = vmatpush1.bf16.msra.mxu0 %v2484
  %2611 = vmatprep.subr.bf16.mxu0 %v2482
  %2612 = vmatpush1.bf16.msra.mxu0 %v2481
  %2613 = vmatprep.subr.bf16.mxu0 %v2479
  %2614 = vmatpush1.bf16.msra.mxu0 %v2478
  %2615 = vmatprep.subr.bf16.mxu0 %v2476
  %2616 = vmatpush1.bf16.msra.mxu0 %v2475
  %2617 = vmatprep.subr.bf16.mxu0 %v2521
  %2618 = vmatpush2.bf16.msra.mxu0 %v2520
  %2619 = vmatprep.subr.bf16.mxu0 %v2518
  %2620 = vmatpush2.bf16.msra.mxu0 %v2517
  %2621 = vmatprep.subr.bf16.mxu0 %v2515
  %2622 = vmatpush2.bf16.msra.mxu0 %v2514
  %2623 = vmatprep.subr.bf16.mxu0 %v2512
  %2624 = vmatpush2.bf16.msra.mxu0 %v2511
  %2625 = vmatprep.subr.bf16.mxu0 %v2509
  %2626 = vmatpush2.bf16.msra.mxu0 %v2508
  %2627 = vmatprep.subr.bf16.mxu0 %v2506
  %2628 = vmatpush2.bf16.msra.mxu0 %v2505
  %2629 = vmatprep.subr.bf16.mxu0 %v2503
  %2630 = vmatpush2.bf16.msra.mxu0 %v2502
  %2631 = vmatprep.subr.bf16.mxu0 %v2500
  %2632 = vmatpush2.bf16.msra.mxu0 %v2499
  %2633 = vmatprep.mubr.bf16.mxu0 %v1465
  %2634 = vmatmul.mubr.bf16.gmra.mxu0 %v1464
  %v2635 = vpop.f32.mrf.mxu0
  %v2636 = vadd.f32 %v2098, %v2635
  %v2637 = vpop.f32.mrf.mxu0
  %v2638 = vadd.f32 %v2100, %v2637
  %v2639 = vpop.f32.mrf.mxu0
  %v2640 = vadd.f32 %v2102, %v2639
  %v2641 = vpop.f32.mrf.mxu0
  %v2642 = vadd.f32 %v2104, %v2641
  %2643 = vmatprep.mubr.bf16.mxu0 %v1468
  %2644 = vmatmul.mubr.bf16.gmra.mxu0 %v1467
  %v2645 = vpop.f32.mrf.mxu0
  %v2646 = vadd.f32 %v2108, %v2645
  %v2647 = vpop.f32.mrf.mxu0
  %v2648 = vadd.f32 %v2110, %v2647
  %v2649 = vpop.f32.mrf.mxu0
  %v2650 = vadd.f32 %v2112, %v2649
  %v2651 = vpop.f32.mrf.mxu0
  %v2652 = vadd.f32 %v2114, %v2651
  %2653 = vmatprep.mubr.bf16.mxu0 %v1471
  %2654 = vmatmul.mubr.bf16.gmra.mxu0 %v1470
  %v2655 = vpop.f32.mrf.mxu0
  %v2656 = vadd.f32 %v2118, %v2655
  %v2657 = vpop.f32.mrf.mxu0
  %v2658 = vadd.f32 %v2120, %v2657
  %v2659 = vpop.f32.mrf.mxu0
  %v2660 = vadd.f32 %v2122, %v2659
  %v2661 = vpop.f32.mrf.mxu0
  %v2662 = vadd.f32 %v2124, %v2661
  %2663 = vmatprep.mubr.bf16.mxu0 %v1474
  %2664 = vmatmul.mubr.bf16.gmra.mxu0 %v1473
  %v2665 = vpop.f32.mrf.mxu0
  %v2666 = vadd.f32 %v2128, %v2665
  %v2667 = vpop.f32.mrf.mxu0
  %v2668 = vadd.f32 %v2130, %v2667
  %v2669 = vpop.f32.mrf.mxu0
  %v2670 = vadd.f32 %v2132, %v2669
  %v2671 = vpop.f32.mrf.mxu0
  %v2672 = vadd.f32 %v2134, %v2671
  %2673 = vmatprep.mubr.bf16.mxu0 %v1477
  %2674 = vmatmul.mubr.bf16.gmra.mxu0 %v1476
  %v2675 = vpop.f32.mrf.mxu0
  %v2676 = vadd.f32 %v2138, %v2675
  %v2677 = vpop.f32.mrf.mxu0
  %v2678 = vadd.f32 %v2140, %v2677
  %v2679 = vpop.f32.mrf.mxu0
  %v2680 = vadd.f32 %v2142, %v2679
  %v2681 = vpop.f32.mrf.mxu0
  %v2682 = vadd.f32 %v2144, %v2681
  %2683 = vmatprep.mubr.bf16.mxu0 %v1480
  %2684 = vmatmul.mubr.bf16.gmra.mxu0 %v1479
  %v2685 = vpop.f32.mrf.mxu0
  %v2686 = vpop.f32.mrf.mxu0
  %v2687 = vpop.f32.mrf.mxu0
  %v2688 = vpop.f32.mrf.mxu0
  %2689 = vdwg.mxu0
  %2690 = vmatprep.subr.bf16.mxu0 0
  %2691 = vmatpush1.bf16.msra.mxu0 0
  %2692 = vmatprep.subr.bf16.mxu0 0
  %2693 = vmatpush1.bf16.msra.mxu0 0
  %2694 = vmatprep.subr.bf16.mxu0 0
  %2695 = vmatpush1.bf16.msra.mxu0 0
  %2696 = vmatprep.subr.bf16.mxu0 0
  %2697 = vmatpush1.bf16.msra.mxu0 0
  %2698 = vmatprep.subr.bf16.mxu0 0
  %2699 = vmatpush1.bf16.msra.mxu0 0
  %2700 = vmatprep.subr.bf16.mxu0 0
  %2701 = vmatpush1.bf16.msra.mxu0 0
  %2702 = vmatprep.subr.bf16.mxu0 0
  %2703 = vmatpush1.bf16.msra.mxu0 0
  %2704 = vmatprep.subr.bf16.mxu0 %v2596
  %2705 = vmatpush1.bf16.msra.mxu0 %v2593
  %2706 = vmatprep.subr.bf16.mxu0 0
  %2707 = vmatpush2.bf16.msra.mxu0 0
  %2708 = vmatprep.subr.bf16.mxu0 0
  %2709 = vmatpush2.bf16.msra.mxu0 0
  %2710 = vmatprep.subr.bf16.mxu0 0
  %2711 = vmatpush2.bf16.msra.mxu0 0
  %2712 = vmatprep.subr.bf16.mxu0 0
  %2713 = vmatpush2.bf16.msra.mxu0 0
  %2714 = vmatprep.subr.bf16.mxu0 0
  %2715 = vmatpush2.bf16.msra.mxu0 0
  %2716 = vmatprep.subr.bf16.mxu0 0
  %2717 = vmatpush2.bf16.msra.mxu0 0
  %2718 = vmatprep.subr.bf16.mxu0 0
  %2719 = vmatpush2.bf16.msra.mxu0 0
  %2720 = vmatprep.subr.bf16.mxu0 0
  %2721 = vmatpush2.bf16.msra.mxu0 0
  %2722 = vmatprep.mubr.bf16.mxu0 0
  %2723 = vmatmul.mubr.bf16.gmra.mxu0 %v2575
  %v2724 = vpop.f32.mrf.mxu0
  %v2725 = vadd.f32 %v2636, %v2724
  %v2726 = vpop.f32.mrf.mxu0
  %v2727 = vadd.f32 %v2638, %v2726
  %v2728 = vpop.f32.mrf.mxu0
  %v2729 = vadd.f32 %v2640, %v2728
  %v2730 = vpop.f32.mrf.mxu0
  %v2731 = vadd.f32 %v2642, %v2730
  %2732 = vmatprep.mubr.bf16.mxu0 0
  %2733 = vmatmul.mubr.bf16.gmra.mxu0 %v2578
  %v2734 = vpop.f32.mrf.mxu0
  %v2735 = vadd.f32 %v2646, %v2734
  %v2736 = vpop.f32.mrf.mxu0
  %v2737 = vadd.f32 %v2648, %v2736
  %v2738 = vpop.f32.mrf.mxu0
  %v2739 = vadd.f32 %v2650, %v2738
  %v2740 = vpop.f32.mrf.mxu0
  %v2741 = vadd.f32 %v2652, %v2740
  %2742 = vmatprep.mubr.bf16.mxu0 0
  %2743 = vmatmul.mubr.bf16.gmra.mxu0 %v2581
  %v2744 = vpop.f32.mrf.mxu0
  %v2745 = vadd.f32 %v2656, %v2744
  %v2746 = vpop.f32.mrf.mxu0
  %v2747 = vadd.f32 %v2658, %v2746
  %v2748 = vpop.f32.mrf.mxu0
  %v2749 = vadd.f32 %v2660, %v2748
  %v2750 = vpop.f32.mrf.mxu0
  %v2751 = vadd.f32 %v2662, %v2750
  %2752 = vmatprep.mubr.bf16.mxu0 0
  %2753 = vmatmul.mubr.bf16.gmra.mxu0 %v2584
  %v2754 = vpop.f32.mrf.mxu0
  %v2755 = vadd.f32 %v2666, %v2754
  %v2756 = vpop.f32.mrf.mxu0
  %v2757 = vadd.f32 %v2668, %v2756
  %v2758 = vpop.f32.mrf.mxu0
  %v2759 = vadd.f32 %v2670, %v2758
  %v2760 = vpop.f32.mrf.mxu0
  %v2761 = vadd.f32 %v2672, %v2760
  %2762 = vmatprep.mubr.bf16.mxu0 0
  %2763 = vmatmul.mubr.bf16.gmra.mxu0 %v2587
  %v2764 = vpop.f32.mrf.mxu0
  %v2765 = vadd.f32 %v2676, %v2764
  %v2766 = vpop.f32.mrf.mxu0
  %v2767 = vadd.f32 %v2678, %v2766
  %v2768 = vpop.f32.mrf.mxu0
  %v2769 = vadd.f32 %v2680, %v2768
  %v2770 = vpop.f32.mrf.mxu0
  %v2771 = vadd.f32 %v2682, %v2770
  %2772 = vmatprep.mubr.bf16.mxu0 0
  %2773 = vmatmul.mubr.bf16.gmra.mxu0 %v2590
  %v2774 = vpop.f32.mrf.mxu0
  %v2775 = vpop.f32.mrf.mxu0
  %v2776 = vpop.f32.mrf.mxu0
  %v2777 = vpop.f32.mrf.mxu0
  %2778 = vdwg.mxu0
  %2779 = vmatprep.subr.bf16.mxu0 0
  %2780 = vmatpush1.bf16.msra.mxu0 %v2498
  %2781 = vmatprep.subr.bf16.mxu0 0
  %2782 = vmatpush1.bf16.msra.mxu0 %v2495
  %2783 = vmatprep.subr.bf16.mxu0 0
  %2784 = vmatpush1.bf16.msra.mxu0 %v2492
  %2785 = vmatprep.subr.bf16.mxu0 0
  %2786 = vmatpush1.bf16.msra.mxu0 %v2489
  %2787 = vmatprep.subr.bf16.mxu0 0
  %2788 = vmatpush1.bf16.msra.mxu0 %v2486
  %2789 = vmatprep.subr.bf16.mxu0 0
  %2790 = vmatpush1.bf16.msra.mxu0 %v2483
  %2791 = vmatprep.subr.bf16.mxu0 0
  %2792 = vmatpush1.bf16.msra.mxu0 %v2480
  %2793 = vmatprep.subr.bf16.mxu0 0
  %2794 = vmatpush1.bf16.msra.mxu0 %v2477
  %2795 = vmatprep.subr.bf16.mxu0 0
  %2796 = vmatpush2.bf16.msra.mxu0 %v2522
  %2797 = vmatprep.subr.bf16.mxu0 0
  %2798 = vmatpush2.bf16.msra.mxu0 %v2519
  %2799 = vmatprep.subr.bf16.mxu0 0
  %2800 = vmatpush2.bf16.msra.mxu0 %v2516
  %2801 = vmatprep.subr.bf16.mxu0 0
  %2802 = vmatpush2.bf16.msra.mxu0 %v2513
  %2803 = vmatprep.subr.bf16.mxu0 0
  %2804 = vmatpush2.bf16.msra.mxu0 %v2510
  %2805 = vmatprep.subr.bf16.mxu0 0
  %2806 = vmatpush2.bf16.msra.mxu0 %v2507
  %2807 = vmatprep.subr.bf16.mxu0 0
  %2808 = vmatpush2.bf16.msra.mxu0 %v2504
  %2809 = vmatprep.subr.bf16.mxu0 0
  %2810 = vmatpush2.bf16.msra.mxu0 %v2501
  %2811 = vmatprep.mubr.bf16.mxu0 %v1465
  %2812 = vmatmul.mubr.bf16.gmra.mxu0 %v1464
  %v2813 = vpop.f32.mrf.mxu0
  %v2814 = vadd.f32 %v2266, %v2813
  %v2815 = vpop.f32.mrf.mxu0
  %v2816 = vpop.f32.mrf.mxu0
  %v2817 = vadd.f32 %v2269, %v2816
  %v2818 = vpop.f32.mrf.mxu0
  %2819 = vmatprep.mubr.bf16.mxu0 %v1468
  %2820 = vmatmul.mubr.bf16.gmra.mxu0 %v1467
  %v2821 = vpop.f32.mrf.mxu0
  %v2822 = vadd.f32 %v2274, %v2821
  %v2823 = vpop.f32.mrf.mxu0
  %v2824 = vpop.f32.mrf.mxu0
  %v2825 = vadd.f32 %v2277, %v2824
  %v2826 = vpop.f32.mrf.mxu0
  %2827 = vmatprep.mubr.bf16.mxu0 %v1471
  %2828 = vmatmul.mubr.bf16.gmra.mxu0 %v1470
  %v2829 = vpop.f32.mrf.mxu0
  %v2830 = vadd.f32 %v2282, %v2829
  %v2831 = vpop.f32.mrf.mxu0
  %v2832 = vpop.f32.mrf.mxu0
  %v2833 = vadd.f32 %v2285, %v2832
  %v2834 = vpop.f32.mrf.mxu0
  %2835 = vmatprep.mubr.bf16.mxu0 %v1474
  %2836 = vmatmul.mubr.bf16.gmra.mxu0 %v1473
  %v2837 = vpop.f32.mrf.mxu0
  %v2838 = vadd.f32 %v2290, %v2837
  %v2839 = vpop.f32.mrf.mxu0
  %v2840 = vpop.f32.mrf.mxu0
  %v2841 = vadd.f32 %v2293, %v2840
  %v2842 = vpop.f32.mrf.mxu0
  %2843 = vmatprep.mubr.bf16.mxu0 %v1477
  %2844 = vmatmul.mubr.bf16.gmra.mxu0 %v1476
  %v2845 = vpop.f32.mrf.mxu0
  %v2846 = vadd.f32 %v2298, %v2845
  %v2847 = vpop.f32.mrf.mxu0
  %v2848 = vpop.f32.mrf.mxu0
  %v2849 = vadd.f32 %v2301, %v2848
  %v2850 = vpop.f32.mrf.mxu0
  %2851 = vmatprep.mubr.bf16.mxu0 %v1480
  %2852 = vmatmul.mubr.bf16.gmra.mxu0 %v1479
  %v2853 = vpop.f32.mrf.mxu0
  %v2854 = vpop.f32.mrf.mxu0
  %v2855 = vpop.f32.mrf.mxu0
  %v2856 = vpop.f32.mrf.mxu0
  %2857 = vdwg.mxu0
  %2858 = vmatprep.subr.bf16.mxu0 0
  %2859 = vmatpush1.bf16.msra.mxu0 0
  %2860 = vmatprep.subr.bf16.mxu0 0
  %2861 = vmatpush1.bf16.msra.mxu0 0
  %2862 = vmatprep.subr.bf16.mxu0 0
  %2863 = vmatpush1.bf16.msra.mxu0 0
  %2864 = vmatprep.subr.bf16.mxu0 0
  %2865 = vmatpush1.bf16.msra.mxu0 0
  %2866 = vmatprep.subr.bf16.mxu0 0
  %2867 = vmatpush1.bf16.msra.mxu0 0
  %2868 = vmatprep.subr.bf16.mxu0 0
  %2869 = vmatpush1.bf16.msra.mxu0 0
  %2870 = vmatprep.subr.bf16.mxu0 0
  %2871 = vmatpush1.bf16.msra.mxu0 0
  %2872 = vmatprep.subr.bf16.mxu0 0
  %2873 = vmatpush1.bf16.msra.mxu0 %v2599
  %2874 = vmatprep.subr.bf16.mxu0 0
  %2875 = vmatpush2.bf16.msra.mxu0 0
  %2876 = vmatprep.subr.bf16.mxu0 0
  %2877 = vmatpush2.bf16.msra.mxu0 0
  %2878 = vmatprep.subr.bf16.mxu0 0
  %2879 = vmatpush2.bf16.msra.mxu0 0
  %2880 = vmatprep.subr.bf16.mxu0 0
  %2881 = vmatpush2.bf16.msra.mxu0 0
  %2882 = vmatprep.subr.bf16.mxu0 0
  %2883 = vmatpush2.bf16.msra.mxu0 0
  %2884 = vmatprep.subr.bf16.mxu0 0
  %2885 = vmatpush2.bf16.msra.mxu0 0
  %2886 = vmatprep.subr.bf16.mxu0 0
  %2887 = vmatpush2.bf16.msra.mxu0 0
  %2888 = vmatprep.subr.bf16.mxu0 0
  %2889 = vmatpush2.bf16.msra.mxu0 0
  %2890 = vmatprep.mubr.bf16.mxu0 0
  %2891 = vmatmul.mubr.bf16.gmra.mxu0 %v2575
  %v2892 = vpop.f32.mrf.mxu0
  %v2893 = vadd.f32 %v2814, %v2892
  %v2894 = vpop.f32.mrf.mxu0
  %v2895 = vpop.f32.mrf.mxu0
  %v2896 = vadd.f32 %v2817, %v2895
  %v2897 = vpop.f32.mrf.mxu0
  %2898 = vmatprep.mubr.bf16.mxu0 0
  %2899 = vmatmul.mubr.bf16.gmra.mxu0 %v2578
  %v2900 = vpop.f32.mrf.mxu0
  %v2901 = vadd.f32 %v2822, %v2900
  %v2902 = vpop.f32.mrf.mxu0
  %v2903 = vpop.f32.mrf.mxu0
  %v2904 = vadd.f32 %v2825, %v2903
  %v2905 = vpop.f32.mrf.mxu0
  %2906 = vmatprep.mubr.bf16.mxu0 0
  %2907 = vmatmul.mubr.bf16.gmra.mxu0 %v2581
  %v2908 = vpop.f32.mrf.mxu0
  %v2909 = vadd.f32 %v2830, %v2908
  %v2910 = vpop.f32.mrf.mxu0
  %v2911 = vpop.f32.mrf.mxu0
  %v2912 = vadd.f32 %v2833, %v2911
  %v2913 = vpop.f32.mrf.mxu0
  %2914 = vmatprep.mubr.bf16.mxu0 0
  %2915 = vmatmul.mubr.bf16.gmra.mxu0 %v2584
  %v2916 = vpop.f32.mrf.mxu0
  %v2917 = vadd.f32 %v2838, %v2916
  %v2918 = vpop.f32.mrf.mxu0
  %v2919 = vpop.f32.mrf.mxu0
  %v2920 = vadd.f32 %v2841, %v2919
  %v2921 = vpop.f32.mrf.mxu0
  %2922 = vmatprep.mubr.bf16.mxu0 0
  %2923 = vmatmul.mubr.bf16.gmra.mxu0 %v2587
  %v2924 = vpop.f32.mrf.mxu0
  %v2925 = vadd.f32 %v2846, %v2924
  %v2926 = vpop.f32.mrf.mxu0
  %v2927 = vpop.f32.mrf.mxu0
  %v2928 = vadd.f32 %v2849, %v2927
  %v2929 = vpop.f32.mrf.mxu0
  %2930 = vmatprep.mubr.bf16.mxu0 0
  %2931 = vmatmul.mubr.bf16.gmra.mxu0 %v2590
  %v2932 = vpop.f32.mrf.mxu0
  %v2933 = vpop.f32.mrf.mxu0
  %v2934 = vpop.f32.mrf.mxu0
  %v2935 = vpop.f32.mrf.mxu0
  %2936 = vdwg.mxu0
  %s2937 = scalar_lea.vmem %s3, 792
  %v2938 = vld [vmem:[%s2937] sm:$0xff]
  %v2939 = vld [vmem:[%s2937 + $0x8] sm:$0xf]
  %v2940 = vld [vmem:[%s2937 + $0xc] sm:$0xff]
  %v2941 = vld [vmem:[%s2937 + $0x14] sm:$0xf]
  %v2942 = vld [vmem:[%s2937 + $0x18] sm:$0xff]
  %v2943 = vld [vmem:[%s2937 + $0x20] sm:$0xf]
  %v2944 = vld [vmem:[%s2937 + $0x24] sm:$0xff]
  %v2945 = vld [vmem:[%s2937 + $0x2c] sm:$0xf]
  %v2946 = vld [vmem:[%s2937 + $0x30] sm:$0xff]
  %v2947 = vld [vmem:[%s2937 + $0x38] sm:$0xf]
  %v2948 = vld [vmem:[%s2937 + $0x3c] sm:$0xff]
  %v2949 = vld [vmem:[%s2937 + $0x44] sm:$0xf]
  %v2950 = vld [vmem:[%s2937 + $0x48] sm:$0xff]
  %v2951 = vld [vmem:[%s2937 + $0x50] sm:$0xf]
  %v2952 = vld [vmem:[%s2937 + $0x54] sm:$0xff]
  %v2953 = vld [vmem:[%s2937 + $0x5c] sm:$0xf]
  %v2954 = vld [vmem:[%s2937 + $0x60] sm:$0xff]
  %v2955 = vld [vmem:[%s2937 + $0x68] sm:$0xf]
  %v2956 = vld [vmem:[%s2937 + $0x6c] sm:$0xff]
  %v2957 = vld [vmem:[%s2937 + $0x74] sm:$0xf]
  %v2958 = vld [vmem:[%s2937 + $0x78] sm:$0xff]
  %v2959 = vld [vmem:[%s2937 + $0x80] sm:$0xf]
  %v2960 = vld [vmem:[%s2937 + $0x84] sm:$0xff]
  %v2961 = vld [vmem:[%s2937 + $0x8c] sm:$0xf]
  %v2962 = vld [vmem:[%s2937 + $0x90] sm:$0xff]
  %v2963 = vld [vmem:[%s2937 + $0x98] sm:$0xf]
  %v2964 = vld [vmem:[%s2937 + $0x9c] sm:$0xff]
  %v2965 = vld [vmem:[%s2937 + $0xa4] sm:$0xf]
  %v2966 = vld [vmem:[%s2937 + $0xa8] sm:$0xff]
  %v2967 = vld [vmem:[%s2937 + $0xb0] sm:$0xf]
  %v2968 = vld [vmem:[%s2937 + $0xb4] sm:$0xff]
  %v2969 = vld [vmem:[%s2937 + $0xbc] sm:$0xf]
  %v2970 = vld [vmem:[%s2937 + $0xc0] sm:$0xff]
  %v2971 = vld [vmem:[%s2937 + $0xc8] sm:$0xf]
  %v2972 = vld [vmem:[%s2937 + $0xcc] sm:$0xff]
  %v2973 = vld [vmem:[%s2937 + $0xd4] sm:$0xf]
  %v2974 = vld [vmem:[%s2937 + $0xd8] sm:$0xff]
  %v2975 = vld [vmem:[%s2937 + $0xe0] sm:$0xf]
  %v2976 = vld [vmem:[%s2937 + $0xe4] sm:$0xff]
  %v2977 = vld [vmem:[%s2937 + $0xec] sm:$0xf]
  %v2978 = vld [vmem:[%s2937 + $0xf0] sm:$0xff]
  %v2979 = vld [vmem:[%s2937 + $0xf8] sm:$0xf]
  %v2980 = vld [vmem:[%s2937 + $0xfc] sm:$0xff]
  %v2981 = vld [vmem:[%s2937 + $0x104] sm:$0xf]
  %v2982 = vld [vmem:[%s2937 + $0x108] sm:$0xff]
  %v2983 = vld [vmem:[%s2937 + $0x110] sm:$0xf]
  %v2984 = vld [vmem:[%s2937 + $0x114] sm:$0xff]
  %v2985 = vld [vmem:[%s2937 + $0x11c] sm:$0xf]
  %v2986 = vld [vmem:[%s2937 + $0x120] sm:$0xff]
  %v2987 = vld [vmem:[%s2937 + $0x128] sm:$0xf]
  %v2988 = vld [vmem:[%s2937 + $0x12c] sm:$0xff]
  %v2989 = vld [vmem:[%s2937 + $0x134] sm:$0xf]
  %v2990 = vld [vmem:[%s2937 + $0x138] sm:$0xff]
  %v2991 = vld [vmem:[%s2937 + $0x140] sm:$0xf]
  %v2992 = vld [vmem:[%s2937 + $0x144] sm:$0xff]
  %v2993 = vld [vmem:[%s2937 + $0x14c] sm:$0xf]
  %v2994 = vld [vmem:[%s2937 + $0x150] sm:$0xff]
  %v2995 = vld [vmem:[%s2937 + $0x158] sm:$0xf]
  %v2996 = vld [vmem:[%s2937 + $0x15c] sm:$0xff]
  %v2997 = vld [vmem:[%s2937 + $0x164] sm:$0xf]
  %v2998 = vld [vmem:[%s2937 + $0x168] sm:$0xff]
  %v2999 = vld [vmem:[%s2937 + $0x170] sm:$0xf]
  %v3000 = vld [vmem:[%s2937 + $0x174] sm:$0xff]
  %v3001 = vld [vmem:[%s2937 + $0x17c] sm:$0xf]
  %v3002 = vld [vmem:[%s2937 + $0x180] sm:$0x33]
  %v3003 = vld [vmem:[%s2937 + $0x188] sm:$0x3]
  %v3070 = vunpack.c.l.b16 %v2938
  %v3071 = vunpack.c.h.b16 %v2938
  %v3072 = vunpack.c.l.b16 %v2939
  %v3073 = vunpack.c.l.b16 %v2940
  %v3074 = vunpack.c.h.b16 %v2940
  %v3075 = vunpack.c.l.b16 %v2941
  %v3076 = vunpack.c.l.b16 %v2942
  %v3077 = vunpack.c.h.b16 %v2942
  %v3078 = vunpack.c.l.b16 %v2943
  %v3079 = vunpack.c.l.b16 %v2944
  %v3080 = vunpack.c.h.b16 %v2944
  %v3081 = vunpack.c.l.b16 %v2945
  %v3082 = vunpack.c.l.b16 %v2946
  %v3083 = vunpack.c.h.b16 %v2946
  %v3084 = vunpack.c.l.b16 %v2947
  %v3085 = vunpack.c.l.b16 %v2948
  %v3086 = vunpack.c.h.b16 %v2948
  %v3087 = vunpack.c.l.b16 %v2949
  %v3088 = vunpack.c.l.b16 %v2950
  %v3089 = vunpack.c.h.b16 %v2950
  %v3090 = vunpack.c.l.b16 %v2951
  %v3091 = vunpack.c.l.b16 %v2952
  %v3092 = vunpack.c.h.b16 %v2952
  %v3093 = vunpack.c.l.b16 %v2953
  %v3094 = vunpack.c.l.b16 %v2954
  %v3095 = vunpack.c.h.b16 %v2954
  %v3096 = vunpack.c.l.b16 %v2955
  %v3097 = vunpack.c.l.b16 %v2956
  %v3098 = vunpack.c.h.b16 %v2956
  %v3099 = vunpack.c.l.b16 %v2957
  %v3100 = vunpack.c.l.b16 %v2958
  %v3101 = vunpack.c.h.b16 %v2958
  %v3102 = vunpack.c.l.b16 %v2959
  %v3103 = vunpack.c.l.b16 %v2960
  %v3104 = vunpack.c.h.b16 %v2960
  %v3105 = vunpack.c.l.b16 %v2961
  %v3106 = vunpack.c.l.b16 %v2962
  %v3107 = vunpack.c.h.b16 %v2962
  %v3108 = vunpack.c.l.b16 %v2963
  %v3109 = vunpack.c.l.b16 %v2964
  %v3110 = vunpack.c.h.b16 %v2964
  %v3111 = vunpack.c.l.b16 %v2965
  %v3112 = vunpack.c.l.b16 %v2966
  %v3113 = vunpack.c.h.b16 %v2966
  %v3114 = vunpack.c.l.b16 %v2967
  %v3115 = vunpack.c.l.b16 %v2968
  %v3116 = vunpack.c.h.b16 %v2968
  %v3117 = vunpack.c.l.b16 %v2969
  %v3118 = vunpack.c.l.b16 %v2970
  %v3119 = vunpack.c.h.b16 %v2970
  %v3120 = vunpack.c.l.b16 %v2971
  %v3121 = vunpack.c.l.b16 %v2972
  %v3122 = vunpack.c.h.b16 %v2972
  %v3123 = vunpack.c.l.b16 %v2973
  %v3124 = vunpack.c.l.b16 %v2974
  %v3125 = vunpack.c.h.b16 %v2974
  %v3126 = vunpack.c.l.b16 %v2975
  %v3127 = vunpack.c.l.b16 %v2976
  %v3128 = vunpack.c.h.b16 %v2976
  %v3129 = vunpack.c.l.b16 %v2977
  %v3130 = vunpack.c.l.b16 %v2978
  %v3131 = vunpack.c.h.b16 %v2978
  %v3132 = vunpack.c.l.b16 %v2979
  %v3133 = vunpack.c.l.b16 %v2980
  %v3134 = vunpack.c.h.b16 %v2980
  %v3135 = vunpack.c.l.b16 %v2981
  %v3136 = vunpack.c.l.b16 %v2982
  %v3137 = vunpack.c.h.b16 %v2982
  %v3138 = vunpack.c.l.b16 %v2983
  %v3139 = vunpack.c.l.b16 %v2984
  %v3140 = vunpack.c.h.b16 %v2984
  %v3141 = vunpack.c.l.b16 %v2985
  %v3142 = vunpack.c.l.b16 %v2986
  %v3143 = vunpack.c.h.b16 %v2986
  %v3144 = vunpack.c.l.b16 %v2987
  %v3145 = vunpack.c.l.b16 %v2988
  %v3146 = vunpack.c.h.b16 %v2988
  %v3147 = vunpack.c.l.b16 %v2989
  %v3148 = vunpack.c.l.b16 %v2990
  %v3149 = vunpack.c.h.b16 %v2990
  %v3150 = vunpack.c.l.b16 %v2991
  %v3151 = vunpack.c.l.b16 %v2992
  %v3152 = vunpack.c.h.b16 %v2992
  %v3153 = vunpack.c.l.b16 %v2993
  %v3154 = vunpack.c.l.b16 %v2994
  %v3155 = vunpack.c.h.b16 %v2994
  %v3156 = vunpack.c.l.b16 %v2995
  %v3157 = vunpack.c.l.b16 %v2996
  %v3158 = vunpack.c.h.b16 %v2996
  %v3159 = vunpack.c.l.b16 %v2997
  %v3160 = vunpack.c.l.b16 %v2998
  %v3161 = vunpack.c.h.b16 %v2998
  %v3162 = vunpack.c.l.b16 %v2999
  %v3163 = vunpack.c.l.b16 %v3000
  %v3164 = vunpack.c.h.b16 %v3000
  %v3165 = vunpack.c.l.b16 %v3001
  %v3166 = vunpack.c.l.b16 %v3002
  %v3167 = vunpack.c.h.b16 %v3002
  %v3168 = vunpack.c.l.b16 %v3003
  %v3169 = vpack.c.b16 %v3073, %v3070
  %v3170 = vpack.c.b16 %v3074, %v3071
  %v3171 = vpack.c.b16 %v3075, %v3072
  %v3172 = vpack.c.b16 %v3079, %v3076
  %v3173 = vpack.c.b16 %v3080, %v3077
  %v3174 = vpack.c.b16 %v3081, %v3078
  %v3175 = vpack.c.b16 %v3085, %v3082
  %v3176 = vpack.c.b16 %v3086, %v3083
  %v3177 = vpack.c.b16 %v3087, %v3084
  %v3178 = vpack.c.b16 %v3091, %v3088
  %v3179 = vpack.c.b16 %v3092, %v3089
  %v3180 = vpack.c.b16 %v3093, %v3090
  %v3181 = vpack.c.b16 %v3097, %v3094
  %v3182 = vpack.c.b16 %v3098, %v3095
  %v3183 = vpack.c.b16 %v3099, %v3096
  %v3184 = vpack.c.b16 %v3103, %v3100
  %v3185 = vpack.c.b16 %v3104, %v3101
  %v3186 = vpack.c.b16 %v3105, %v3102
  %v3187 = vpack.c.b16 %v3109, %v3106
  %v3188 = vpack.c.b16 %v3110, %v3107
  %v3189 = vpack.c.b16 %v3111, %v3108
  %v3190 = vpack.c.b16 %v3115, %v3112
  %v3191 = vpack.c.b16 %v3116, %v3113
  %v3192 = vpack.c.b16 %v3117, %v3114
  %v3193 = vpack.c.b16 %v3121, %v3118
  %v3194 = vpack.c.b16 %v3122, %v3119
  %v3195 = vpack.c.b16 %v3123, %v3120
  %v3196 = vpack.c.b16 %v3127, %v3124
  %v3197 = vpack.c.b16 %v3128, %v3125
  %v3198 = vpack.c.b16 %v3129, %v3126
  %v3199 = vpack.c.b16 %v3133, %v3130
  %v3200 = vpack.c.b16 %v3134, %v3131
  %v3201 = vpack.c.b16 %v3135, %v3132
  %v3202 = vpack.c.b16 %v3139, %v3136
  %v3203 = vpack.c.b16 %v3140, %v3137
  %v3204 = vpack.c.b16 %v3141, %v3138
  %v3205 = vpack.c.b16 %v3145, %v3142
  %v3206 = vpack.c.b16 %v3146, %v3143
  %v3207 = vpack.c.b16 %v3147, %v3144
  %v3208 = vpack.c.b16 %v3151, %v3148
  %v3209 = vpack.c.b16 %v3152, %v3149
  %v3210 = vpack.c.b16 %v3153, %v3150
  %v3211 = vpack.c.b16 %v3157, %v3154
  %v3212 = vpack.c.b16 %v3158, %v3155
  %v3213 = vpack.c.b16 %v3159, %v3156
  %v3214 = vpack.c.b16 %v3163, %v3160
  %v3215 = vpack.c.b16 %v3164, %v3161
  %v3216 = vpack.c.b16 %v3165, %v3162
  %v3217 = vpack.c.b16 %v3166, %v3166
  %v3218 = vpack.c.b16 %v3167, %v3167
  %v3219 = vpack.c.b16 %v3168, %v3168
  %v3269 = vsel %vm1946, %v1484, 0
  %v3272 = vsel %vm373, %v3217, 0
  %v3275 = vsel %vm373, %v3218, 0
  %v3278 = vsel %vm373, %v3219, 0
  %3280 = vmatprep.subr.bf16.mxu0 %v3191
  %3281 = vmatpush1.bf16.msra.mxu0 %v3190
  %3282 = vmatprep.subr.bf16.mxu0 %v3188
  %3283 = vmatpush1.bf16.msra.mxu0 %v3187
  %3284 = vmatprep.subr.bf16.mxu0 %v3185
  %3285 = vmatpush1.bf16.msra.mxu0 %v3184
  %3286 = vmatprep.subr.bf16.mxu0 %v3182
  %3287 = vmatpush1.bf16.msra.mxu0 %v3181
  %3288 = vmatprep.subr.bf16.mxu0 %v3179
  %3289 = vmatpush1.bf16.msra.mxu0 %v3178
  %3290 = vmatprep.subr.bf16.mxu0 %v3176
  %3291 = vmatpush1.bf16.msra.mxu0 %v3175
  %3292 = vmatprep.subr.bf16.mxu0 %v3173
  %3293 = vmatpush1.bf16.msra.mxu0 %v3172
  %3294 = vmatprep.subr.bf16.mxu0 %v3170
  %3295 = vmatpush1.bf16.msra.mxu0 %v3169
  %3296 = vmatprep.subr.bf16.mxu0 %v3215
  %3297 = vmatpush2.bf16.msra.mxu0 %v3214
  %3298 = vmatprep.subr.bf16.mxu0 %v3212
  %3299 = vmatpush2.bf16.msra.mxu0 %v3211
  %3300 = vmatprep.subr.bf16.mxu0 %v3209
  %3301 = vmatpush2.bf16.msra.mxu0 %v3208
  %3302 = vmatprep.subr.bf16.mxu0 %v3206
  %3303 = vmatpush2.bf16.msra.mxu0 %v3205
  %3304 = vmatprep.subr.bf16.mxu0 %v3203
  %3305 = vmatpush2.bf16.msra.mxu0 %v3202
  %3306 = vmatprep.subr.bf16.mxu0 %v3200
  %3307 = vmatpush2.bf16.msra.mxu0 %v3199
  %3308 = vmatprep.subr.bf16.mxu0 %v3197
  %3309 = vmatpush2.bf16.msra.mxu0 %v3196
  %3310 = vmatprep.subr.bf16.mxu0 %v3194
  %3311 = vmatpush2.bf16.msra.mxu0 %v3193
  %3312 = vmatprep.mubr.bf16.mxu0 %v1468
  %3313 = vmatmul.mubr.bf16.gmra.mxu0 %v1467
  %v3314 = vpop.f32.mrf.mxu0
  %v3315 = vadd.f32 0.0, %v3314
  %v3316 = vpop.f32.mrf.mxu0
  %v3317 = vadd.f32 0.0, %v3316
  %v3318 = vpop.f32.mrf.mxu0
  %v3319 = vadd.f32 0.0, %v3318
  %v3320 = vpop.f32.mrf.mxu0
  %v3321 = vadd.f32 0.0, %v3320
  %3322 = vmatprep.mubr.bf16.mxu0 %v1471
  %3323 = vmatmul.mubr.bf16.gmra.mxu0 %v1470
  %v3324 = vpop.f32.mrf.mxu0
  %v3325 = vadd.f32 0.0, %v3324
  %v3326 = vpop.f32.mrf.mxu0
  %v3327 = vadd.f32 0.0, %v3326
  %v3328 = vpop.f32.mrf.mxu0
  %v3329 = vadd.f32 0.0, %v3328
  %v3330 = vpop.f32.mrf.mxu0
  %v3331 = vadd.f32 0.0, %v3330
  %3332 = vmatprep.mubr.bf16.mxu0 %v1474
  %3333 = vmatmul.mubr.bf16.gmra.mxu0 %v1473
  %v3334 = vpop.f32.mrf.mxu0
  %v3335 = vadd.f32 0.0, %v3334
  %v3336 = vpop.f32.mrf.mxu0
  %v3337 = vadd.f32 0.0, %v3336
  %v3338 = vpop.f32.mrf.mxu0
  %v3339 = vadd.f32 0.0, %v3338
  %v3340 = vpop.f32.mrf.mxu0
  %v3341 = vadd.f32 0.0, %v3340
  %3342 = vmatprep.mubr.bf16.mxu0 %v1477
  %3343 = vmatmul.mubr.bf16.gmra.mxu0 %v1476
  %v3344 = vpop.f32.mrf.mxu0
  %v3345 = vadd.f32 0.0, %v3344
  %v3346 = vpop.f32.mrf.mxu0
  %v3347 = vadd.f32 0.0, %v3346
  %v3348 = vpop.f32.mrf.mxu0
  %v3349 = vadd.f32 0.0, %v3348
  %v3350 = vpop.f32.mrf.mxu0
  %v3351 = vadd.f32 0.0, %v3350
  %3352 = vmatprep.mubr.bf16.mxu0 %v1480
  %3353 = vmatmul.mubr.bf16.gmra.mxu0 %v1479
  %v3354 = vpop.f32.mrf.mxu0
  %v3355 = vadd.f32 0.0, %v3354
  %v3356 = vpop.f32.mrf.mxu0
  %v3357 = vadd.f32 0.0, %v3356
  %v3358 = vpop.f32.mrf.mxu0
  %v3359 = vadd.f32 0.0, %v3358
  %v3360 = vpop.f32.mrf.mxu0
  %v3361 = vadd.f32 0.0, %v3360
  %3362 = vmatprep.mubr.bf16.mxu0 %v1483
  %3363 = vmatmul.mubr.bf16.gmra.mxu0 %v1482
  %v3364 = vpop.f32.mrf.mxu0
  %v3365 = vpop.f32.mrf.mxu0
  %v3366 = vpop.f32.mrf.mxu0
  %v3367 = vpop.f32.mrf.mxu0
  %3368 = vdwg.mxu0
  %3369 = vmatprep.subr.bf16.mxu0 0
  %3370 = vmatpush1.bf16.msra.mxu0 0
  %3371 = vmatprep.subr.bf16.mxu0 0
  %3372 = vmatpush1.bf16.msra.mxu0 0
  %3373 = vmatprep.subr.bf16.mxu0 0
  %3374 = vmatpush1.bf16.msra.mxu0 0
  %3375 = vmatprep.subr.bf16.mxu0 0
  %3376 = vmatpush1.bf16.msra.mxu0 0
  %3377 = vmatprep.subr.bf16.mxu0 0
  %3378 = vmatpush1.bf16.msra.mxu0 0
  %3379 = vmatprep.subr.bf16.mxu0 0
  %3380 = vmatpush1.bf16.msra.mxu0 0
  %3381 = vmatprep.subr.bf16.mxu0 0
  %3382 = vmatpush1.bf16.msra.mxu0 0
  %3383 = vmatprep.subr.bf16.mxu0 %v3275
  %3384 = vmatpush1.bf16.msra.mxu0 %v3272
  %3385 = vmatprep.subr.bf16.mxu0 0
  %3386 = vmatpush2.bf16.msra.mxu0 0
  %3387 = vmatprep.subr.bf16.mxu0 0
  %3388 = vmatpush2.bf16.msra.mxu0 0
  %3389 = vmatprep.subr.bf16.mxu0 0
  %3390 = vmatpush2.bf16.msra.mxu0 0
  %3391 = vmatprep.subr.bf16.mxu0 0
  %3392 = vmatpush2.bf16.msra.mxu0 0
  %3393 = vmatprep.subr.bf16.mxu0 0
  %3394 = vmatpush2.bf16.msra.mxu0 0
  %3395 = vmatprep.subr.bf16.mxu0 0
  %3396 = vmatpush2.bf16.msra.mxu0 0
  %3397 = vmatprep.subr.bf16.mxu0 0
  %3398 = vmatpush2.bf16.msra.mxu0 0
  %3399 = vmatprep.subr.bf16.mxu0 0
  %3400 = vmatpush2.bf16.msra.mxu0 0
  %3401 = vmatprep.mubr.bf16.mxu0 0
  %3402 = vmatmul.mubr.bf16.gmra.mxu0 %v2578
  %v3403 = vpop.f32.mrf.mxu0
  %v3404 = vadd.f32 %v3315, %v3403
  %v3405 = vpop.f32.mrf.mxu0
  %v3406 = vadd.f32 %v3317, %v3405
  %v3407 = vpop.f32.mrf.mxu0
  %v3408 = vadd.f32 %v3319, %v3407
  %v3409 = vpop.f32.mrf.mxu0
  %v3410 = vadd.f32 %v3321, %v3409
  %3411 = vmatprep.mubr.bf16.mxu0 0
  %3412 = vmatmul.mubr.bf16.gmra.mxu0 %v2581
  %v3413 = vpop.f32.mrf.mxu0
  %v3414 = vadd.f32 %v3325, %v3413
  %v3415 = vpop.f32.mrf.mxu0
  %v3416 = vadd.f32 %v3327, %v3415
  %v3417 = vpop.f32.mrf.mxu0
  %v3418 = vadd.f32 %v3329, %v3417
  %v3419 = vpop.f32.mrf.mxu0
  %v3420 = vadd.f32 %v3331, %v3419
  %3421 = vmatprep.mubr.bf16.mxu0 0
  %3422 = vmatmul.mubr.bf16.gmra.mxu0 %v2584
  %v3423 = vpop.f32.mrf.mxu0
  %v3424 = vadd.f32 %v3335, %v3423
  %v3425 = vpop.f32.mrf.mxu0
  %v3426 = vadd.f32 %v3337, %v3425
  %v3427 = vpop.f32.mrf.mxu0
  %v3428 = vadd.f32 %v3339, %v3427
  %v3429 = vpop.f32.mrf.mxu0
  %v3430 = vadd.f32 %v3341, %v3429
  %3431 = vmatprep.mubr.bf16.mxu0 0
  %3432 = vmatmul.mubr.bf16.gmra.mxu0 %v2587
  %v3433 = vpop.f32.mrf.mxu0
  %v3434 = vadd.f32 %v3345, %v3433
  %v3435 = vpop.f32.mrf.mxu0
  %v3436 = vadd.f32 %v3347, %v3435
  %v3437 = vpop.f32.mrf.mxu0
  %v3438 = vadd.f32 %v3349, %v3437
  %v3439 = vpop.f32.mrf.mxu0
  %v3440 = vadd.f32 %v3351, %v3439
  %3441 = vmatprep.mubr.bf16.mxu0 0
  %3442 = vmatmul.mubr.bf16.gmra.mxu0 %v2590
  %v3443 = vpop.f32.mrf.mxu0
  %v3444 = vadd.f32 %v3355, %v3443
  %v3445 = vpop.f32.mrf.mxu0
  %v3446 = vadd.f32 %v3357, %v3445
  %v3447 = vpop.f32.mrf.mxu0
  %v3448 = vadd.f32 %v3359, %v3447
  %v3449 = vpop.f32.mrf.mxu0
  %v3450 = vadd.f32 %v3361, %v3449
  %3451 = vmatprep.mubr.bf16.mxu0 0
  %3452 = vmatmul.mubr.bf16.gmra.mxu0 %v3269
  %v3453 = vpop.f32.mrf.mxu0
  %v3454 = vpop.f32.mrf.mxu0
  %v3455 = vpop.f32.mrf.mxu0
  %v3456 = vpop.f32.mrf.mxu0
  %3457 = vdwg.mxu0
  %3458 = vmatprep.subr.bf16.mxu0 0
  %3459 = vmatpush1.bf16.msra.mxu0 %v3192
  %3460 = vmatprep.subr.bf16.mxu0 0
  %3461 = vmatpush1.bf16.msra.mxu0 %v3189
  %3462 = vmatprep.subr.bf16.mxu0 0
  %3463 = vmatpush1.bf16.msra.mxu0 %v3186
  %3464 = vmatprep.subr.bf16.mxu0 0
  %3465 = vmatpush1.bf16.msra.mxu0 %v3183
  %3466 = vmatprep.subr.bf16.mxu0 0
  %3467 = vmatpush1.bf16.msra.mxu0 %v3180
  %3468 = vmatprep.subr.bf16.mxu0 0
  %3469 = vmatpush1.bf16.msra.mxu0 %v3177
  %3470 = vmatprep.subr.bf16.mxu0 0
  %3471 = vmatpush1.bf16.msra.mxu0 %v3174
  %3472 = vmatprep.subr.bf16.mxu0 0
  %3473 = vmatpush1.bf16.msra.mxu0 %v3171
  %3474 = vmatprep.subr.bf16.mxu0 0
  %3475 = vmatpush2.bf16.msra.mxu0 %v3216
  %3476 = vmatprep.subr.bf16.mxu0 0
  %3477 = vmatpush2.bf16.msra.mxu0 %v3213
  %3478 = vmatprep.subr.bf16.mxu0 0
  %3479 = vmatpush2.bf16.msra.mxu0 %v3210
  %3480 = vmatprep.subr.bf16.mxu0 0
  %3481 = vmatpush2.bf16.msra.mxu0 %v3207
  %3482 = vmatprep.subr.bf16.mxu0 0
  %3483 = vmatpush2.bf16.msra.mxu0 %v3204
  %3484 = vmatprep.subr.bf16.mxu0 0
  %3485 = vmatpush2.bf16.msra.mxu0 %v3201
  %3486 = vmatprep.subr.bf16.mxu0 0
  %3487 = vmatpush2.bf16.msra.mxu0 %v3198
  %3488 = vmatprep.subr.bf16.mxu0 0
  %3489 = vmatpush2.bf16.msra.mxu0 %v3195
  %3490 = vmatprep.mubr.bf16.mxu0 %v1468
  %3491 = vmatmul.mubr.bf16.gmra.mxu0 %v1467
  %v3492 = vpop.f32.mrf.mxu0
  %v3493 = vadd.f32 0.0, %v3492
  %v3494 = vpop.f32.mrf.mxu0
  %v3495 = vpop.f32.mrf.mxu0
  %v3496 = vadd.f32 0.0, %v3495
  %v3497 = vpop.f32.mrf.mxu0
  %3498 = vmatprep.mubr.bf16.mxu0 %v1471
  %3499 = vmatmul.mubr.bf16.gmra.mxu0 %v1470
  %v3500 = vpop.f32.mrf.mxu0
  %v3501 = vadd.f32 0.0, %v3500
  %v3502 = vpop.f32.mrf.mxu0
  %v3503 = vpop.f32.mrf.mxu0
  %v3504 = vadd.f32 0.0, %v3503
  %v3505 = vpop.f32.mrf.mxu0
  %3506 = vmatprep.mubr.bf16.mxu0 %v1474
  %3507 = vmatmul.mubr.bf16.gmra.mxu0 %v1473
  %v3508 = vpop.f32.mrf.mxu0
  %v3509 = vadd.f32 0.0, %v3508
  %v3510 = vpop.f32.mrf.mxu0
  %v3511 = vpop.f32.mrf.mxu0
  %v3512 = vadd.f32 0.0, %v3511
  %v3513 = vpop.f32.mrf.mxu0
  %3514 = vmatprep.mubr.bf16.mxu0 %v1477
  %3515 = vmatmul.mubr.bf16.gmra.mxu0 %v1476
  %v3516 = vpop.f32.mrf.mxu0
  %v3517 = vadd.f32 0.0, %v3516
  %v3518 = vpop.f32.mrf.mxu0
  %v3519 = vpop.f32.mrf.mxu0
  %v3520 = vadd.f32 0.0, %v3519
  %v3521 = vpop.f32.mrf.mxu0
  %3522 = vmatprep.mubr.bf16.mxu0 %v1480
  %3523 = vmatmul.mubr.bf16.gmra.mxu0 %v1479
  %v3524 = vpop.f32.mrf.mxu0
  %v3525 = vadd.f32 0.0, %v3524
  %v3526 = vpop.f32.mrf.mxu0
  %v3527 = vpop.f32.mrf.mxu0
  %v3528 = vadd.f32 0.0, %v3527
  %v3529 = vpop.f32.mrf.mxu0
  %3530 = vmatprep.mubr.bf16.mxu0 %v1483
  %3531 = vmatmul.mubr.bf16.gmra.mxu0 %v1482
  %v3532 = vpop.f32.mrf.mxu0
  %v3533 = vpop.f32.mrf.mxu0
  %v3534 = vpop.f32.mrf.mxu0
  %v3535 = vpop.f32.mrf.mxu0
  %3536 = vdwg.mxu0
  %3537 = vmatprep.subr.bf16.mxu0 0
  %3538 = vmatpush1.bf16.msra.mxu0 0
  %3539 = vmatprep.subr.bf16.mxu0 0
  %3540 = vmatpush1.bf16.msra.mxu0 0
  %3541 = vmatprep.subr.bf16.mxu0 0
  %3542 = vmatpush1.bf16.msra.mxu0 0
  %3543 = vmatprep.subr.bf16.mxu0 0
  %3544 = vmatpush1.bf16.msra.mxu0 0
  %3545 = vmatprep.subr.bf16.mxu0 0
  %3546 = vmatpush1.bf16.msra.mxu0 0
  %3547 = vmatprep.subr.bf16.mxu0 0
  %3548 = vmatpush1.bf16.msra.mxu0 0
  %3549 = vmatprep.subr.bf16.mxu0 0
  %3550 = vmatpush1.bf16.msra.mxu0 0
  %3551 = vmatprep.subr.bf16.mxu0 0
  %3552 = vmatpush1.bf16.msra.mxu0 %v3278
  %3553 = vmatprep.subr.bf16.mxu0 0
  %3554 = vmatpush2.bf16.msra.mxu0 0
  %3555 = vmatprep.subr.bf16.mxu0 0
  %3556 = vmatpush2.bf16.msra.mxu0 0
  %3557 = vmatprep.subr.bf16.mxu0 0
  %3558 = vmatpush2.bf16.msra.mxu0 0
  %3559 = vmatprep.subr.bf16.mxu0 0
  %3560 = vmatpush2.bf16.msra.mxu0 0
  %3561 = vmatprep.subr.bf16.mxu0 0
  %3562 = vmatpush2.bf16.msra.mxu0 0
  %3563 = vmatprep.subr.bf16.mxu0 0
  %3564 = vmatpush2.bf16.msra.mxu0 0
  %3565 = vmatprep.subr.bf16.mxu0 0
  %3566 = vmatpush2.bf16.msra.mxu0 0
  %3567 = vmatprep.subr.bf16.mxu0 0
  %3568 = vmatpush2.bf16.msra.mxu0 0
  %3569 = vmatprep.mubr.bf16.mxu0 0
  %3570 = vmatmul.mubr.bf16.gmra.mxu0 %v2578
  %v3571 = vpop.f32.mrf.mxu0
  %v3572 = vadd.f32 %v3493, %v3571
  %v3573 = vpop.f32.mrf.mxu0
  %v3574 = vpop.f32.mrf.mxu0
  %v3575 = vadd.f32 %v3496, %v3574
  %v3576 = vpop.f32.mrf.mxu0
  %3577 = vmatprep.mubr.bf16.mxu0 0
  %3578 = vmatmul.mubr.bf16.gmra.mxu0 %v2581
  %v3579 = vpop.f32.mrf.mxu0
  %v3580 = vadd.f32 %v3501, %v3579
  %v3581 = vpop.f32.mrf.mxu0
  %v3582 = vpop.f32.mrf.mxu0
  %v3583 = vadd.f32 %v3504, %v3582
  %v3584 = vpop.f32.mrf.mxu0
  %3585 = vmatprep.mubr.bf16.mxu0 0
  %3586 = vmatmul.mubr.bf16.gmra.mxu0 %v2584
  %v3587 = vpop.f32.mrf.mxu0
  %v3588 = vadd.f32 %v3509, %v3587
  %v3589 = vpop.f32.mrf.mxu0
  %v3590 = vpop.f32.mrf.mxu0
  %v3591 = vadd.f32 %v3512, %v3590
  %v3592 = vpop.f32.mrf.mxu0
  %3593 = vmatprep.mubr.bf16.mxu0 0
  %3594 = vmatmul.mubr.bf16.gmra.mxu0 %v2587
  %v3595 = vpop.f32.mrf.mxu0
  %v3596 = vadd.f32 %v3517, %v3595
  %v3597 = vpop.f32.mrf.mxu0
  %v3598 = vpop.f32.mrf.mxu0
  %v3599 = vadd.f32 %v3520, %v3598
  %v3600 = vpop.f32.mrf.mxu0
  %3601 = vmatprep.mubr.bf16.mxu0 0
  %3602 = vmatmul.mubr.bf16.gmra.mxu0 %v2590
  %v3603 = vpop.f32.mrf.mxu0
  %v3604 = vadd.f32 %v3525, %v3603
  %v3605 = vpop.f32.mrf.mxu0
  %v3606 = vpop.f32.mrf.mxu0
  %v3607 = vadd.f32 %v3528, %v3606
  %v3608 = vpop.f32.mrf.mxu0
  %3609 = vmatprep.mubr.bf16.mxu0 0
  %3610 = vmatmul.mubr.bf16.gmra.mxu0 %v3269
  %v3611 = vpop.f32.mrf.mxu0
  %v3612 = vpop.f32.mrf.mxu0
  %v3613 = vpop.f32.mrf.mxu0
  %v3614 = vpop.f32.mrf.mxu0
  %3615 = vdwg.mxu0
  %v3616 = vadd.f32 %v2725, %v3404
  %v3617 = vadd.f32 %v2727, %v3406
  %v3618 = vadd.f32 %v2893, %v3572
  %v3619 = vadd.f32 %v2729, %v3408
  %v3620 = vadd.f32 %v2731, %v3410
  %v3621 = vadd.f32 %v2896, %v3575
  %v3622 = vadd.f32 %v2735, %v3414
  %v3623 = vadd.f32 %v2737, %v3416
  %v3624 = vadd.f32 %v2901, %v3580
  %v3625 = vadd.f32 %v2739, %v3418
  %v3626 = vadd.f32 %v2741, %v3420
  %v3627 = vadd.f32 %v2904, %v3583
  %v3628 = vadd.f32 %v2745, %v3424
  %v3629 = vadd.f32 %v2747, %v3426
  %v3630 = vadd.f32 %v2909, %v3588
  %v3631 = vadd.f32 %v2749, %v3428
  %v3632 = vadd.f32 %v2751, %v3430
  %v3633 = vadd.f32 %v2912, %v3591
  %v3634 = vadd.f32 %v2755, %v3434
  %v3635 = vadd.f32 %v2757, %v3436
  %v3636 = vadd.f32 %v2917, %v3596
  %v3637 = vadd.f32 %v2759, %v3438
  %v3638 = vadd.f32 %v2761, %v3440
  %v3639 = vadd.f32 %v2920, %v3599
  %v3640 = vadd.f32 %v2765, %v3444
  %v3641 = vadd.f32 %v2767, %v3446
  %v3642 = vadd.f32 %v2925, %v3604
  %v3643 = vadd.f32 %v2769, %v3448
  %v3644 = vadd.f32 %v2771, %v3450
  %v3645 = vadd.f32 %v2928, %v3607
  %v3646 = vld [vmem:[%s4] sm:$0x7]
  %v3648 = vlaneseq
  %v3649 = vshrl.u32 %v3648, 7
  %v3650 = vsub.s32 0, %v3649
  %v3651 = vrot.slane %v3646, %v3650
  %v3652 = vlaneseq
  %v3653 = vshrl.u32 %v3652, 7
  %v3654 = vsub.s32 1, %v3653
  %v3655 = vrot.slane %v3646, %v3654
  %v3656 = vlaneseq
  %v3657 = vshrl.u32 %v3656, 7
  %v3658 = vsub.s32 2, %v3657
  %v3659 = vrot.slane %v3646, %v3658
  %v3663 = vadd.f32 %v3616, %v3651
  %v3664 = vadd.f32 %v3617, %v3655
  %v3665 = vadd.f32 %v3618, %v3659
  %v3666 = vadd.f32 %v3619, %v3651
  %v3667 = vadd.f32 %v3620, %v3655
  %v3668 = vadd.f32 %v3621, %v3659
  %v3669 = vadd.f32 %v3622, %v3651
  %v3670 = vadd.f32 %v3623, %v3655
  %v3671 = vadd.f32 %v3624, %v3659
  %v3672 = vadd.f32 %v3625, %v3651
  %v3673 = vadd.f32 %v3626, %v3655
  %v3674 = vadd.f32 %v3627, %v3659
  %v3675 = vadd.f32 %v3628, %v3651
  %v3676 = vadd.f32 %v3629, %v3655
  %v3677 = vadd.f32 %v3630, %v3659
  %v3678 = vadd.f32 %v3631, %v3651
  %v3679 = vadd.f32 %v3632, %v3655
  %v3680 = vadd.f32 %v3633, %v3659
  %v3681 = vadd.f32 %v3634, %v3651
  %v3682 = vadd.f32 %v3635, %v3655
  %v3683 = vadd.f32 %v3636, %v3659
  %v3684 = vadd.f32 %v3637, %v3651
  %v3685 = vadd.f32 %v3638, %v3655
  %v3686 = vadd.f32 %v3639, %v3659
  %v3687 = vadd.f32 %v3640, %v3651
  %v3688 = vadd.f32 %v3641, %v3655
  %v3689 = vadd.f32 %v3642, %v3659
  %v3690 = vadd.f32 %v3643, %v3651
  %v3691 = vadd.f32 %v3644, %v3655
  %v3692 = vadd.f32 %v3645, %v3659
  %v3693 = vmax.f32 %v3663, 0.0
  %v3694 = vmax.f32 %v3664, 0.0
  %v3695 = vmax.f32 %v3665, 0.0
  %v3696 = vmax.f32 %v3666, 0.0
  %v3697 = vmax.f32 %v3667, 0.0
  %v3698 = vmax.f32 %v3668, 0.0
  %v3699 = vmax.f32 %v3669, 0.0
  %v3700 = vmax.f32 %v3670, 0.0
  %v3701 = vmax.f32 %v3671, 0.0
  %v3702 = vmax.f32 %v3672, 0.0
  %v3703 = vmax.f32 %v3673, 0.0
  %v3704 = vmax.f32 %v3674, 0.0
  %v3705 = vmax.f32 %v3675, 0.0
  %v3706 = vmax.f32 %v3676, 0.0
  %v3707 = vmax.f32 %v3677, 0.0
  %v3708 = vmax.f32 %v3678, 0.0
  %v3709 = vmax.f32 %v3679, 0.0
  %v3710 = vmax.f32 %v3680, 0.0
  %v3711 = vmax.f32 %v3681, 0.0
  %v3712 = vmax.f32 %v3682, 0.0
  %v3713 = vmax.f32 %v3683, 0.0
  %v3714 = vmax.f32 %v3684, 0.0
  %v3715 = vmax.f32 %v3685, 0.0
  %v3716 = vmax.f32 %v3686, 0.0
  %v3717 = vmax.f32 %v3687, 0.0
  %v3718 = vmax.f32 %v3688, 0.0
  %v3719 = vmax.f32 %v3689, 0.0
  %v3720 = vmax.f32 %v3690, 0.0
  %v3721 = vmax.f32 %v3691, 0.0
  %v3722 = vmax.f32 %v3692, 0.0
  %3743 = vrot.lane.b32.xlu0 %v3694, 64
  %v3744 = vpop.permute.xlu0 %3743
  %3745 = vrot.lane.b32.xlu0 %v3695, 64
  %v3746 = vpop.permute.xlu0 %3745
  %3747 = vrot.lane.b32.xlu0 %v3697, 64
  %v3748 = vpop.permute.xlu0 %3747
  %3749 = vrot.lane.b32.xlu0 %v3698, 64
  %v3750 = vpop.permute.xlu0 %3749
  %3751 = vrot.lane.b32.xlu0 %v3700, 64
  %v3752 = vpop.permute.xlu0 %3751
  %3753 = vrot.lane.b32.xlu0 %v3701, 64
  %v3754 = vpop.permute.xlu0 %3753
  %3755 = vrot.lane.b32.xlu0 %v3703, 64
  %v3756 = vpop.permute.xlu0 %3755
  %3757 = vrot.lane.b32.xlu0 %v3704, 64
  %v3758 = vpop.permute.xlu0 %3757
  %3759 = vrot.lane.b32.xlu0 %v3706, 64
  %v3760 = vpop.permute.xlu0 %3759
  %3761 = vrot.lane.b32.xlu0 %v3707, 64
  %v3762 = vpop.permute.xlu0 %3761
  %3763 = vrot.lane.b32.xlu0 %v3709, 64
  %v3764 = vpop.permute.xlu0 %3763
  %3765 = vrot.lane.b32.xlu0 %v3710, 64
  %v3766 = vpop.permute.xlu0 %3765
  %3767 = vrot.lane.b32.xlu0 %v3712, 64
  %v3768 = vpop.permute.xlu0 %3767
  %3769 = vrot.lane.b32.xlu0 %v3713, 64
  %v3770 = vpop.permute.xlu0 %3769
  %3771 = vrot.lane.b32.xlu0 %v3715, 64
  %v3772 = vpop.permute.xlu0 %3771
  %3773 = vrot.lane.b32.xlu0 %v3716, 64
  %v3774 = vpop.permute.xlu0 %3773
  %3775 = vrot.lane.b32.xlu0 %v3718, 64
  %v3776 = vpop.permute.xlu0 %3775
  %3777 = vrot.lane.b32.xlu0 %v3719, 64
  %v3778 = vpop.permute.xlu0 %3777
  %3779 = vrot.lane.b32.xlu0 %v3721, 64
  %v3780 = vpop.permute.xlu0 %3779
  %3781 = vrot.lane.b32.xlu0 %v3722, 64
  %v3782 = vpop.permute.xlu0 %3781
  %vm3783 = vcmask 523264
  %v3784 = vsel %vm3783, %v3744, %v3746
  %v3785 = vsel %vm3783, %v3748, %v3750
  %v3786 = vsel %vm3783, %v3752, %v3754
  %v3787 = vsel %vm3783, %v3756, %v3758
  %v3788 = vsel %vm3783, %v3760, %v3762
  %v3789 = vsel %vm3783, %v3764, %v3766
  %v3790 = vsel %vm3783, %v3768, %v3770
  %v3791 = vsel %vm3783, %v3772, %v3774
  %v3792 = vsel %vm3783, %v3776, %v3778
  %v3793 = vsel %vm3783, %v3780, %v3782
  %v3814 = vmax.f32 %v3693, %v3784
  %v3815 = vmax.f32 %v3694, %v3746
  %v3816 = vmax.f32 %v3696, %v3785
  %v3817 = vmax.f32 %v3697, %v3750
  %v3818 = vmax.f32 %v3699, %v3786
  %v3819 = vmax.f32 %v3700, %v3754
  %v3820 = vmax.f32 %v3702, %v3787
  %v3821 = vmax.f32 %v3703, %v3758
  %v3822 = vmax.f32 %v3705, %v3788
  %v3823 = vmax.f32 %v3706, %v3762
  %v3824 = vmax.f32 %v3708, %v3789
  %v3825 = vmax.f32 %v3709, %v3766
  %v3826 = vmax.f32 %v3711, %v3790
  %v3827 = vmax.f32 %v3712, %v3770
  %v3828 = vmax.f32 %v3714, %v3791
  %v3829 = vmax.f32 %v3715, %v3774
  %v3830 = vmax.f32 %v3717, %v3792
  %v3831 = vmax.f32 %v3718, %v3778
  %v3832 = vmax.f32 %v3720, %v3793
  %v3833 = vmax.f32 %v3721, %v3782
  %v3834 = vmax.f32 %v3814, %v3816
  %v3835 = vmax.f32 %v3815, %v3817
  %v3836 = vmax.f32 %v3818, %v3820
  %v3837 = vmax.f32 %v3819, %v3821
  %v3838 = vmax.f32 %v3822, %v3824
  %v3839 = vmax.f32 %v3823, %v3825
  %v3840 = vmax.f32 %v3826, %v3828
  %v3841 = vmax.f32 %v3827, %v3829
  %v3842 = vmax.f32 %v3830, %v3832
  %v3843 = vmax.f32 %v3831, %v3833
  %3854 = vrot.lane.b32.xlu0 %v3834, 96
  %v3855 = vpop.permute.xlu0 %3854
  %3856 = vrot.lane.b32.xlu0 %v3835, 96
  %v3857 = vpop.permute.xlu0 %3856
  %3858 = vrot.lane.b32.xlu0 %v3836, 96
  %v3859 = vpop.permute.xlu0 %3858
  %3860 = vrot.lane.b32.xlu0 %v3837, 96
  %v3861 = vpop.permute.xlu0 %3860
  %3862 = vrot.lane.b32.xlu0 %v3838, 96
  %v3863 = vpop.permute.xlu0 %3862
  %3864 = vrot.lane.b32.xlu0 %v3839, 96
  %v3865 = vpop.permute.xlu0 %3864
  %3866 = vrot.lane.b32.xlu0 %v3840, 96
  %v3867 = vpop.permute.xlu0 %3866
  %3868 = vrot.lane.b32.xlu0 %v3841, 96
  %v3869 = vpop.permute.xlu0 %3868
  %3870 = vrot.lane.b32.xlu0 %v3842, 96
  %v3871 = vpop.permute.xlu0 %3870
  %3872 = vrot.lane.b32.xlu0 %v3843, 96
  %v3873 = vpop.permute.xlu0 %3872
  %vm3874 = vcmask 785408
  %v3875 = vsel %vm3874, %v3855, %v3857
  %v3876 = vsel %vm3874, %v3859, %v3861
  %v3877 = vsel %vm3874, %v3863, %v3865
  %v3878 = vsel %vm3874, %v3867, %v3869
  %v3879 = vsel %vm3874, %v3871, %v3873
  %v3885 = vadd.f32 %v3834, %v3875
  %v3886 = vadd.f32 %v3836, %v3876
  %v3887 = vadd.f32 %v3838, %v3877
  %v3888 = vadd.f32 %v3840, %v3878
  %v3889 = vadd.f32 %v3842, %v3879
  %v3890 = vadd.f32 %v3885, %v3886
  %v3891 = vadd.f32 %v3886, %v3887
  %v3892 = vadd.f32 %v3887, %v3888
  %v3893 = vadd.f32 %v3888, %v3889
  %v3894 = vmul.f32 %v3890, 0.25
  %v3895 = vmul.f32 %v3891, 0.25
  %v3896 = vmul.f32 %v3892, 0.25
  %v3897 = vmul.f32 %v3893, 0.25
  %v3898 = vpack.c.bf16 %v3894, %v3894
  %v3899 = vpack.c.bf16 %v3895, %v3895
  %v3900 = vpack.c.bf16 %v3896, %v3896
  %v3901 = vpack.c.bf16 %v3897, %v3897
  %v3902 = vld [vmem:[%s5] sm:$0xff]
  %v3903 = vld [vmem:[%s5 + $0x8] sm:$0xf]
  %v3904 = vld [vmem:[%s5 + $0xc] sm:$0xff]
  %v3905 = vld [vmem:[%s5 + $0x14] sm:$0xf]
  %v3906 = vld [vmem:[%s5 + $0x18] sm:$0xff]
  %v3907 = vld [vmem:[%s5 + $0x20] sm:$0xf]
  %v3908 = vld [vmem:[%s5 + $0x24] sm:$0xff]
  %v3909 = vld [vmem:[%s5 + $0x2c] sm:$0xf]
  %v3910 = vld [vmem:[%s5 + $0x30] sm:$0xff]
  %v3911 = vld [vmem:[%s5 + $0x38] sm:$0xf]
  %v3912 = vld [vmem:[%s5 + $0x3c] sm:$0xff]
  %v3913 = vld [vmem:[%s5 + $0x44] sm:$0xf]
  %v3914 = vld [vmem:[%s5 + $0x48] sm:$0xff]
  %v3915 = vld [vmem:[%s5 + $0x50] sm:$0xf]
  %v3916 = vld [vmem:[%s5 + $0x54] sm:$0xff]
  %v3917 = vld [vmem:[%s5 + $0x5c] sm:$0xf]
  %v3918 = vld [vmem:[%s5 + $0x60] sm:$0xff]
  %v3919 = vld [vmem:[%s5 + $0x68] sm:$0xf]
  %v3920 = vld [vmem:[%s5 + $0x6c] sm:$0xff]
  %v3921 = vld [vmem:[%s5 + $0x74] sm:$0xf]
  %v3922 = vld [vmem:[%s5 + $0x78] sm:$0xff]
  %v3923 = vld [vmem:[%s5 + $0x80] sm:$0xf]
  %v3924 = vld [vmem:[%s5 + $0x84] sm:$0xff]
  %v3925 = vld [vmem:[%s5 + $0x8c] sm:$0xf]
  %v3926 = vld [vmem:[%s5 + $0x90] sm:$0xff]
  %v3927 = vld [vmem:[%s5 + $0x98] sm:$0xf]
  %v3928 = vld [vmem:[%s5 + $0x9c] sm:$0xff]
  %v3929 = vld [vmem:[%s5 + $0xa4] sm:$0xf]
  %v3930 = vld [vmem:[%s5 + $0xa8] sm:$0xff]
  %v3931 = vld [vmem:[%s5 + $0xb0] sm:$0xf]
  %v3932 = vld [vmem:[%s5 + $0xb4] sm:$0xff]
  %v3933 = vld [vmem:[%s5 + $0xbc] sm:$0xf]
  %v3934 = vld [vmem:[%s5 + $0xc0] sm:$0xff]
  %v3935 = vld [vmem:[%s5 + $0xc8] sm:$0xf]
  %v3936 = vld [vmem:[%s5 + $0xcc] sm:$0xff]
  %v3937 = vld [vmem:[%s5 + $0xd4] sm:$0xf]
  %v3938 = vld [vmem:[%s5 + $0xd8] sm:$0xff]
  %v3939 = vld [vmem:[%s5 + $0xe0] sm:$0xf]
  %v3940 = vld [vmem:[%s5 + $0xe4] sm:$0xff]
  %v3941 = vld [vmem:[%s5 + $0xec] sm:$0xf]
  %v3942 = vld [vmem:[%s5 + $0xf0] sm:$0xff]
  %v3943 = vld [vmem:[%s5 + $0xf8] sm:$0xf]
  %v3944 = vld [vmem:[%s5 + $0xfc] sm:$0xff]
  %v3945 = vld [vmem:[%s5 + $0x104] sm:$0xf]
  %v3946 = vld [vmem:[%s5 + $0x108] sm:$0xff]
  %v3947 = vld [vmem:[%s5 + $0x110] sm:$0xf]
  %v3948 = vld [vmem:[%s5 + $0x114] sm:$0xff]
  %v3949 = vld [vmem:[%s5 + $0x11c] sm:$0xf]
  %v3950 = vld [vmem:[%s5 + $0x120] sm:$0xff]
  %v3951 = vld [vmem:[%s5 + $0x128] sm:$0xf]
  %v3952 = vld [vmem:[%s5 + $0x12c] sm:$0xff]
  %v3953 = vld [vmem:[%s5 + $0x134] sm:$0xf]
  %v3954 = vld [vmem:[%s5 + $0x138] sm:$0xff]
  %v3955 = vld [vmem:[%s5 + $0x140] sm:$0xf]
  %v3956 = vld [vmem:[%s5 + $0x144] sm:$0xff]
  %v3957 = vld [vmem:[%s5 + $0x14c] sm:$0xf]
  %v3958 = vld [vmem:[%s5 + $0x150] sm:$0xff]
  %v3959 = vld [vmem:[%s5 + $0x158] sm:$0xf]
  %v3960 = vld [vmem:[%s5 + $0x15c] sm:$0xff]
  %v3961 = vld [vmem:[%s5 + $0x164] sm:$0xf]
  %v3962 = vld [vmem:[%s5 + $0x168] sm:$0xff]
  %v3963 = vld [vmem:[%s5 + $0x170] sm:$0xf]
  %v3964 = vld [vmem:[%s5 + $0x174] sm:$0xff]
  %v3965 = vld [vmem:[%s5 + $0x17c] sm:$0xf]
  %v3966 = vld [vmem:[%s5 + $0x180] sm:$0xff]
  %v3967 = vld [vmem:[%s5 + $0x188] sm:$0xf]
  %v3968 = vld [vmem:[%s5 + $0x18c] sm:$0xff]
  %v3969 = vld [vmem:[%s5 + $0x194] sm:$0xf]
  %v3970 = vld [vmem:[%s5 + $0x198] sm:$0xff]
  %v3971 = vld [vmem:[%s5 + $0x1a0] sm:$0xf]
  %v3972 = vld [vmem:[%s5 + $0x1a4] sm:$0xff]
  %v3973 = vld [vmem:[%s5 + $0x1ac] sm:$0xf]
  %v3974 = vld [vmem:[%s5 + $0x1b0] sm:$0xff]
  %v3975 = vld [vmem:[%s5 + $0x1b8] sm:$0xf]
  %v3976 = vld [vmem:[%s5 + $0x1bc] sm:$0xff]
  %v3977 = vld [vmem:[%s5 + $0x1c4] sm:$0xf]
  %v3978 = vld [vmem:[%s5 + $0x1c8] sm:$0xff]
  %v3979 = vld [vmem:[%s5 + $0x1d0] sm:$0xf]
  %v3980 = vld [vmem:[%s5 + $0x1d4] sm:$0xff]
  %v3981 = vld [vmem:[%s5 + $0x1dc] sm:$0xf]
  %v3982 = vld [vmem:[%s5 + $0x1e0] sm:$0xff]
  %v3983 = vld [vmem:[%s5 + $0x1e8] sm:$0xf]
  %v3984 = vld [vmem:[%s5 + $0x1ec] sm:$0xff]
  %v3985 = vld [vmem:[%s5 + $0x1f4] sm:$0xf]
  %v3986 = vld [vmem:[%s5 + $0x1f8] sm:$0xff]
  %v3987 = vld [vmem:[%s5 + $0x200] sm:$0xf]
  %v3988 = vld [vmem:[%s5 + $0x204] sm:$0xff]
  %v3989 = vld [vmem:[%s5 + $0x20c] sm:$0xf]
  %v3990 = vld [vmem:[%s5 + $0x210] sm:$0xff]
  %v3991 = vld [vmem:[%s5 + $0x218] sm:$0xf]
  %v3992 = vld [vmem:[%s5 + $0x21c] sm:$0xff]
  %v3993 = vld [vmem:[%s5 + $0x224] sm:$0xf]
  %v3994 = vld [vmem:[%s5 + $0x228] sm:$0xff]
  %v3995 = vld [vmem:[%s5 + $0x230] sm:$0xf]
  %v3996 = vld [vmem:[%s5 + $0x234] sm:$0xff]
  %v3997 = vld [vmem:[%s5 + $0x23c] sm:$0xf]
  %v3998 = vld [vmem:[%s5 + $0x240] sm:$0xff]
  %v3999 = vld [vmem:[%s5 + $0x248] sm:$0xf]
  %v4000 = vld [vmem:[%s5 + $0x24c] sm:$0xff]
  %v4001 = vld [vmem:[%s5 + $0x254] sm:$0xf]
  %v4002 = vld [vmem:[%s5 + $0x258] sm:$0xff]
  %v4003 = vld [vmem:[%s5 + $0x260] sm:$0xf]
  %v4004 = vld [vmem:[%s5 + $0x264] sm:$0xff]
  %v4005 = vld [vmem:[%s5 + $0x26c] sm:$0xf]
  %v4006 = vld [vmem:[%s5 + $0x270] sm:$0xff]
  %v4007 = vld [vmem:[%s5 + $0x278] sm:$0xf]
  %v4008 = vld [vmem:[%s5 + $0x27c] sm:$0xff]
  %v4009 = vld [vmem:[%s5 + $0x284] sm:$0xf]
  %v4010 = vld [vmem:[%s5 + $0x288] sm:$0xff]
  %v4011 = vld [vmem:[%s5 + $0x290] sm:$0xf]
  %v4012 = vld [vmem:[%s5 + $0x294] sm:$0xff]
  %v4013 = vld [vmem:[%s5 + $0x29c] sm:$0xf]
  %v4014 = vld [vmem:[%s5 + $0x2a0] sm:$0xff]
  %v4015 = vld [vmem:[%s5 + $0x2a8] sm:$0xf]
  %v4016 = vld [vmem:[%s5 + $0x2ac] sm:$0xff]
  %v4017 = vld [vmem:[%s5 + $0x2b4] sm:$0xf]
  %v4018 = vld [vmem:[%s5 + $0x2b8] sm:$0xff]
  %v4019 = vld [vmem:[%s5 + $0x2c0] sm:$0xf]
  %v4020 = vld [vmem:[%s5 + $0x2c4] sm:$0xff]
  %v4021 = vld [vmem:[%s5 + $0x2cc] sm:$0xf]
  %v4022 = vld [vmem:[%s5 + $0x2d0] sm:$0xff]
  %v4023 = vld [vmem:[%s5 + $0x2d8] sm:$0xf]
  %v4024 = vld [vmem:[%s5 + $0x2dc] sm:$0xff]
  %v4025 = vld [vmem:[%s5 + $0x2e4] sm:$0xf]
  %v4026 = vld [vmem:[%s5 + $0x2e8] sm:$0xff]
  %v4027 = vld [vmem:[%s5 + $0x2f0] sm:$0xf]
  %v4028 = vld [vmem:[%s5 + $0x2f4] sm:$0xff]
  %v4029 = vld [vmem:[%s5 + $0x2fc] sm:$0xf]
  %v4030 = vld [vmem:[%s6] sm:$0x7]
  %v4032 = vlaneseq
  %v4033 = vshrl.u32 %v4032, 7
  %v4034 = vsub.s32 0, %v4033
  %v4035 = vrot.slane %v4030, %v4034
  %v4036 = vlaneseq
  %v4037 = vshrl.u32 %v4036, 7
  %v4038 = vsub.s32 1, %v4037
  %v4039 = vrot.slane %v4030, %v4038
  %v4040 = vlaneseq
  %v4041 = vshrl.u32 %v4040, 7
  %v4042 = vsub.s32 2, %v4041
  %v4043 = vrot.slane %v4030, %v4042
  %v4175 = vunpack.c.l.b16 %v3902
  %v4176 = vunpack.c.h.b16 %v3902
  %v4177 = vunpack.c.l.b16 %v3903
  %v4178 = vunpack.c.l.b16 %v3904
  %v4179 = vunpack.c.h.b16 %v3904
  %v4180 = vunpack.c.l.b16 %v3905
  %v4181 = vunpack.c.l.b16 %v3906
  %v4182 = vunpack.c.h.b16 %v3906
  %v4183 = vunpack.c.l.b16 %v3907
  %v4184 = vunpack.c.l.b16 %v3908
  %v4185 = vunpack.c.h.b16 %v3908
  %v4186 = vunpack.c.l.b16 %v3909
  %v4187 = vunpack.c.l.b16 %v3910
  %v4188 = vunpack.c.h.b16 %v3910
  %v4189 = vunpack.c.l.b16 %v3911
  %v4190 = vunpack.c.l.b16 %v3912
  %v4191 = vunpack.c.h.b16 %v3912
  %v4192 = vunpack.c.l.b16 %v3913
  %v4193 = vunpack.c.l.b16 %v3914
  %v4194 = vunpack.c.h.b16 %v3914
  %v4195 = vunpack.c.l.b16 %v3915
  %v4196 = vunpack.c.l.b16 %v3916
  %v4197 = vunpack.c.h.b16 %v3916
  %v4198 = vunpack.c.l.b16 %v3917
  %v4199 = vunpack.c.l.b16 %v3918
  %v4200 = vunpack.c.h.b16 %v3918
  %v4201 = vunpack.c.l.b16 %v3919
  %v4202 = vunpack.c.l.b16 %v3920
  %v4203 = vunpack.c.h.b16 %v3920
  %v4204 = vunpack.c.l.b16 %v3921
  %v4205 = vunpack.c.l.b16 %v3922
  %v4206 = vunpack.c.h.b16 %v3922
  %v4207 = vunpack.c.l.b16 %v3923
  %v4208 = vunpack.c.l.b16 %v3924
  %v4209 = vunpack.c.h.b16 %v3924
  %v4210 = vunpack.c.l.b16 %v3925
  %v4211 = vunpack.c.l.b16 %v3926
  %v4212 = vunpack.c.h.b16 %v3926
  %v4213 = vunpack.c.l.b16 %v3927
  %v4214 = vunpack.c.l.b16 %v3928
  %v4215 = vunpack.c.h.b16 %v3928
  %v4216 = vunpack.c.l.b16 %v3929
  %v4217 = vunpack.c.l.b16 %v3930
  %v4218 = vunpack.c.h.b16 %v3930
  %v4219 = vunpack.c.l.b16 %v3931
  %v4220 = vunpack.c.l.b16 %v3932
  %v4221 = vunpack.c.h.b16 %v3932
  %v4222 = vunpack.c.l.b16 %v3933
  %v4223 = vunpack.c.l.b16 %v3934
  %v4224 = vunpack.c.h.b16 %v3934
  %v4225 = vunpack.c.l.b16 %v3935
  %v4226 = vunpack.c.l.b16 %v3936
  %v4227 = vunpack.c.h.b16 %v3936
  %v4228 = vunpack.c.l.b16 %v3937
  %v4229 = vunpack.c.l.b16 %v3938
  %v4230 = vunpack.c.h.b16 %v3938
  %v4231 = vunpack.c.l.b16 %v3939
  %v4232 = vunpack.c.l.b16 %v3940
  %v4233 = vunpack.c.h.b16 %v3940
  %v4234 = vunpack.c.l.b16 %v3941
  %v4235 = vunpack.c.l.b16 %v3942
  %v4236 = vunpack.c.h.b16 %v3942
  %v4237 = vunpack.c.l.b16 %v3943
  %v4238 = vunpack.c.l.b16 %v3944
  %v4239 = vunpack.c.h.b16 %v3944
  %v4240 = vunpack.c.l.b16 %v3945
  %v4241 = vunpack.c.l.b16 %v3946
  %v4242 = vunpack.c.h.b16 %v3946
  %v4243 = vunpack.c.l.b16 %v3947
  %v4244 = vunpack.c.l.b16 %v3948
  %v4245 = vunpack.c.h.b16 %v3948
  %v4246 = vunpack.c.l.b16 %v3949
  %v4247 = vunpack.c.l.b16 %v3950
  %v4248 = vunpack.c.h.b16 %v3950
  %v4249 = vunpack.c.l.b16 %v3951
  %v4250 = vunpack.c.l.b16 %v3952
  %v4251 = vunpack.c.h.b16 %v3952
  %v4252 = vunpack.c.l.b16 %v3953
  %v4253 = vunpack.c.l.b16 %v3954
  %v4254 = vunpack.c.h.b16 %v3954
  %v4255 = vunpack.c.l.b16 %v3955
  %v4256 = vunpack.c.l.b16 %v3956
  %v4257 = vunpack.c.h.b16 %v3956
  %v4258 = vunpack.c.l.b16 %v3957
  %v4259 = vunpack.c.l.b16 %v3958
  %v4260 = vunpack.c.h.b16 %v3958
  %v4261 = vunpack.c.l.b16 %v3959
  %v4262 = vunpack.c.l.b16 %v3960
  %v4263 = vunpack.c.h.b16 %v3960
  %v4264 = vunpack.c.l.b16 %v3961
  %v4265 = vunpack.c.l.b16 %v3962
  %v4266 = vunpack.c.h.b16 %v3962
  %v4267 = vunpack.c.l.b16 %v3963
  %v4268 = vunpack.c.l.b16 %v3964
  %v4269 = vunpack.c.h.b16 %v3964
  %v4270 = vunpack.c.l.b16 %v3965
  %v4271 = vunpack.c.l.b16 %v3966
  %v4272 = vunpack.c.h.b16 %v3966
  %v4273 = vunpack.c.l.b16 %v3967
  %v4274 = vunpack.c.l.b16 %v3968
  %v4275 = vunpack.c.h.b16 %v3968
  %v4276 = vunpack.c.l.b16 %v3969
  %v4277 = vunpack.c.l.b16 %v3970
  %v4278 = vunpack.c.h.b16 %v3970
  %v4279 = vunpack.c.l.b16 %v3971
  %v4280 = vunpack.c.l.b16 %v3972
  %v4281 = vunpack.c.h.b16 %v3972
  %v4282 = vunpack.c.l.b16 %v3973
  %v4283 = vunpack.c.l.b16 %v3974
  %v4284 = vunpack.c.h.b16 %v3974
  %v4285 = vunpack.c.l.b16 %v3975
  %v4286 = vunpack.c.l.b16 %v3976
  %v4287 = vunpack.c.h.b16 %v3976
  %v4288 = vunpack.c.l.b16 %v3977
  %v4289 = vunpack.c.l.b16 %v3978
  %v4290 = vunpack.c.h.b16 %v3978
  %v4291 = vunpack.c.l.b16 %v3979
  %v4292 = vunpack.c.l.b16 %v3980
  %v4293 = vunpack.c.h.b16 %v3980
  %v4294 = vunpack.c.l.b16 %v3981
  %v4295 = vunpack.c.l.b16 %v3982
  %v4296 = vunpack.c.h.b16 %v3982
  %v4297 = vunpack.c.l.b16 %v3983
  %v4298 = vunpack.c.l.b16 %v3984
  %v4299 = vunpack.c.h.b16 %v3984
  %v4300 = vunpack.c.l.b16 %v3985
  %v4301 = vunpack.c.l.b16 %v3986
  %v4302 = vunpack.c.h.b16 %v3986
  %v4303 = vunpack.c.l.b16 %v3987
  %v4304 = vunpack.c.l.b16 %v3988
  %v4305 = vunpack.c.h.b16 %v3988
  %v4306 = vunpack.c.l.b16 %v3989
  %v4307 = vunpack.c.l.b16 %v3990
  %v4308 = vunpack.c.h.b16 %v3990
  %v4309 = vunpack.c.l.b16 %v3991
  %v4310 = vunpack.c.l.b16 %v3992
  %v4311 = vunpack.c.h.b16 %v3992
  %v4312 = vunpack.c.l.b16 %v3993
  %v4313 = vunpack.c.l.b16 %v3994
  %v4314 = vunpack.c.h.b16 %v3994
  %v4315 = vunpack.c.l.b16 %v3995
  %v4316 = vunpack.c.l.b16 %v3996
  %v4317 = vunpack.c.h.b16 %v3996
  %v4318 = vunpack.c.l.b16 %v3997
  %v4319 = vunpack.c.l.b16 %v3998
  %v4320 = vunpack.c.h.b16 %v3998
  %v4321 = vunpack.c.l.b16 %v3999
  %v4322 = vunpack.c.l.b16 %v4000
  %v4323 = vunpack.c.h.b16 %v4000
  %v4324 = vunpack.c.l.b16 %v4001
  %v4325 = vunpack.c.l.b16 %v4002
  %v4326 = vunpack.c.h.b16 %v4002
  %v4327 = vunpack.c.l.b16 %v4003
  %v4328 = vunpack.c.l.b16 %v4004
  %v4329 = vunpack.c.h.b16 %v4004
  %v4330 = vunpack.c.l.b16 %v4005
  %v4331 = vunpack.c.l.b16 %v4006
  %v4332 = vunpack.c.h.b16 %v4006
  %v4333 = vunpack.c.l.b16 %v4007
  %v4334 = vunpack.c.l.b16 %v4008
  %v4335 = vunpack.c.h.b16 %v4008
  %v4336 = vunpack.c.l.b16 %v4009
  %v4337 = vunpack.c.l.b16 %v4010
  %v4338 = vunpack.c.h.b16 %v4010
  %v4339 = vunpack.c.l.b16 %v4011
  %v4340 = vunpack.c.l.b16 %v4012
  %v4341 = vunpack.c.h.b16 %v4012
  %v4342 = vunpack.c.l.b16 %v4013
  %v4343 = vunpack.c.l.b16 %v4014
  %v4344 = vunpack.c.h.b16 %v4014
  %v4345 = vunpack.c.l.b16 %v4015
  %v4346 = vunpack.c.l.b16 %v4016
  %v4347 = vunpack.c.h.b16 %v4016
  %v4348 = vunpack.c.l.b16 %v4017
  %v4349 = vunpack.c.l.b16 %v4018
  %v4350 = vunpack.c.h.b16 %v4018
  %v4351 = vunpack.c.l.b16 %v4019
  %v4352 = vunpack.c.l.b16 %v4020
  %v4353 = vunpack.c.h.b16 %v4020
  %v4354 = vunpack.c.l.b16 %v4021
  %v4355 = vunpack.c.l.b16 %v4022
  %v4356 = vunpack.c.h.b16 %v4022
  %v4357 = vunpack.c.l.b16 %v4023
  %v4358 = vunpack.c.l.b16 %v4024
  %v4359 = vunpack.c.h.b16 %v4024
  %v4360 = vunpack.c.l.b16 %v4025
  %v4361 = vunpack.c.l.b16 %v4026
  %v4362 = vunpack.c.h.b16 %v4026
  %v4363 = vunpack.c.l.b16 %v4027
  %v4364 = vunpack.c.l.b16 %v4028
  %v4365 = vunpack.c.h.b16 %v4028
  %v4366 = vunpack.c.l.b16 %v4029
  %v4367 = vpack.c.b16 %v4178, %v4175
  %v4368 = vpack.c.b16 %v4179, %v4176
  %v4369 = vpack.c.b16 %v4180, %v4177
  %v4370 = vpack.c.b16 %v4184, %v4181
  %v4371 = vpack.c.b16 %v4185, %v4182
  %v4372 = vpack.c.b16 %v4186, %v4183
  %v4373 = vpack.c.b16 %v4190, %v4187
  %v4374 = vpack.c.b16 %v4191, %v4188
  %v4375 = vpack.c.b16 %v4192, %v4189
  %v4376 = vpack.c.b16 %v4196, %v4193
  %v4377 = vpack.c.b16 %v4197, %v4194
  %v4378 = vpack.c.b16 %v4198, %v4195
  %v4379 = vpack.c.b16 %v4202, %v4199
  %v4380 = vpack.c.b16 %v4203, %v4200
  %v4381 = vpack.c.b16 %v4204, %v4201
  %v4382 = vpack.c.b16 %v4208, %v4205
  %v4383 = vpack.c.b16 %v4209, %v4206
  %v4384 = vpack.c.b16 %v4210, %v4207
  %v4385 = vpack.c.b16 %v4214, %v4211
  %v4386 = vpack.c.b16 %v4215, %v4212
  %v4387 = vpack.c.b16 %v4216, %v4213
  %v4388 = vpack.c.b16 %v4220, %v4217
  %v4389 = vpack.c.b16 %v4221, %v4218
  %v4390 = vpack.c.b16 %v4222, %v4219
  %v4391 = vpack.c.b16 %v4226, %v4223
  %v4392 = vpack.c.b16 %v4227, %v4224
  %v4393 = vpack.c.b16 %v4228, %v4225
  %v4394 = vpack.c.b16 %v4232, %v4229
  %v4395 = vpack.c.b16 %v4233, %v4230
  %v4396 = vpack.c.b16 %v4234, %v4231
  %v4397 = vpack.c.b16 %v4238, %v4235
  %v4398 = vpack.c.b16 %v4239, %v4236
  %v4399 = vpack.c.b16 %v4240, %v4237
  %v4400 = vpack.c.b16 %v4244, %v4241
  %v4401 = vpack.c.b16 %v4245, %v4242
  %v4402 = vpack.c.b16 %v4246, %v4243
  %v4403 = vpack.c.b16 %v4250, %v4247
  %v4404 = vpack.c.b16 %v4251, %v4248
  %v4405 = vpack.c.b16 %v4252, %v4249
  %v4406 = vpack.c.b16 %v4256, %v4253
  %v4407 = vpack.c.b16 %v4257, %v4254
  %v4408 = vpack.c.b16 %v4258, %v4255
  %v4409 = vpack.c.b16 %v4262, %v4259
  %v4410 = vpack.c.b16 %v4263, %v4260
  %v4411 = vpack.c.b16 %v4264, %v4261
  %v4412 = vpack.c.b16 %v4268, %v4265
  %v4413 = vpack.c.b16 %v4269, %v4266
  %v4414 = vpack.c.b16 %v4270, %v4267
  %v4415 = vpack.c.b16 %v4274, %v4271
  %v4416 = vpack.c.b16 %v4275, %v4272
  %v4417 = vpack.c.b16 %v4276, %v4273
  %v4418 = vpack.c.b16 %v4280, %v4277
  %v4419 = vpack.c.b16 %v4281, %v4278
  %v4420 = vpack.c.b16 %v4282, %v4279
  %v4421 = vpack.c.b16 %v4286, %v4283
  %v4422 = vpack.c.b16 %v4287, %v4284
  %v4423 = vpack.c.b16 %v4288, %v4285
  %v4424 = vpack.c.b16 %v4292, %v4289
  %v4425 = vpack.c.b16 %v4293, %v4290
  %v4426 = vpack.c.b16 %v4294, %v4291
  %v4427 = vpack.c.b16 %v4298, %v4295
  %v4428 = vpack.c.b16 %v4299, %v4296
  %v4429 = vpack.c.b16 %v4300, %v4297
  %v4430 = vpack.c.b16 %v4304, %v4301
  %v4431 = vpack.c.b16 %v4305, %v4302
  %v4432 = vpack.c.b16 %v4306, %v4303
  %v4433 = vpack.c.b16 %v4310, %v4307
  %v4434 = vpack.c.b16 %v4311, %v4308
  %v4435 = vpack.c.b16 %v4312, %v4309
  %v4436 = vpack.c.b16 %v4316, %v4313
  %v4437 = vpack.c.b16 %v4317, %v4314
  %v4438 = vpack.c.b16 %v4318, %v4315
  %v4439 = vpack.c.b16 %v4322, %v4319
  %v4440 = vpack.c.b16 %v4323, %v4320
  %v4441 = vpack.c.b16 %v4324, %v4321
  %v4442 = vpack.c.b16 %v4328, %v4325
  %v4443 = vpack.c.b16 %v4329, %v4326
  %v4444 = vpack.c.b16 %v4330, %v4327
  %v4445 = vpack.c.b16 %v4334, %v4331
  %v4446 = vpack.c.b16 %v4335, %v4332
  %v4447 = vpack.c.b16 %v4336, %v4333
  %v4448 = vpack.c.b16 %v4340, %v4337
  %v4449 = vpack.c.b16 %v4341, %v4338
  %v4450 = vpack.c.b16 %v4342, %v4339
  %v4451 = vpack.c.b16 %v4346, %v4343
  %v4452 = vpack.c.b16 %v4347, %v4344
  %v4453 = vpack.c.b16 %v4348, %v4345
  %v4454 = vpack.c.b16 %v4352, %v4349
  %v4455 = vpack.c.b16 %v4353, %v4350
  %v4456 = vpack.c.b16 %v4354, %v4351
  %v4457 = vpack.c.b16 %v4358, %v4355
  %v4458 = vpack.c.b16 %v4359, %v4356
  %v4459 = vpack.c.b16 %v4360, %v4357
  %v4460 = vpack.c.b16 %v4364, %v4361
  %v4461 = vpack.c.b16 %v4365, %v4362
  %v4462 = vpack.c.b16 %v4366, %v4363
  %4559 = vmatprep.subr.bf16.mxu0 %v4389
  %4560 = vmatpush1.bf16.msra.mxu0 %v4388
  %4561 = vmatprep.subr.bf16.mxu0 %v4386
  %4562 = vmatpush1.bf16.msra.mxu0 %v4385
  %4563 = vmatprep.subr.bf16.mxu0 %v4383
  %4564 = vmatpush1.bf16.msra.mxu0 %v4382
  %4565 = vmatprep.subr.bf16.mxu0 %v4380
  %4566 = vmatpush1.bf16.msra.mxu0 %v4379
  %4567 = vmatprep.subr.bf16.mxu0 %v4377
  %4568 = vmatpush1.bf16.msra.mxu0 %v4376
  %4569 = vmatprep.subr.bf16.mxu0 %v4374
  %4570 = vmatpush1.bf16.msra.mxu0 %v4373
  %4571 = vmatprep.subr.bf16.mxu0 %v4371
  %4572 = vmatpush1.bf16.msra.mxu0 %v4370
  %4573 = vmatprep.subr.bf16.mxu0 %v4368
  %4574 = vmatpush1.bf16.msra.mxu0 %v4367
  %4575 = vmatprep.subr.bf16.mxu0 %v4413
  %4576 = vmatpush2.bf16.msra.mxu0 %v4412
  %4577 = vmatprep.subr.bf16.mxu0 %v4410
  %4578 = vmatpush2.bf16.msra.mxu0 %v4409
  %4579 = vmatprep.subr.bf16.mxu0 %v4407
  %4580 = vmatpush2.bf16.msra.mxu0 %v4406
  %4581 = vmatprep.subr.bf16.mxu0 %v4404
  %4582 = vmatpush2.bf16.msra.mxu0 %v4403
  %4583 = vmatprep.subr.bf16.mxu0 %v4401
  %4584 = vmatpush2.bf16.msra.mxu0 %v4400
  %4585 = vmatprep.subr.bf16.mxu0 %v4398
  %4586 = vmatpush2.bf16.msra.mxu0 %v4397
  %4587 = vmatprep.subr.bf16.mxu0 %v4395
  %4588 = vmatpush2.bf16.msra.mxu0 %v4394
  %4589 = vmatprep.subr.bf16.mxu0 %v4392
  %4590 = vmatpush2.bf16.msra.mxu0 %v4391
  %4591 = vmatprep.mubr.bf16.mxu0 %v3899
  %4592 = vmatmul.mubr.bf16.gmra.mxu0 %v3898
  %v4593 = vpop.f32.mrf.mxu0
  %v4594 = vadd.f32 %v4035, %v4593
  %v4595 = vpop.f32.mrf.mxu0
  %v4596 = vadd.f32 %v4039, %v4595
  %v4597 = vpop.f32.mrf.mxu0
  %v4598 = vpop.f32.mrf.mxu0
  %4599 = vdwg.mxu0
  %4600 = vmatprep.subr.bf16.mxu0 %v4437
  %4601 = vmatpush1.bf16.msra.mxu0 %v4436
  %4602 = vmatprep.subr.bf16.mxu0 %v4434
  %4603 = vmatpush1.bf16.msra.mxu0 %v4433
  %4604 = vmatprep.subr.bf16.mxu0 %v4431
  %4605 = vmatpush1.bf16.msra.mxu0 %v4430
  %4606 = vmatprep.subr.bf16.mxu0 %v4428
  %4607 = vmatpush1.bf16.msra.mxu0 %v4427
  %4608 = vmatprep.subr.bf16.mxu0 %v4425
  %4609 = vmatpush1.bf16.msra.mxu0 %v4424
  %4610 = vmatprep.subr.bf16.mxu0 %v4422
  %4611 = vmatpush1.bf16.msra.mxu0 %v4421
  %4612 = vmatprep.subr.bf16.mxu0 %v4419
  %4613 = vmatpush1.bf16.msra.mxu0 %v4418
  %4614 = vmatprep.subr.bf16.mxu0 %v4416
  %4615 = vmatpush1.bf16.msra.mxu0 %v4415
  %4616 = vmatprep.subr.bf16.mxu0 %v4461
  %4617 = vmatpush2.bf16.msra.mxu0 %v4460
  %4618 = vmatprep.subr.bf16.mxu0 %v4458
  %4619 = vmatpush2.bf16.msra.mxu0 %v4457
  %4620 = vmatprep.subr.bf16.mxu0 %v4455
  %4621 = vmatpush2.bf16.msra.mxu0 %v4454
  %4622 = vmatprep.subr.bf16.mxu0 %v4452
  %4623 = vmatpush2.bf16.msra.mxu0 %v4451
  %4624 = vmatprep.subr.bf16.mxu0 %v4449
  %4625 = vmatpush2.bf16.msra.mxu0 %v4448
  %4626 = vmatprep.subr.bf16.mxu0 %v4446
  %4627 = vmatpush2.bf16.msra.mxu0 %v4445
  %4628 = vmatprep.subr.bf16.mxu0 %v4443
  %4629 = vmatpush2.bf16.msra.mxu0 %v4442
  %4630 = vmatprep.subr.bf16.mxu0 %v4440
  %4631 = vmatpush2.bf16.msra.mxu0 %v4439
  %4632 = vmatprep.mubr.bf16.mxu0 %v3901
  %4633 = vmatmul.mubr.bf16.gmra.mxu0 %v3900
  %v4634 = vpop.f32.mrf.mxu0
  %v4635 = vadd.f32 %v4594, %v4634
  %v4636 = vpop.f32.mrf.mxu0
  %v4637 = vadd.f32 %v4596, %v4636
  %v4638 = vpop.f32.mrf.mxu0
  %v4639 = vpop.f32.mrf.mxu0
  %4640 = vdwg.mxu0
  %4641 = vmatprep.subr.bf16.mxu0 0
  %4642 = vmatpush1.bf16.msra.mxu0 %v4390
  %4643 = vmatprep.subr.bf16.mxu0 0
  %4644 = vmatpush1.bf16.msra.mxu0 %v4387
  %4645 = vmatprep.subr.bf16.mxu0 0
  %4646 = vmatpush1.bf16.msra.mxu0 %v4384
  %4647 = vmatprep.subr.bf16.mxu0 0
  %4648 = vmatpush1.bf16.msra.mxu0 %v4381
  %4649 = vmatprep.subr.bf16.mxu0 0
  %4650 = vmatpush1.bf16.msra.mxu0 %v4378
  %4651 = vmatprep.subr.bf16.mxu0 0
  %4652 = vmatpush1.bf16.msra.mxu0 %v4375
  %4653 = vmatprep.subr.bf16.mxu0 0
  %4654 = vmatpush1.bf16.msra.mxu0 %v4372
  %4655 = vmatprep.subr.bf16.mxu0 0
  %4656 = vmatpush1.bf16.msra.mxu0 %v4369
  %4657 = vmatprep.subr.bf16.mxu0 0
  %4658 = vmatpush2.bf16.msra.mxu0 %v4414
  %4659 = vmatprep.subr.bf16.mxu0 0
  %4660 = vmatpush2.bf16.msra.mxu0 %v4411
  %4661 = vmatprep.subr.bf16.mxu0 0
  %4662 = vmatpush2.bf16.msra.mxu0 %v4408
  %4663 = vmatprep.subr.bf16.mxu0 0
  %4664 = vmatpush2.bf16.msra.mxu0 %v4405
  %4665 = vmatprep.subr.bf16.mxu0 0
  %4666 = vmatpush2.bf16.msra.mxu0 %v4402
  %4667 = vmatprep.subr.bf16.mxu0 0
  %4668 = vmatpush2.bf16.msra.mxu0 %v4399
  %4669 = vmatprep.subr.bf16.mxu0 0
  %4670 = vmatpush2.bf16.msra.mxu0 %v4396
  %4671 = vmatprep.subr.bf16.mxu0 0
  %4672 = vmatpush2.bf16.msra.mxu0 %v4393
  %4673 = vmatprep.mubr.bf16.mxu0 %v3899
  %4674 = vmatmul.mubr.bf16.gmra.mxu0 %v3898
  %v4675 = vpop.f32.mrf.mxu0
  %v4676 = vadd.f32 %v4043, %v4675
  %v4677 = vpop.f32.mrf.mxu0
  %v4678 = vpop.f32.mrf.mxu0
  %v4679 = vpop.f32.mrf.mxu0
  %4680 = vdwg.mxu0
  %4681 = vmatprep.subr.bf16.mxu0 0
  %4682 = vmatpush1.bf16.msra.mxu0 %v4438
  %4683 = vmatprep.subr.bf16.mxu0 0
  %4684 = vmatpush1.bf16.msra.mxu0 %v4435
  %4685 = vmatprep.subr.bf16.mxu0 0
  %4686 = vmatpush1.bf16.msra.mxu0 %v4432
  %4687 = vmatprep.subr.bf16.mxu0 0
  %4688 = vmatpush1.bf16.msra.mxu0 %v4429
  %4689 = vmatprep.subr.bf16.mxu0 0
  %4690 = vmatpush1.bf16.msra.mxu0 %v4426
  %4691 = vmatprep.subr.bf16.mxu0 0
  %4692 = vmatpush1.bf16.msra.mxu0 %v4423
  %4693 = vmatprep.subr.bf16.mxu0 0
  %4694 = vmatpush1.bf16.msra.mxu0 %v4420
  %4695 = vmatprep.subr.bf16.mxu0 0
  %4696 = vmatpush1.bf16.msra.mxu0 %v4417
  %4697 = vmatprep.subr.bf16.mxu0 0
  %4698 = vmatpush2.bf16.msra.mxu0 %v4462
  %4699 = vmatprep.subr.bf16.mxu0 0
  %4700 = vmatpush2.bf16.msra.mxu0 %v4459
  %4701 = vmatprep.subr.bf16.mxu0 0
  %4702 = vmatpush2.bf16.msra.mxu0 %v4456
  %4703 = vmatprep.subr.bf16.mxu0 0
  %4704 = vmatpush2.bf16.msra.mxu0 %v4453
  %4705 = vmatprep.subr.bf16.mxu0 0
  %4706 = vmatpush2.bf16.msra.mxu0 %v4450
  %4707 = vmatprep.subr.bf16.mxu0 0
  %4708 = vmatpush2.bf16.msra.mxu0 %v4447
  %4709 = vmatprep.subr.bf16.mxu0 0
  %4710 = vmatpush2.bf16.msra.mxu0 %v4444
  %4711 = vmatprep.subr.bf16.mxu0 0
  %4712 = vmatpush2.bf16.msra.mxu0 %v4441
  %4713 = vmatprep.mubr.bf16.mxu0 %v3901
  %4714 = vmatmul.mubr.bf16.gmra.mxu0 %v3900
  %v4715 = vpop.f32.mrf.mxu0
  %v4716 = vadd.f32 %v4676, %v4715
  %v4717 = vpop.f32.mrf.mxu0
  %v4718 = vpop.f32.mrf.mxu0
  %v4719 = vpop.f32.mrf.mxu0
  %4720 = vdwg.mxu0
  %v4721 = vtanh.pop %v4635
  %v4722 = vtanh.pop %v4637
  %v4723 = vtanh.pop %v4716
  %v4724 = vld [vmem:[%s7] sm:$0xff]
  %v4725 = vld [vmem:[%s7 + $0x8] sm:$0xff]
  %v4726 = vld [vmem:[%s7 + $0x10] sm:$0xff]
  %v4727 = vld [vmem:[%s7 + $0x18] sm:$0xff]
  %v4728 = vld [vmem:[%s7 + $0x20] sm:$0xff]
  %v4729 = vld [vmem:[%s7 + $0x28] sm:$0xff]
  %v4730 = vld [vmem:[%s7 + $0x30] sm:$0xff]
  %v4731 = vld [vmem:[%s7 + $0x38] sm:$0xff]
  %v4732 = vld [vmem:[%s7 + $0x40] sm:$0xff]
  %v4733 = vld [vmem:[%s7 + $0x48] sm:$0xff]
  %v4734 = vld [vmem:[%s7 + $0x50] sm:$0xff]
  %v4735 = vld [vmem:[%s7 + $0x58] sm:$0xff]
  %v4736 = vld [vmem:[%s7 + $0x60] sm:$0xff]
  %v4737 = vld [vmem:[%s7 + $0x68] sm:$0xff]
  %v4738 = vld [vmem:[%s7 + $0x70] sm:$0xff]
  %v4739 = vld [vmem:[%s7 + $0x78] sm:$0xff]
  %v4740 = vld [vmem:[%s7 + $0x80] sm:$0xff]
  %v4741 = vld [vmem:[%s7 + $0x88] sm:$0xff]
  %v4742 = vld [vmem:[%s7 + $0x90] sm:$0xff]
  %v4743 = vld [vmem:[%s7 + $0x98] sm:$0xff]
  %v4744 = vld [vmem:[%s7 + $0xa0] sm:$0xff]
  %v4745 = vld [vmem:[%s7 + $0xa8] sm:$0xff]
  %v4746 = vld [vmem:[%s7 + $0xb0] sm:$0xff]
  %v4747 = vld [vmem:[%s7 + $0xb8] sm:$0xff]
  %v4748 = vld [vmem:[%s7 + $0xc0] sm:$0xff]
  %v4749 = vld [vmem:[%s7 + $0xc8] sm:$0xff]
  %v4750 = vld [vmem:[%s7 + $0xd0] sm:$0xff]
  %v4751 = vld [vmem:[%s7 + $0xd8] sm:$0xff]
  %v4752 = vld [vmem:[%s7 + $0xe0] sm:$0xff]
  %v4753 = vld [vmem:[%s7 + $0xe8] sm:$0xff]
  %v4754 = vld [vmem:[%s7 + $0xf0] sm:$0xff]
  %v4755 = vld [vmem:[%s7 + $0xf8] sm:$0xff]
  %v4756 = vld [vmem:[%s7 + $0x100] sm:$0xff]
  %v4757 = vld [vmem:[%s7 + $0x108] sm:$0xff]
  %v4758 = vld [vmem:[%s7 + $0x110] sm:$0xff]
  %v4759 = vld [vmem:[%s7 + $0x118] sm:$0xff]
  %v4760 = vld [vmem:[%s7 + $0x120] sm:$0xff]
  %v4761 = vld [vmem:[%s7 + $0x128] sm:$0xff]
  %v4762 = vld [vmem:[%s7 + $0x130] sm:$0xff]
  %v4763 = vld [vmem:[%s7 + $0x138] sm:$0xff]
  %v4764 = vld [vmem:[%s7 + $0x140] sm:$0xff]
  %v4765 = vld [vmem:[%s7 + $0x148] sm:$0xff]
  %v4766 = vld [vmem:[%s7 + $0x150] sm:$0xff]
  %v4767 = vld [vmem:[%s7 + $0x158] sm:$0xff]
  %v4768 = vld [vmem:[%s7 + $0x160] sm:$0xff]
  %v4769 = vld [vmem:[%s7 + $0x168] sm:$0xff]
  %v4770 = vld [vmem:[%s7 + $0x170] sm:$0xff]
  %v4771 = vld [vmem:[%s7 + $0x178] sm:$0xff]
  %v4772 = vld [vmem:[%s8] sm:$0x1]
  %v4774 = vlaneseq
  %v4775 = vshrl.u32 %v4774, 7
  %v4776 = vsub.s32 0, %v4775
  %v4777 = vrot.slane %v4772, %v4776
  %4779 = vmatprep.subr.mxu0 0.0
  %4780 = vmatpush1.msra.mxu0 %v4739
  %4781 = vmatprep.subr.mxu0 0.0
  %4782 = vmatpush1.msra.mxu0 %v4738
  %4783 = vmatprep.subr.mxu0 0.0
  %4784 = vmatpush1.msra.mxu0 %v4737
  %4785 = vmatprep.subr.mxu0 0.0
  %4786 = vmatpush1.msra.mxu0 %v4736
  %4787 = vmatprep.subr.mxu0 0.0
  %4788 = vmatpush1.msra.mxu0 %v4735
  %4789 = vmatprep.subr.mxu0 0.0
  %4790 = vmatpush1.msra.mxu0 %v4734
  %4791 = vmatprep.subr.mxu0 0.0
  %4792 = vmatpush1.msra.mxu0 %v4733
  %4793 = vmatprep.subr.mxu0 0.0
  %4794 = vmatpush1.msra.mxu0 %v4732
  %4795 = vmatprep.subr.mxu0 0.0
  %4796 = vmatpush1.msra.mxu0 %v4731
  %4797 = vmatprep.subr.mxu0 0.0
  %4798 = vmatpush1.msra.mxu0 %v4730
  %4799 = vmatprep.subr.mxu0 0.0
  %4800 = vmatpush1.msra.mxu0 %v4729
  %4801 = vmatprep.subr.mxu0 0.0
  %4802 = vmatpush1.msra.mxu0 %v4728
  %4803 = vmatprep.subr.mxu0 0.0
  %4804 = vmatpush1.msra.mxu0 %v4727
  %4805 = vmatprep.subr.mxu0 0.0
  %4806 = vmatpush1.msra.mxu0 %v4726
  %4807 = vmatprep.subr.mxu0 0.0
  %4808 = vmatpush1.msra.mxu0 %v4725
  %4809 = vmatprep.subr.mxu0 0.0
  %4810 = vmatpush1.msra.mxu0 %v4724
  %4811 = vmatprep.subr.mxu0 0.0
  %4812 = vmatpush2.msra.mxu0 %v4755
  %4813 = vmatprep.subr.mxu0 0.0
  %4814 = vmatpush2.msra.mxu0 %v4754
  %4815 = vmatprep.subr.mxu0 0.0
  %4816 = vmatpush2.msra.mxu0 %v4753
  %4817 = vmatprep.subr.mxu0 0.0
  %4818 = vmatpush2.msra.mxu0 %v4752
  %4819 = vmatprep.subr.mxu0 0.0
  %4820 = vmatpush2.msra.mxu0 %v4751
  %4821 = vmatprep.subr.mxu0 0.0
  %4822 = vmatpush2.msra.mxu0 %v4750
  %4823 = vmatprep.subr.mxu0 0.0
  %4824 = vmatpush2.msra.mxu0 %v4749
  %4825 = vmatprep.subr.mxu0 0.0
  %4826 = vmatpush2.msra.mxu0 %v4748
  %4827 = vmatprep.subr.mxu0 0.0
  %4828 = vmatpush2.msra.mxu0 %v4747
  %4829 = vmatprep.subr.mxu0 0.0
  %4830 = vmatpush2.msra.mxu0 %v4746
  %4831 = vmatprep.subr.mxu0 0.0
  %4832 = vmatpush2.msra.mxu0 %v4745
  %4833 = vmatprep.subr.mxu0 0.0
  %4834 = vmatpush2.msra.mxu0 %v4744
  %4835 = vmatprep.subr.mxu0 0.0
  %4836 = vmatpush2.msra.mxu0 %v4743
  %4837 = vmatprep.subr.mxu0 0.0
  %4838 = vmatpush2.msra.mxu0 %v4742
  %4839 = vmatprep.subr.mxu0 0.0
  %4840 = vmatpush2.msra.mxu0 %v4741
  %4841 = vmatprep.subr.mxu0 0.0
  %4842 = vmatpush2.msra.mxu0 %v4740
  %4843 = vmatprep.mubr.f32.mxu0 %v4722
  %4844 = vmatmul.mubr.f32.gmra.mxu0 %v4721
  %v4845 = vpop.f32.mrf.mxu0
  %v4846 = vadd.f32 %v4777, %v4845
  %v4847 = vpop.f32.mrf.mxu0
  %4848 = vdwg.mxu0
  %4849 = vmatprep.subr.mxu0 0.0
  %4850 = vmatpush1.msra.mxu0 %v4771
  %4851 = vmatprep.subr.mxu0 0.0
  %4852 = vmatpush1.msra.mxu0 %v4770
  %4853 = vmatprep.subr.mxu0 0.0
  %4854 = vmatpush1.msra.mxu0 %v4769
  %4855 = vmatprep.subr.mxu0 0.0
  %4856 = vmatpush1.msra.mxu0 %v4768
  %4857 = vmatprep.subr.mxu0 0.0
  %4858 = vmatpush1.msra.mxu0 %v4767
  %4859 = vmatprep.subr.mxu0 0.0
  %4860 = vmatpush1.msra.mxu0 %v4766
  %4861 = vmatprep.subr.mxu0 0.0
  %4862 = vmatpush1.msra.mxu0 %v4765
  %4863 = vmatprep.subr.mxu0 0.0
  %4864 = vmatpush1.msra.mxu0 %v4764
  %4865 = vmatprep.subr.mxu0 0.0
  %4866 = vmatpush1.msra.mxu0 %v4763
  %4867 = vmatprep.subr.mxu0 0.0
  %4868 = vmatpush1.msra.mxu0 %v4762
  %4869 = vmatprep.subr.mxu0 0.0
  %4870 = vmatpush1.msra.mxu0 %v4761
  %4871 = vmatprep.subr.mxu0 0.0
  %4872 = vmatpush1.msra.mxu0 %v4760
  %4873 = vmatprep.subr.mxu0 0.0
  %4874 = vmatpush1.msra.mxu0 %v4759
  %4875 = vmatprep.subr.mxu0 0.0
  %4876 = vmatpush1.msra.mxu0 %v4758
  %4877 = vmatprep.subr.mxu0 0.0
  %4878 = vmatpush1.msra.mxu0 %v4757
  %4879 = vmatprep.subr.mxu0 0.0
  %4880 = vmatpush1.msra.mxu0 %v4756
  %4881 = vmatprep.subr.mxu0 0.0
  %4882 = vmatpush2.msra.mxu0 0.0
  %4883 = vmatprep.subr.mxu0 0.0
  %4884 = vmatpush2.msra.mxu0 0.0
  %4885 = vmatprep.subr.mxu0 0.0
  %4886 = vmatpush2.msra.mxu0 0.0
  %4887 = vmatprep.subr.mxu0 0.0
  %4888 = vmatpush2.msra.mxu0 0.0
  %4889 = vmatprep.subr.mxu0 0.0
  %4890 = vmatpush2.msra.mxu0 0.0
  %4891 = vmatprep.subr.mxu0 0.0
  %4892 = vmatpush2.msra.mxu0 0.0
  %4893 = vmatprep.subr.mxu0 0.0
  %4894 = vmatpush2.msra.mxu0 0.0
  %4895 = vmatprep.subr.mxu0 0.0
  %4896 = vmatpush2.msra.mxu0 0.0
  %4897 = vmatprep.subr.mxu0 0.0
  %4898 = vmatpush2.msra.mxu0 0.0
  %4899 = vmatprep.subr.mxu0 0.0
  %4900 = vmatpush2.msra.mxu0 0.0
  %4901 = vmatprep.subr.mxu0 0.0
  %4902 = vmatpush2.msra.mxu0 0.0
  %4903 = vmatprep.subr.mxu0 0.0
  %4904 = vmatpush2.msra.mxu0 0.0
  %4905 = vmatprep.subr.mxu0 0.0
  %4906 = vmatpush2.msra.mxu0 0.0
  %4907 = vmatprep.subr.mxu0 0.0
  %4908 = vmatpush2.msra.mxu0 0.0
  %4909 = vmatprep.subr.mxu0 0.0
  %4910 = vmatpush2.msra.mxu0 0.0
  %4911 = vmatprep.subr.mxu0 0.0
  %4912 = vmatpush2.msra.mxu0 0.0
  %4913 = vmatprep.mubr.f32.mxu0 0.0
  %4914 = vmatmul.mubr.f32.gmra.mxu0 %v4723
  %v4915 = vpop.f32.mrf.mxu0
  %v4916 = vadd.f32 %v4846, %v4915
  %v4917 = vpop.f32.mrf.mxu0
  %4918 = vdwg.mxu0
  %v4919 = vld [vmem:[%s10] sm:$0xff]
  %4921 = vset.pattern.permute.xlu0 0
  %4922 = vperm.xlu0 %4921, %v4919
  %v4923 = vpop.permute.xlu0 %4922
  %v4925 = vadd.f32 %v4916, %v4923
  %vm4926 = vcmask 23552
  %v4927 = vsel %vm4926, %v4925, -inf
  %v4928 = vrot.slane %v4927, 4
  %v4929 = vmax.f32 %v4927, %v4928
  %v4930 = vrot.slane %v4929, 2
  %v4931 = vmax.f32 %v4929, %v4930
  %v4932 = vrot.slane %v4931, 1
  %v4933 = vmax.f32 %v4931, %v4932
  %v4934 = vsub.f32 %v4925, %v4933
  %v4935 = vmul.f32 %v4934, 1.442695
  %v4936 = vpow.pop %v4935
  %v4937 = vsel %vm4926, %v4936, 0.0
  %v4938 = vrot.slane %v4937, 4
  %v4939 = vadd.f32 %v4937, %v4938
  %v4940 = vrot.slane %v4939, 2
  %v4941 = vadd.f32 %v4939, %v4940
  %v4942 = vrot.slane %v4941, 1
  %v4943 = vadd.f32 %v4941, %v4942
  %v4944 = vrcp.pop %v4943
  %v4945 = vmul.f32 %v4936, %v4944
  %v4946 = vlaneseq
  %v4947 = vshrl.u32 %v4946, 7
  %v4948 = vlaneseq
  %v4949 = vand.u32 %v4948, 127
  %vm4950 = vcmp.eq.s32.totalorder %v4947, %v4949
  %v4951 = vsel %vm4950, 1, 0
  %v4952 = vcvt.s32.f32 %v4951
  %v4953 = vld [vmem:[%s9] sm:$0xff]
  %v4954 = vld [vmem:[%s9 + $0x8] sm:$0xff]
  %v4955 = vld [vmem:[%s9 + $0x10] sm:$0xff]
  %v4956 = vld [vmem:[%s9 + $0x18] sm:$0xff]
  %v4957 = vld [vmem:[%s9 + $0x20] sm:$0xff]
  %v4958 = vld [vmem:[%s9 + $0x28] sm:$0xff]
  %v4959 = vld [vmem:[%s9 + $0x30] sm:$0xff]
  %v4960 = vld [vmem:[%s9 + $0x38] sm:$0xff]
  %v4961 = vld [vmem:[%s9 + $0x40] sm:$0xff]
  %v4962 = vld [vmem:[%s9 + $0x48] sm:$0xff]
  %v4963 = vld [vmem:[%s9 + $0x50] sm:$0xff]
  %v4964 = vld [vmem:[%s9 + $0x58] sm:$0xff]
  %v4965 = vld [vmem:[%s9 + $0x60] sm:$0xff]
  %v4966 = vld [vmem:[%s9 + $0x68] sm:$0xff]
  %v4967 = vld [vmem:[%s9 + $0x70] sm:$0xff]
  %v4968 = vld [vmem:[%s9 + $0x78] sm:$0xff]
  %v4969 = vld [vmem:[%s9 + $0x80] sm:$0xff]
  %v4970 = vld [vmem:[%s9 + $0x88] sm:$0xff]
  %v4971 = vld [vmem:[%s9 + $0x90] sm:$0xff]
  %v4972 = vld [vmem:[%s9 + $0x98] sm:$0xff]
  %v4973 = vld [vmem:[%s9 + $0xa0] sm:$0xff]
  %v4974 = vld [vmem:[%s9 + $0xa8] sm:$0xff]
  %v4975 = vld [vmem:[%s9 + $0xb0] sm:$0xff]
  %v4976 = vld [vmem:[%s9 + $0xb8] sm:$0xff]
  %v4977 = vld [vmem:[%s9 + $0xc0] sm:$0xff]
  %v4978 = vld [vmem:[%s9 + $0xc8] sm:$0xff]
  %v4979 = vld [vmem:[%s9 + $0xd0] sm:$0xff]
  %v4980 = vld [vmem:[%s9 + $0xd8] sm:$0xff]
  %v4981 = vld [vmem:[%s9 + $0xe0] sm:$0xff]
  %v4982 = vld [vmem:[%s9 + $0xe8] sm:$0xff]
  %v4983 = vld [vmem:[%s9 + $0xf0] sm:$0xff]
  %v4984 = vld [vmem:[%s9 + $0xf8] sm:$0xff]
  %v4985 = vld [vmem:[%s9 + $0x100] sm:$0xff]
  %v4986 = vld [vmem:[%s9 + $0x108] sm:$0xff]
  %v4987 = vld [vmem:[%s9 + $0x110] sm:$0xff]
  %v4988 = vld [vmem:[%s9 + $0x118] sm:$0xff]
  %v4989 = vld [vmem:[%s9 + $0x120] sm:$0xff]
  %v4990 = vld [vmem:[%s9 + $0x128] sm:$0xff]
  %v4991 = vld [vmem:[%s9 + $0x130] sm:$0xff]
  %v4992 = vld [vmem:[%s9 + $0x138] sm:$0xff]
  %v4993 = vld [vmem:[%s9 + $0x140] sm:$0xff]
  %v4994 = vld [vmem:[%s9 + $0x148] sm:$0xff]
  %v4995 = vld [vmem:[%s9 + $0x150] sm:$0xff]
  %v4996 = vld [vmem:[%s9 + $0x158] sm:$0xff]
  %v4997 = vld [vmem:[%s9 + $0x160] sm:$0xff]
  %v4998 = vld [vmem:[%s9 + $0x168] sm:$0xff]
  %v4999 = vld [vmem:[%s9 + $0x170] sm:$0xff]
  %v5000 = vld [vmem:[%s9 + $0x178] sm:$0xff]
  %v5001 = vld [vmem:[%s9 + $0x180] sm:$0xff]
  %v5002 = vld [vmem:[%s9 + $0x188] sm:$0xff]
  %v5003 = vld [vmem:[%s9 + $0x190] sm:$0xff]
  %v5004 = vld [vmem:[%s9 + $0x198] sm:$0xff]
  %v5005 = vld [vmem:[%s9 + $0x1a0] sm:$0xff]
  %v5006 = vld [vmem:[%s9 + $0x1a8] sm:$0xff]
  %v5007 = vld [vmem:[%s9 + $0x1b0] sm:$0xff]
  %v5008 = vld [vmem:[%s9 + $0x1b8] sm:$0xff]
  %v5009 = vld [vmem:[%s9 + $0x1c0] sm:$0xff]
  %v5010 = vld [vmem:[%s9 + $0x1c8] sm:$0xff]
  %v5011 = vld [vmem:[%s9 + $0x1d0] sm:$0xff]
  %v5012 = vld [vmem:[%s9 + $0x1d8] sm:$0xff]
  %v5013 = vld [vmem:[%s9 + $0x1e0] sm:$0xff]
  %v5014 = vld [vmem:[%s9 + $0x1e8] sm:$0xff]
  %v5015 = vld [vmem:[%s9 + $0x1f0] sm:$0xff]
  %v5016 = vld [vmem:[%s9 + $0x1f8] sm:$0xff]
  %5017 = vmatprep.subr.mxu0 0.0
  %5018 = vmatpush1.msra.mxu0 %v4968
  %5019 = vmatprep.subr.mxu0 0.0
  %5020 = vmatpush1.msra.mxu0 %v4967
  %5021 = vmatprep.subr.mxu0 0.0
  %5022 = vmatpush1.msra.mxu0 %v4966
  %5023 = vmatprep.subr.mxu0 0.0
  %5024 = vmatpush1.msra.mxu0 %v4965
  %5025 = vmatprep.subr.mxu0 0.0
  %5026 = vmatpush1.msra.mxu0 %v4964
  %5027 = vmatprep.subr.mxu0 0.0
  %5028 = vmatpush1.msra.mxu0 %v4963
  %5029 = vmatprep.subr.mxu0 0.0
  %5030 = vmatpush1.msra.mxu0 %v4962
  %5031 = vmatprep.subr.mxu0 0.0
  %5032 = vmatpush1.msra.mxu0 %v4961
  %5033 = vmatprep.subr.mxu0 0.0
  %5034 = vmatpush1.msra.mxu0 %v4960
  %5035 = vmatprep.subr.mxu0 0.0
  %5036 = vmatpush1.msra.mxu0 %v4959
  %5037 = vmatprep.subr.mxu0 0.0
  %5038 = vmatpush1.msra.mxu0 %v4958
  %5039 = vmatprep.subr.mxu0 0.0
  %5040 = vmatpush1.msra.mxu0 %v4957
  %5041 = vmatprep.subr.mxu0 0.0
  %5042 = vmatpush1.msra.mxu0 %v4956
  %5043 = vmatprep.subr.mxu0 0.0
  %5044 = vmatpush1.msra.mxu0 %v4955
  %5045 = vmatprep.subr.mxu0 0.0
  %5046 = vmatpush1.msra.mxu0 %v4954
  %5047 = vmatprep.subr.mxu0 0.0
  %5048 = vmatpush1.msra.mxu0 %v4953
  %5049 = vmatprep.subr.mxu0 0.0
  %5050 = vmatpush2.msra.mxu0 %v4984
  %5051 = vmatprep.subr.mxu0 0.0
  %5052 = vmatpush2.msra.mxu0 %v4983
  %5053 = vmatprep.subr.mxu0 0.0
  %5054 = vmatpush2.msra.mxu0 %v4982
  %5055 = vmatprep.subr.mxu0 0.0
  %5056 = vmatpush2.msra.mxu0 %v4981
  %5057 = vmatprep.subr.mxu0 0.0
  %5058 = vmatpush2.msra.mxu0 %v4980
  %5059 = vmatprep.subr.mxu0 0.0
  %5060 = vmatpush2.msra.mxu0 %v4979
  %5061 = vmatprep.subr.mxu0 0.0
  %5062 = vmatpush2.msra.mxu0 %v4978
  %5063 = vmatprep.subr.mxu0 0.0
  %5064 = vmatpush2.msra.mxu0 %v4977
  %5065 = vmatprep.subr.mxu0 0.0
  %5066 = vmatpush2.msra.mxu0 %v4976
  %5067 = vmatprep.subr.mxu0 0.0
  %5068 = vmatpush2.msra.mxu0 %v4975
  %5069 = vmatprep.subr.mxu0 0.0
  %5070 = vmatpush2.msra.mxu0 %v4974
  %5071 = vmatprep.subr.mxu0 0.0
  %5072 = vmatpush2.msra.mxu0 %v4973
  %5073 = vmatprep.subr.mxu0 0.0
  %5074 = vmatpush2.msra.mxu0 %v4972
  %5075 = vmatprep.subr.mxu0 0.0
  %5076 = vmatpush2.msra.mxu0 %v4971
  %5077 = vmatprep.subr.mxu0 0.0
  %5078 = vmatpush2.msra.mxu0 %v4970
  %5079 = vmatprep.subr.mxu0 0.0
  %5080 = vmatpush2.msra.mxu0 %v4969
  %5081 = vmatprep.mubr.f32.mxu0 %v3895
  %5082 = vmatmul.mubr.f32.gmra.mxu0 %v3894
  %v5083 = vpop.f32.mrf.mxu0
  %v5084 = vadd.f32 0.0, %v5083
  %v5085 = vpop.f32.mrf.mxu0
  %5086 = vdwg.mxu0
  %5087 = vmatprep.subr.mxu0 0.0
  %5088 = vmatpush1.msra.mxu0 %v5000
  %5089 = vmatprep.subr.mxu0 0.0
  %5090 = vmatpush1.msra.mxu0 %v4999
  %5091 = vmatprep.subr.mxu0 0.0
  %5092 = vmatpush1.msra.mxu0 %v4998
  %5093 = vmatprep.subr.mxu0 0.0
  %5094 = vmatpush1.msra.mxu0 %v4997
  %5095 = vmatprep.subr.mxu0 0.0
  %5096 = vmatpush1.msra.mxu0 %v4996
  %5097 = vmatprep.subr.mxu0 0.0
  %5098 = vmatpush1.msra.mxu0 %v4995
  %5099 = vmatprep.subr.mxu0 0.0
  %5100 = vmatpush1.msra.mxu0 %v4994
  %5101 = vmatprep.subr.mxu0 0.0
  %5102 = vmatpush1.msra.mxu0 %v4993
  %5103 = vmatprep.subr.mxu0 0.0
  %5104 = vmatpush1.msra.mxu0 %v4992
  %5105 = vmatprep.subr.mxu0 0.0
  %5106 = vmatpush1.msra.mxu0 %v4991
  %5107 = vmatprep.subr.mxu0 0.0
  %5108 = vmatpush1.msra.mxu0 %v4990
  %5109 = vmatprep.subr.mxu0 0.0
  %5110 = vmatpush1.msra.mxu0 %v4989
  %5111 = vmatprep.subr.mxu0 0.0
  %5112 = vmatpush1.msra.mxu0 %v4988
  %5113 = vmatprep.subr.mxu0 0.0
  %5114 = vmatpush1.msra.mxu0 %v4987
  %5115 = vmatprep.subr.mxu0 0.0
  %5116 = vmatpush1.msra.mxu0 %v4986
  %5117 = vmatprep.subr.mxu0 0.0
  %5118 = vmatpush1.msra.mxu0 %v4985
  %5119 = vmatprep.subr.mxu0 0.0
  %5120 = vmatpush2.msra.mxu0 %v5016
  %5121 = vmatprep.subr.mxu0 0.0
  %5122 = vmatpush2.msra.mxu0 %v5015
  %5123 = vmatprep.subr.mxu0 0.0
  %5124 = vmatpush2.msra.mxu0 %v5014
  %5125 = vmatprep.subr.mxu0 0.0
  %5126 = vmatpush2.msra.mxu0 %v5013
  %5127 = vmatprep.subr.mxu0 0.0
  %5128 = vmatpush2.msra.mxu0 %v5012
  %5129 = vmatprep.subr.mxu0 0.0
  %5130 = vmatpush2.msra.mxu0 %v5011
  %5131 = vmatprep.subr.mxu0 0.0
  %5132 = vmatpush2.msra.mxu0 %v5010
  %5133 = vmatprep.subr.mxu0 0.0
  %5134 = vmatpush2.msra.mxu0 %v5009
  %5135 = vmatprep.subr.mxu0 0.0
  %5136 = vmatpush2.msra.mxu0 %v5008
  %5137 = vmatprep.subr.mxu0 0.0
  %5138 = vmatpush2.msra.mxu0 %v5007
  %5139 = vmatprep.subr.mxu0 0.0
  %5140 = vmatpush2.msra.mxu0 %v5006
  %5141 = vmatprep.subr.mxu0 0.0
  %5142 = vmatpush2.msra.mxu0 %v5005
  %5143 = vmatprep.subr.mxu0 0.0
  %5144 = vmatpush2.msra.mxu0 %v5004
  %5145 = vmatprep.subr.mxu0 0.0
  %5146 = vmatpush2.msra.mxu0 %v5003
  %5147 = vmatprep.subr.mxu0 0.0
  %5148 = vmatpush2.msra.mxu0 %v5002
  %5149 = vmatprep.subr.mxu0 0.0
  %5150 = vmatpush2.msra.mxu0 %v5001
  %5151 = vmatprep.mubr.f32.mxu0 %v3897
  %5152 = vmatmul.mubr.f32.gmra.mxu0 %v3896
  %v5153 = vpop.f32.mrf.mxu0
  %v5154 = vadd.f32 %v5084, %v5153
  %v5155 = vpop.f32.mrf.mxu0
  %5156 = vdwg.mxu0
  %5157 = vxpose.xlu0.b32.start [1/16] %v4945, 128
  %5158 = vxpose.xlu0.b32.cont [2/16] 0.0, 128
  %5159 = vxpose.xlu0.b32.cont [3/16] 0.0, 128
  %5160 = vxpose.xlu0.b32.cont [4/16] 0.0, 128
  %5161 = vxpose.xlu0.b32.cont [5/16] 0.0, 128
  %5162 = vxpose.xlu0.b32.cont [6/16] 0.0, 128
  %5163 = vxpose.xlu0.b32.cont [7/16] 0.0, 128
  %5164 = vxpose.xlu0.b32.cont [8/16] 0.0, 128
  %5165 = vxpose.xlu0.b32.cont [9/16] 0.0, 128
  %5166 = vxpose.xlu0.b32.cont [10/16] 0.0, 128
  %5167 = vxpose.xlu0.b32.cont [11/16] 0.0, 128
  %5168 = vxpose.xlu0.b32.cont [12/16] 0.0, 128
  %5169 = vxpose.xlu0.b32.cont [13/16] 0.0, 128
  %5170 = vxpose.xlu0.b32.cont [14/16] 0.0, 128
  %5171 = vxpose.xlu0.b32.cont [15/16] 0.0, 128
  %5172 = vxpose.xlu0.b32.end [16/16] 0.0, 128
  %v5173 = vpop.trf.xlu0
  %v5174 = vpop.trf.xlu0
  %v5175 = vpop.trf.xlu0
  %v5176 = vpop.trf.xlu0
  %v5177 = vpop.trf.xlu0
  %v5178 = vpop.trf.xlu0
  %v5179 = vpop.trf.xlu0
  %v5180 = vpop.trf.xlu0
  %v5181 = vpop.trf.xlu0
  %v5182 = vpop.trf.xlu0
  %v5183 = vpop.trf.xlu0
  %v5184 = vpop.trf.xlu0
  %v5185 = vpop.trf.xlu0
  %v5186 = vpop.trf.xlu0
  %v5187 = vpop.trf.xlu0
  %v5188 = vpop.trf.xlu0
  %vm5189 = vcmask 64512
  %v5191 = vsel %vm5189, %v5173, 0
  %5193 = vmatprep.subr.mxu0 0.0
  %5194 = vmatpush1.msra.mxu0 0.0
  %5195 = vmatprep.subr.mxu0 0.0
  %5196 = vmatpush1.msra.mxu0 0.0
  %5197 = vmatprep.subr.mxu0 0.0
  %5198 = vmatpush1.msra.mxu0 0.0
  %5199 = vmatprep.subr.mxu0 0.0
  %5200 = vmatpush1.msra.mxu0 0.0
  %5201 = vmatprep.subr.mxu0 0.0
  %5202 = vmatpush1.msra.mxu0 0.0
  %5203 = vmatprep.subr.mxu0 0.0
  %5204 = vmatpush1.msra.mxu0 0.0
  %5205 = vmatprep.subr.mxu0 0.0
  %5206 = vmatpush1.msra.mxu0 0.0
  %5207 = vmatprep.subr.mxu0 0.0
  %5208 = vmatpush1.msra.mxu0 0.0
  %5209 = vmatprep.subr.mxu0 0.0
  %5210 = vmatpush1.msra.mxu0 0.0
  %5211 = vmatprep.subr.mxu0 0.0
  %5212 = vmatpush1.msra.mxu0 0.0
  %5213 = vmatprep.subr.mxu0 0.0
  %5214 = vmatpush1.msra.mxu0 0.0
  %5215 = vmatprep.subr.mxu0 0.0
  %5216 = vmatpush1.msra.mxu0 0.0
  %5217 = vmatprep.subr.mxu0 0.0
  %5218 = vmatpush1.msra.mxu0 0.0
  %5219 = vmatprep.subr.mxu0 0.0
  %5220 = vmatpush1.msra.mxu0 0.0
  %5221 = vmatprep.subr.mxu0 0.0
  %5222 = vmatpush1.msra.mxu0 0.0
  %5223 = vmatprep.subr.mxu0 %v3895
  %5224 = vmatpush1.msra.mxu0 %v3894
  %5225 = vmatprep.subr.mxu0 0.0
  %5226 = vmatpush2.msra.mxu0 0.0
  %5227 = vmatprep.subr.mxu0 0.0
  %5228 = vmatpush2.msra.mxu0 0.0
  %5229 = vmatprep.subr.mxu0 0.0
  %5230 = vmatpush2.msra.mxu0 0.0
  %5231 = vmatprep.subr.mxu0 0.0
  %5232 = vmatpush2.msra.mxu0 0.0
  %5233 = vmatprep.subr.mxu0 0.0
  %5234 = vmatpush2.msra.mxu0 0.0
  %5235 = vmatprep.subr.mxu0 0.0
  %5236 = vmatpush2.msra.mxu0 0.0
  %5237 = vmatprep.subr.mxu0 0.0
  %5238 = vmatpush2.msra.mxu0 0.0
  %5239 = vmatprep.subr.mxu0 0.0
  %5240 = vmatpush2.msra.mxu0 0.0
  %5241 = vmatprep.subr.mxu0 0.0
  %5242 = vmatpush2.msra.mxu0 0.0
  %5243 = vmatprep.subr.mxu0 0.0
  %5244 = vmatpush2.msra.mxu0 0.0
  %5245 = vmatprep.subr.mxu0 0.0
  %5246 = vmatpush2.msra.mxu0 0.0
  %5247 = vmatprep.subr.mxu0 0.0
  %5248 = vmatpush2.msra.mxu0 0.0
  %5249 = vmatprep.subr.mxu0 0.0
  %5250 = vmatpush2.msra.mxu0 0.0
  %5251 = vmatprep.subr.mxu0 0.0
  %5252 = vmatpush2.msra.mxu0 0.0
  %5253 = vmatprep.subr.mxu0 0.0
  %5254 = vmatpush2.msra.mxu0 0.0
  %5255 = vmatprep.subr.mxu0 0.0
  %5256 = vmatpush2.msra.mxu0 0.0
  %5257 = vmatprep.mubr.f32.mxu0 0.0
  %5258 = vmatmul.mubr.f32.gmra.mxu0 %v5191
  %v5259 = vpop.f32.mrf.mxu0
  %v5260 = vadd.f32 0.0, %v5259
  %v5261 = vpop.f32.mrf.mxu0
  %v5262 = vadd.f32 0.0, %v5261
  %5263 = vdwg.mxu0
  %5264 = vmatprep.subr.mxu0 0.0
  %5265 = vmatpush1.msra.mxu0 0.0
  %5266 = vmatprep.subr.mxu0 0.0
  %5267 = vmatpush1.msra.mxu0 0.0
  %5268 = vmatprep.subr.mxu0 0.0
  %5269 = vmatpush1.msra.mxu0 0.0
  %5270 = vmatprep.subr.mxu0 0.0
  %5271 = vmatpush1.msra.mxu0 0.0
  %5272 = vmatprep.subr.mxu0 0.0
  %5273 = vmatpush1.msra.mxu0 0.0
  %5274 = vmatprep.subr.mxu0 0.0
  %5275 = vmatpush1.msra.mxu0 0.0
  %5276 = vmatprep.subr.mxu0 0.0
  %5277 = vmatpush1.msra.mxu0 0.0
  %5278 = vmatprep.subr.mxu0 0.0
  %5279 = vmatpush1.msra.mxu0 0.0
  %5280 = vmatprep.subr.mxu0 0.0
  %5281 = vmatpush1.msra.mxu0 0.0
  %5282 = vmatprep.subr.mxu0 0.0
  %5283 = vmatpush1.msra.mxu0 0.0
  %5284 = vmatprep.subr.mxu0 0.0
  %5285 = vmatpush1.msra.mxu0 0.0
  %5286 = vmatprep.subr.mxu0 0.0
  %5287 = vmatpush1.msra.mxu0 0.0
  %5288 = vmatprep.subr.mxu0 0.0
  %5289 = vmatpush1.msra.mxu0 0.0
  %5290 = vmatprep.subr.mxu0 0.0
  %5291 = vmatpush1.msra.mxu0 0.0
  %5292 = vmatprep.subr.mxu0 0.0
  %5293 = vmatpush1.msra.mxu0 0.0
  %5294 = vmatprep.subr.mxu0 %v3897
  %5295 = vmatpush1.msra.mxu0 %v3896
  %5296 = vmatprep.subr.mxu0 0.0
  %5297 = vmatpush2.msra.mxu0 0.0
  %5298 = vmatprep.subr.mxu0 0.0
  %5299 = vmatpush2.msra.mxu0 0.0
  %5300 = vmatprep.subr.mxu0 0.0
  %5301 = vmatpush2.msra.mxu0 0.0
  %5302 = vmatprep.subr.mxu0 0.0
  %5303 = vmatpush2.msra.mxu0 0.0
  %5304 = vmatprep.subr.mxu0 0.0
  %5305 = vmatpush2.msra.mxu0 0.0
  %5306 = vmatprep.subr.mxu0 0.0
  %5307 = vmatpush2.msra.mxu0 0.0
  %5308 = vmatprep.subr.mxu0 0.0
  %5309 = vmatpush2.msra.mxu0 0.0
  %5310 = vmatprep.subr.mxu0 0.0
  %5311 = vmatpush2.msra.mxu0 0.0
  %5312 = vmatprep.subr.mxu0 0.0
  %5313 = vmatpush2.msra.mxu0 0.0
  %5314 = vmatprep.subr.mxu0 0.0
  %5315 = vmatpush2.msra.mxu0 0.0
  %5316 = vmatprep.subr.mxu0 0.0
  %5317 = vmatpush2.msra.mxu0 0.0
  %5318 = vmatprep.subr.mxu0 0.0
  %5319 = vmatpush2.msra.mxu0 0.0
  %5320 = vmatprep.subr.mxu0 0.0
  %5321 = vmatpush2.msra.mxu0 0.0
  %5322 = vmatprep.subr.mxu0 0.0
  %5323 = vmatpush2.msra.mxu0 0.0
  %5324 = vmatprep.subr.mxu0 0.0
  %5325 = vmatpush2.msra.mxu0 0.0
  %5326 = vmatprep.subr.mxu0 0.0
  %5327 = vmatpush2.msra.mxu0 0.0
  %5328 = vmatprep.mubr.f32.mxu0 0.0
  %5329 = vmatmul.mubr.f32.gmra.mxu0 %v5191
  %v5330 = vpop.f32.mrf.mxu0
  %v5331 = vadd.f32 0.0, %v5330
  %v5332 = vpop.f32.mrf.mxu0
  %v5333 = vadd.f32 0.0, %v5332
  %5334 = vdwg.mxu0
  %5335 = vmatprep.subr.mxu0 0.0
  %5336 = vmatpush1.msra.mxu0 0.0
  %5337 = vmatprep.subr.mxu0 0.0
  %5338 = vmatpush1.msra.mxu0 0.0
  %5339 = vmatprep.subr.mxu0 0.0
  %5340 = vmatpush1.msra.mxu0 0.0
  %5341 = vmatprep.subr.mxu0 0.0
  %5342 = vmatpush1.msra.mxu0 0.0
  %5343 = vmatprep.subr.mxu0 0.0
  %5344 = vmatpush1.msra.mxu0 0.0
  %5345 = vmatprep.subr.mxu0 0.0
  %5346 = vmatpush1.msra.mxu0 0.0
  %5347 = vmatprep.subr.mxu0 0.0
  %5348 = vmatpush1.msra.mxu0 0.0
  %5349 = vmatprep.subr.mxu0 0.0
  %5350 = vmatpush1.msra.mxu0 0.0
  %5351 = vmatprep.subr.mxu0 0.0
  %5352 = vmatpush1.msra.mxu0 0.0
  %5353 = vmatprep.subr.mxu0 0.0
  %5354 = vmatpush1.msra.mxu0 0.0
  %5355 = vmatprep.subr.mxu0 0.0
  %5356 = vmatpush1.msra.mxu0 0.0
  %5357 = vmatprep.subr.mxu0 0.0
  %5358 = vmatpush1.msra.mxu0 0.0
  %5359 = vmatprep.subr.mxu0 0.0
  %5360 = vmatpush1.msra.mxu0 0.0
  %5361 = vmatprep.subr.mxu0 0.0
  %5362 = vmatpush1.msra.mxu0 0.0
  %5363 = vmatprep.subr.mxu0 0.0
  %5364 = vmatpush1.msra.mxu0 0.0
  %5365 = vmatprep.subr.mxu0 %v5154
  %5366 = vmatpush1.msra.mxu0 %v4952
  %5367 = vmatprep.subr.mxu0 0.0
  %5368 = vmatpush2.msra.mxu0 0.0
  %5369 = vmatprep.subr.mxu0 0.0
  %5370 = vmatpush2.msra.mxu0 0.0
  %5371 = vmatprep.subr.mxu0 0.0
  %5372 = vmatpush2.msra.mxu0 0.0
  %5373 = vmatprep.subr.mxu0 0.0
  %5374 = vmatpush2.msra.mxu0 0.0
  %5375 = vmatprep.subr.mxu0 0.0
  %5376 = vmatpush2.msra.mxu0 0.0
  %5377 = vmatprep.subr.mxu0 0.0
  %5378 = vmatpush2.msra.mxu0 0.0
  %5379 = vmatprep.subr.mxu0 0.0
  %5380 = vmatpush2.msra.mxu0 0.0
  %5381 = vmatprep.subr.mxu0 0.0
  %5382 = vmatpush2.msra.mxu0 0.0
  %5383 = vmatprep.subr.mxu0 0.0
  %5384 = vmatpush2.msra.mxu0 0.0
  %5385 = vmatprep.subr.mxu0 0.0
  %5386 = vmatpush2.msra.mxu0 0.0
  %5387 = vmatprep.subr.mxu0 0.0
  %5388 = vmatpush2.msra.mxu0 0.0
  %5389 = vmatprep.subr.mxu0 0.0
  %5390 = vmatpush2.msra.mxu0 0.0
  %5391 = vmatprep.subr.mxu0 0.0
  %5392 = vmatpush2.msra.mxu0 0.0
  %5393 = vmatprep.subr.mxu0 0.0
  %5394 = vmatpush2.msra.mxu0 0.0
  %5395 = vmatprep.subr.mxu0 0.0
  %5396 = vmatpush2.msra.mxu0 0.0
  %5397 = vmatprep.subr.mxu0 0.0
  %5398 = vmatpush2.msra.mxu0 0.0
  %5399 = vmatprep.mubr.f32.mxu0 0.0
  %5400 = vmatmul.mubr.f32.gmra.mxu0 %v5191
  %v5401 = vpop.f32.mrf.mxu0
  %v5402 = vadd.f32 0.0, %v5401
  %v5403 = vpop.f32.mrf.mxu0
  %v5404 = vadd.f32 0.0, %v5403
  %5405 = vdwg.mxu0
  %v5412 = vcombine.low %v5260, %v5262
  %v5413 = vcombine.low %v5331, %v5333
  %v5414 = vcombine.low %v5402, %v5404
  %5418 = vst [vmem:[%s11] sm:$0x77] %v5412
  %5419 = vst [vmem:[%s11 + $0x8] sm:$0x77] %v5413
  %vm5420 = vcmask 1042432
  %vm5421 = vcmask 63492
  %vm5422 = vmor %vm5421, %vm5420
  %5423 = vst.msk [vmem:[%s11 + $0x10] sm:$0x77] %vm5422, %v5414
  // Predicated region
  $region46: #{mil_forward_abp.1} parent=0 // pred_check
    _
  $region47: #{mil_forward_abp.1} parent=0 // pred_check_branch
    %5425 = sbr.rel (0) target = $region49
  $region48: #{mil_forward_abp.1} parent=0 // pred_region
    _
  $region49: #{mil_forward_abp.1} parent=0 // pred_fallthru
    _
  // Predicated region
  $region50: #{mil_forward_abp.1} parent=0 // pred_check
    _
  $region51: #{mil_forward_abp.1} parent=0 // pred_check_branch
    %5427 = sbr.rel (0) target = $region53
  $region52: #{mil_forward_abp.1} parent=0 // pred_region
    _
  $region53: #{mil_forward_abp.1} parent=0 // pred_fallthru
    _

</llo_original>
